<compile_context>
chip_gen: v6e
topology: v6e:2x2x1
jax: 0.10.0
libtpu: 0.0.40
codegen_flags: <defaults>
</compile_context>

<pallas_src>
import functools

import jax
import jax.numpy as jnp
from jax.experimental import pallas as pl
from jax.experimental.pallas import tpu as pltpu

LN_EPS = 1e-5            # PyTorch nn.LayerNorm default
BF16 = jnp.bfloat16
F32 = jnp.float32


def _round_up(x, m):
    return ((x + m - 1) // m) * m


def _pad_cols(x, n):
    return jnp.pad(x, ((0, 0), (0, n - x.shape[1])))


def _layernorm_1pass(x, gamma, beta, n_feat):
    """LayerNorm with single-pass statistics: var = E[x^2] - mu^2.

    `x` may have zero-padded lanes beyond `n_feat`: the pads contribute exact
    zeros to both sums, and gamma/beta are zero in the pad region so the
    padded output lanes stay exactly zero.
    Note: all-zero (batch-padding) rows give var=0 -> inv_std = 1/sqrt(eps),
    which is finite; those rows are sliced off in the wrapper.  Keep the +eps.
    """
    inv_n = 1.0 / float(n_feat)
    s1 = jnp.sum(x, axis=-1, keepdims=True)
    s2 = jnp.sum(x * x, axis=-1, keepdims=True)
    mu = s1 * inv_n
    var = s2 * inv_n - mu * mu
    inv_std = jax.lax.rsqrt(var + LN_EPS)
    return (x - mu) * inv_std * gamma + beta


def critic_kernel(s_ref, a_ref, w_in_ref, w2_ref, p1_ref, p2_ref, bq_ref,
                  out_ref, *, fc1_true, fc2_true, f1p):
    # Packed per-feature params (VMEM-resident across all grid steps).
    b1, g1, be1 = p1_ref[0:1, :], p1_ref[1:2, :], p1_ref[2:3, :]
    b2, g2, be2 = p2_ref[0:1, :], p2_ref[1:2, :], p2_ref[2:3, :]
    ba, wq_row = p2_ref[3:4, :], p2_ref[4:5, :]
    bq = bq_ref[0, 0]                      # scalar from SMEM

    # [s | a] concat + bf16 cast done in VMEM (cheap lane work) instead of as
    # a separate HBM pass in the wrapper.
    sa = jnp.concatenate([s_ref[...], a_ref[...]], axis=1).astype(BF16)

    # Single fused block-diagonal matmul (bf16 MXU, f32 accumulate):
    # columns [0, f1p)        = fc1(s)
    # columns [f1p, f1p+f2p)  = action_value(a)
    fused = jnp.dot(sa, w_in_ref[...], preferred_element_type=F32)
    h1 = fused[:, :f1p] + b1               # lane split on a 128 boundary
    y = fused[:, f1p:] + ba

    # LayerNorm(fc1) + relu  (true N = fc1_true; pad lanes stay zero)
    x = _layernorm_1pass(h1, g1, be1, fc1_true)
    x = jnp.maximum(x, 0.0)

    # fc2 (bf16 MXU, f32 acc) + LayerNorm
    h2 = jnp.dot(x.astype(BF16), w2_ref[...], preferred_element_type=F32) + b2
    x2 = _layernorm_1pass(h2, g2, be2, fc2_true)

    # combine + q head: N=1 matmul replaced by VPU multiply + lane reduction
    # (keeps the binding MXU slot free; wq pad lanes are zero).
    xy = jnp.maximum(x2 + y, 0.0)
    q = jnp.sum(xy * wq_row, axis=-1, keepdims=True) + bq
    out_ref[...] = q


def pack_critic_params(params):
    """One-time parameter packing (do NOT call per forward step).

    - lane-pads feature dims (fc1 -> multiple of 128, fc2 -> multiple of 128)
      with zeros (weights, biases, gamma, beta, q weights),
    - builds the block-diagonal fused [s | a] input weight in bf16,
    - casts fc2 weight to bf16,
    - packs the eight per-feature vectors into two f32 slabs + 1 SMEM scalar.
    """
    state_dim, fc1_units = params["w1t"].shape
    n_actions = params["wat"].shape[0]
    fc2_units = params["w2t"].shape[1]
    f1p = _round_up(fc1_units, 128)
    f2p = _round_up(fc2_units, 128)
    din = state_dim + n_actions

    # Block-diagonal fused weight: rows [0, state_dim) feed the fc1 columns,
    # rows [state_dim, din) feed the action_value columns.
    w_in = jnp.zeros((din, f1p + f2p), F32)
    w_in = w_in.at[:state_dim, :fc1_units].set(params["w1t"])
    w_in = w_in.at[state_dim:, f1p:f1p + fc2_units].set(params["wat"])
    w_in = w_in.astype(BF16)

    w2 = jnp.zeros((f1p, f2p), F32)
    w2 = w2.at[:fc1_units, :fc2_units].set(params["w2t"])
    w2 = w2.astype(BF16)

    # Per-feature slabs; pad regions are zero so padded lanes stay zero
    # through LN / relu / fc2 / q-head.
    p1 = jnp.concatenate([_pad_cols(params["b1"], f1p),
                          _pad_cols(params["g1"], f1p),
                          _pad_cols(params["be1"], f1p)], axis=0)
    p2 = jnp.concatenate([_pad_cols(params["b2"], f2p),
                          _pad_cols(params["g2"], f2p),
                          _pad_cols(params["be2"], f2p),
                          _pad_cols(params["ba"], f2p),
                          _pad_cols(params["wqt"].T, f2p)], axis=0)
    bq = params["bq"].reshape(1, 1).astype(F32)
    return {"w_in": w_in, "w2": w2, "p1": p1, "p2": p2, "bq": bq}


@functools.partial(jax.jit,
                   static_argnames=("fc1_units", "fc2_units", "tile_b"))
def critic_forward(s, a, packed, *, fc1_units, fc2_units, tile_b=2048):
    """s: [B, state_dim], a: [B, n_actions] -> [B, 1] float32.

    packed: output of pack_critic_params (pre-packed / pre-cast weights).
    tile_b: batch rows per grid step (multiple of 8).  Default 2048 works on
    all generations with the 48 MiB VMEM limit set below; up to ~4096 on v7x
    (64 MiB physical VMEM) and ~8192 on v5e/v6e if you also raise
    vmem_limit_bytes.  Keep B/tile_b >= 2 on v7x so both TensorCores are fed.
    """
    assert tile_b % 8 == 0, "tile_b must be a multiple of 8"
    B, state_dim = s.shape
    n_actions = a.shape[1]
    din = state_dim + n_actions
    f1p = packed["p1"].shape[1]
    f2p = packed["p2"].shape[1]

    # Batch tiling.  If the whole batch fits one tile but is large, split into
    # two tiles so the "parallel" axis can shard across both v7x TensorCores.
    if B > tile_b:
        tb = tile_b
    elif B >= 1024:
        tb = _round_up((B + 1) // 2, 8)
    else:
        tb = B
    bp = _round_up(B, tb)
    if bp != B:
        s = jnp.pad(s, ((0, bp - B), (0, 0)))
        a = jnp.pad(a, ((0, bp - B), (0, 0)))
    grid = (bp // tb,)

    kernel = functools.partial(critic_kernel, fc1_true=fc1_units,
                               fc2_true=fc2_units, f1p=f1p)

    out = pl.pallas_call(
        kernel,
        out_shape=jax.ShapeDtypeStruct((bp, 1), F32),
        grid=grid,
        in_specs=[
            pl.BlockSpec((tb, state_dim), lambda i: (i, 0)),      # s (rows)
            pl.BlockSpec((tb, n_actions), lambda i: (i, 0)),      # a (rows)
            pl.BlockSpec((din, f1p + f2p), lambda i: (0, 0)),     # fused w_in
            pl.BlockSpec((f1p, f2p), lambda i: (0, 0)),           # w2
            pl.BlockSpec((3, f1p), lambda i: (0, 0)),             # b1/g1/be1
            pl.BlockSpec((5, f2p), lambda i: (0, 0)),             # b2/g2/be2/ba/wq
            pl.BlockSpec(memory_space=pltpu.MemorySpace.SMEM),    # bq scalar
        ],
        out_specs=pl.BlockSpec((tb, 1), lambda i: (i, 0)),
        compiler_params=pltpu.CompilerParams(
            dimension_semantics=("parallel",),        # megacore on v7x
            vmem_limit_bytes=48 * 1024 * 1024),       # raise 16/32 MiB default
    )(s, a, packed["w_in"], packed["w2"], packed["p1"], packed["p2"],
      packed["bq"])
    return out[:B]


def init_critic_params(key, state_dim, n_actions, fc1_units=400, fc2_units=300):
    """Deterministic init mirroring the PyTorch module's uniform ranges."""
    ks = jax.random.split(key, 8)
    f1 = 1.0 / jnp.sqrt(float(fc1_units))   # fc1.weight.size()[0] == fc1_units
    f2 = 1.0 / jnp.sqrt(float(fc2_units))   # fc2.weight.size()[0] == fc2_units
    f3 = 0.003
    f4 = 1.0 / jnp.sqrt(float(fc2_units))   # action_value.weight.size()[0]

    def u(k, shape, bound):
        return jax.random.uniform(k, shape, F32, -bound, bound)

    return {
        # weights pre-transposed to [in, out]
        "w1t": u(ks[0], (state_dim, fc1_units), f1),
        "b1":  u(ks[1], (1, fc1_units), f1),
        "g1":  jnp.ones((1, fc1_units), F32),    # LayerNorm gamma
        "be1": jnp.zeros((1, fc1_units), F32),   # LayerNorm beta
        "w2t": u(ks[2], (fc1_units, fc2_units), f2),
        "b2":  u(ks[3], (1, fc2_units), f2),
        "g2":  jnp.ones((1, fc2_units), F32),
        "be2": jnp.zeros((1, fc2_units), F32),
        "wat": u(ks[4], (n_actions, fc2_units), f4),
        "ba":  u(ks[5], (1, fc2_units), f4),
        "wqt": u(ks[6], (fc2_units, 1), f3),
        "bq":  u(ks[7], (1, 1), f3),
    }


def _layernorm_ref(x, gamma, beta):
    mu = jnp.mean(x, axis=-1, keepdims=True)
    var = jnp.mean((x - mu) * (x - mu), axis=-1, keepdims=True)
    return (x - mu) * jax.lax.rsqrt(var + LN_EPS) * gamma + beta


def critic_ref(s, a, p):
    """Pure-JAX reference (same bf16-in / f32-accumulate matmul precision)."""
    x = jnp.dot(s.astype(BF16), p["w1t"].astype(BF16),
                preferred_element_type=F32) + p["b1"]
    x = jnp.maximum(_layernorm_ref(x, p["g1"], p["be1"]), 0.0)
    x = jnp.dot(x.astype(BF16), p["w2t"].astype(BF16),
                preferred_element_type=F32) + p["b2"]
    x = _layernorm_ref(x, p["g2"], p["be2"])
    y = jnp.dot(a.astype(BF16), p["wat"].astype(BF16),
                preferred_element_type=F32) + p["ba"]
    xy = jnp.maximum(x + y, 0.0)
    return xy @ p["wqt"] + p["bq"]


if __name__ == "__main__":
    key = jax.random.PRNGKey(0)
    k_s, k_a, k_p = jax.random.split(key, 3)

    # Small shapes; batch=200 exercises the batch-padding path (pads to 256).
    batch, state_dim, n_actions = 200, 16, 4
    fc1_units, fc2_units = 400, 300
    s = jax.random.normal(k_s, (batch, state_dim), F32)
    a = jax.random.normal(k_a, (batch, n_actions), F32)
    params = init_critic_params(k_p, state_dim, n_actions, fc1_units, fc2_units)
    packed = pack_critic_params(params)      # one-time packing / casting

    q = critic_forward(s, a, packed, fc1_units=fc1_units, fc2_units=fc2_units,
                       tile_b=128)           # grid=(2,) on the small test
    jax.block_until_ready(q)

    q_ref = critic_ref(s, a, params)
    assert q.shape == (batch, 1), q.shape
    # bf16 matmul operands + one-pass LN stats -> tolerance looser than f32.
    assert jnp.allclose(q, q_ref, atol=2e-3, rtol=2e-2), (
        float(jnp.max(jnp.abs(q - q_ref))))

    print("KERNEL_OK")
</pallas_src>

<mosaic_0001>
module attributes {stable_mosaic.version = 11 : i64} {
  func.func @critic_kernel(%arg0: i32, %arg1: memref<128x16xf32, #tpu.memory_space<vmem>>, %arg2: memref<128x4xf32, #tpu.memory_space<vmem>>, %arg3: memref<20x896xbf16, #tpu.memory_space<vmem>>, %arg4: memref<512x384xbf16, #tpu.memory_space<vmem>>, %arg5: memref<3x512xf32, #tpu.memory_space<vmem>>, %arg6: memref<5x384xf32, #tpu.memory_space<vmem>>, %arg7: memref<1x1xf32, #tpu.memory_space<smem>>, %arg8: memref<128x1xf32, #tpu.memory_space<vmem>>) attributes {dimension_semantics = [#tpu.dimension_semantics<parallel>], iteration_bounds = array<i64: 2>, scalar_prefetch = 0 : i64, scratch_operands = 0 : i64, tpu.core_type = #tpu.core_type<tc>, window_params = [{transform_indices = @transform_0, window_bounds = array<i64: 128, 16>}, {transform_indices = @transform_1, window_bounds = array<i64: 128, 4>}, {pipeline_mode = #tpu.pipeline_mode<synchronous>, transform_indices = @transform_2, window_bounds = array<i64: 20, 896>}, {pipeline_mode = #tpu.pipeline_mode<synchronous>, transform_indices = @transform_3, window_bounds = array<i64: 512, 384>}, {pipeline_mode = #tpu.pipeline_mode<synchronous>, transform_indices = @transform_4, window_bounds = array<i64: 3, 512>}, {pipeline_mode = #tpu.pipeline_mode<synchronous>, transform_indices = @transform_5, window_bounds = array<i64: 5, 384>}, {transform_indices = @transform_6, window_bounds = array<i64: 1, 1>}, {transform_indices = @transform_7, window_bounds = array<i64: 128, 1>}]} {
    %c0 = arith.constant 0 : index
    %c0_0 = arith.constant 0 : index
    %0 = vector.load %arg5[%c0, %c0_0] : memref<3x512xf32, #tpu.memory_space<vmem>>, vector<1x512xf32>
    %c1 = arith.constant 1 : index
    %c0_1 = arith.constant 0 : index
    %1 = vector.load %arg5[%c1, %c0_1] : memref<3x512xf32, #tpu.memory_space<vmem>>, vector<1x512xf32>
    %c2 = arith.constant 2 : index
    %c0_2 = arith.constant 0 : index
    %2 = vector.load %arg5[%c2, %c0_2] : memref<3x512xf32, #tpu.memory_space<vmem>>, vector<1x512xf32>
    %c0_3 = arith.constant 0 : index
    %c0_4 = arith.constant 0 : index
    %3 = vector.load %arg6[%c0_3, %c0_4] : memref<5x384xf32, #tpu.memory_space<vmem>>, vector<1x384xf32>
    %c1_5 = arith.constant 1 : index
    %c0_6 = arith.constant 0 : index
    %4 = vector.load %arg6[%c1_5, %c0_6] : memref<5x384xf32, #tpu.memory_space<vmem>>, vector<1x384xf32>
    %c2_7 = arith.constant 2 : index
    %c0_8 = arith.constant 0 : index
    %5 = vector.load %arg6[%c2_7, %c0_8] : memref<5x384xf32, #tpu.memory_space<vmem>>, vector<1x384xf32>
    %c3 = arith.constant 3 : index
    %c0_9 = arith.constant 0 : index
    %6 = vector.load %arg6[%c3, %c0_9] : memref<5x384xf32, #tpu.memory_space<vmem>>, vector<1x384xf32>
    %c4 = arith.constant 4 : index
    %c0_10 = arith.constant 0 : index
    %7 = vector.load %arg6[%c4, %c0_10] : memref<5x384xf32, #tpu.memory_space<vmem>>, vector<1x384xf32>
    %c0_11 = arith.constant 0 : index
    %c0_12 = arith.constant 0 : index
    %8 = memref.load %arg7[%c0_11, %c0_12] : memref<1x1xf32, #tpu.memory_space<smem>>
    %c0_13 = arith.constant 0 : index
    %c0_14 = arith.constant 0 : index
    %9 = vector.load %arg1[%c0_13, %c0_14] : memref<128x16xf32, #tpu.memory_space<vmem>>, vector<128x16xf32>
    %c0_15 = arith.constant 0 : index
    %c0_16 = arith.constant 0 : index
    %10 = vector.load %arg2[%c0_15, %c0_16] : memref<128x4xf32, #tpu.memory_space<vmem>>, vector<128x4xf32>
    %11 = tpu.concatenate %9, %10 in 1 : vector<128x16xf32>, vector<128x4xf32> -> vector<128x20xf32>
    %12 = arith.truncf %11 : vector<128x20xf32> to vector<128x20xbf16>
    %c0_17 = arith.constant 0 : index
    %c0_18 = arith.constant 0 : index
    %13 = vector.load %arg3[%c0_17, %c0_18] : memref<20x896xbf16, #tpu.memory_space<vmem>>, vector<20x896xbf16>
    %cst = arith.constant dense<0.000000e+00> : vector<128x896xf32>
    %14 = tpu.matmul %12, %13, %cst {dimension_numbers = #tpu.dot_dimension_numbers<[1], [0], [0], [1], [0, 0, 1, 1], [], []>} : vector<128x20xbf16>, vector<20x896xbf16>, vector<128x896xf32> -> vector<128x896xf32>
    %15 = vector.extract_strided_slice %14 {offsets = [0, 0], sizes = [128, 512], strides = [1, 1]} : vector<128x896xf32> to vector<128x512xf32>
    %16 = vector.broadcast %0 : vector<1x512xf32> to vector<128x512xf32>
    %17 = arith.addf %15, %16 : vector<128x512xf32>
    %18 = vector.extract_strided_slice %14 {offsets = [0, 512], sizes = [128, 384], strides = [1, 1]} : vector<128x896xf32> to vector<128x384xf32>
    %19 = vector.broadcast %6 : vector<1x384xf32> to vector<128x384xf32>
    %20 = arith.addf %18, %19 : vector<128x384xf32>
    %cst_19 = arith.constant dense<0.000000e+00> : vector<128xf32>
    %21 = vector.multi_reduction <add>, %17, %cst_19 [1] : vector<128x512xf32> to vector<128xf32>
    %22 = vector.shape_cast %21 : vector<128xf32> to vector<128x1xf32>
    %23 = arith.mulf %17, %17 : vector<128x512xf32>
    %cst_20 = arith.constant dense<0.000000e+00> : vector<128xf32>
    %24 = vector.multi_reduction <add>, %23, %cst_20 [1] : vector<128x512xf32> to vector<128xf32>
    %25 = vector.shape_cast %24 : vector<128xf32> to vector<128x1xf32>
    %cst_21 = arith.constant 2.500000e-03 : f32
    %26 = vector.broadcast %cst_21 : f32 to vector<128x1xf32>
    %27 = arith.mulf %22, %26 : vector<128x1xf32>
    %cst_22 = arith.constant 2.500000e-03 : f32
    %28 = vector.broadcast %cst_22 : f32 to vector<128x1xf32>
    %29 = arith.mulf %25, %28 : vector<128x1xf32>
    %30 = arith.mulf %27, %27 : vector<128x1xf32>
    %31 = arith.subf %29, %30 : vector<128x1xf32>
    %cst_23 = arith.constant 9.99999974E-6 : f32
    %32 = vector.broadcast %cst_23 : f32 to vector<128x1xf32>
    %33 = arith.addf %31, %32 : vector<128x1xf32>
    %34 = math.rsqrt %33 : vector<128x1xf32>
    %35 = vector.broadcast %27 : vector<128x1xf32> to vector<128x512xf32>
    %36 = arith.subf %17, %35 : vector<128x512xf32>
    %37 = vector.broadcast %34 : vector<128x1xf32> to vector<128x512xf32>
    %38 = arith.mulf %36, %37 : vector<128x512xf32>
    %39 = vector.broadcast %1 : vector<1x512xf32> to vector<128x512xf32>
    %40 = arith.mulf %38, %39 : vector<128x512xf32>
    %41 = vector.broadcast %2 : vector<1x512xf32> to vector<128x512xf32>
    %42 = arith.addf %40, %41 : vector<128x512xf32>
    %cst_24 = arith.constant 0.000000e+00 : f32
    %43 = vector.broadcast %cst_24 : f32 to vector<128x512xf32>
    %44 = arith.maximumf %42, %43 : vector<128x512xf32>
    %45 = arith.truncf %44 : vector<128x512xf32> to vector<128x512xbf16>
    %c0_25 = arith.constant 0 : index
    %c0_26 = arith.constant 0 : index
    %46 = vector.load %arg4[%c0_25, %c0_26] : memref<512x384xbf16, #tpu.memory_space<vmem>>, vector<512x384xbf16>
    %cst_27 = arith.constant dense<0.000000e+00> : vector<128x384xf32>
    %47 = tpu.matmul %45, %46, %cst_27 {dimension_numbers = #tpu.dot_dimension_numbers<[1], [0], [0], [1], [0, 0, 1, 1], [], []>} : vector<128x512xbf16>, vector<512x384xbf16>, vector<128x384xf32> -> vector<128x384xf32>
    %48 = vector.broadcast %3 : vector<1x384xf32> to vector<128x384xf32>
    %49 = arith.addf %47, %48 : vector<128x384xf32>
    %cst_28 = arith.constant dense<0.000000e+00> : vector<128xf32>
    %50 = vector.multi_reduction <add>, %49, %cst_28 [1] : vector<128x384xf32> to vector<128xf32>
    %51 = vector.shape_cast %50 : vector<128xf32> to vector<128x1xf32>
    %52 = arith.mulf %49, %49 : vector<128x384xf32>
    %cst_29 = arith.constant dense<0.000000e+00> : vector<128xf32>
    %53 = vector.multi_reduction <add>, %52, %cst_29 [1] : vector<128x384xf32> to vector<128xf32>
    %54 = vector.shape_cast %53 : vector<128xf32> to vector<128x1xf32>
    %cst_30 = arith.constant 0.00333333341 : f32
    %55 = vector.broadcast %cst_30 : f32 to vector<128x1xf32>
    %56 = arith.mulf %51, %55 : vector<128x1xf32>
    %cst_31 = arith.constant 0.00333333341 : f32
    %57 = vector.broadcast %cst_31 : f32 to vector<128x1xf32>
    %58 = arith.mulf %54, %57 : vector<128x1xf32>
    %59 = arith.mulf %56, %56 : vector<128x1xf32>
    %60 = arith.subf %58, %59 : vector<128x1xf32>
    %cst_32 = arith.constant 9.99999974E-6 : f32
    %61 = vector.broadcast %cst_32 : f32 to vector<128x1xf32>
    %62 = arith.addf %60, %61 : vector<128x1xf32>
    %63 = math.rsqrt %62 : vector<128x1xf32>
    %64 = vector.broadcast %56 : vector<128x1xf32> to vector<128x384xf32>
    %65 = arith.subf %49, %64 : vector<128x384xf32>
    %66 = vector.broadcast %63 : vector<128x1xf32> to vector<128x384xf32>
    %67 = arith.mulf %65, %66 : vector<128x384xf32>
    %68 = vector.broadcast %4 : vector<1x384xf32> to vector<128x384xf32>
    %69 = arith.mulf %67, %68 : vector<128x384xf32>
    %70 = vector.broadcast %5 : vector<1x384xf32> to vector<128x384xf32>
    %71 = arith.addf %69, %70 : vector<128x384xf32>
    %72 = arith.addf %71, %20 : vector<128x384xf32>
    %cst_33 = arith.constant 0.000000e+00 : f32
    %73 = vector.broadcast %cst_33 : f32 to vector<128x384xf32>
    %74 = arith.maximumf %72, %73 : vector<128x384xf32>
    %75 = vector.broadcast %7 : vector<1x384xf32> to vector<128x384xf32>
    %76 = arith.mulf %74, %75 : vector<128x384xf32>
    %cst_34 = arith.constant dense<0.000000e+00> : vector<128xf32>
    %77 = vector.multi_reduction <add>, %76, %cst_34 [1] : vector<128x384xf32> to vector<128xf32>
    %78 = vector.shape_cast %77 : vector<128xf32> to vector<128x1xf32>
    %79 = vector.broadcast %8 : f32 to vector<128x1xf32>
    %80 = arith.addf %78, %79 : vector<128x1xf32>
    %c0_35 = arith.constant 0 : index
    %c0_36 = arith.constant 0 : index
    %81 = vector.load %arg8[%c0_35, %c0_36] : memref<128x1xf32, #tpu.memory_space<vmem>>, vector<128x1xf32>
    tpu.vector_store %arg8[%c0_35, %c0_36], %80 {strides = array<i32>} : memref<128x1xf32, #tpu.memory_space<vmem>>, vector<128x1xf32>,
    return
  }
  func.func @transform_0(%arg0: i32) -> (i32, i32) {
    %c0_i32 = arith.constant 0 : i32
    %c0_i32_0 = arith.constant 0 : i32
    return %arg0, %c0_i32 : i32, i32
  }
  func.func @transform_1(%arg0: i32) -> (i32, i32) {
    %c0_i32 = arith.constant 0 : i32
    %c0_i32_0 = arith.constant 0 : i32
    return %arg0, %c0_i32 : i32, i32
  }
  func.func @transform_2(%arg0: i32) -> (i32, i32) {
    %c0_i32 = arith.constant 0 : i32
    %c0_i32_0 = arith.constant 0 : i32
    %c0_i32_1 = arith.constant 0 : i32
    return %c0_i32, %c0_i32_0 : i32, i32
  }
  func.func @transform_3(%arg0: i32) -> (i32, i32) {
    %c0_i32 = arith.constant 0 : i32
    %c0_i32_0 = arith.constant 0 : i32
    %c0_i32_1 = arith.constant 0 : i32
    return %c0_i32, %c0_i32_0 : i32, i32
  }
  func.func @transform_4(%arg0: i32) -> (i32, i32) {
    %c0_i32 = arith.constant 0 : i32
    %c0_i32_0 = arith.constant 0 : i32
    %c0_i32_1 = arith.constant 0 : i32
    return %c0_i32, %c0_i32_0 : i32, i32
  }
  func.func @transform_5(%arg0: i32) -> (i32, i32) {
    %c0_i32 = arith.constant 0 : i32
    %c0_i32_0 = arith.constant 0 : i32
    %c0_i32_1 = arith.constant 0 : i32
    return %c0_i32, %c0_i32_0 : i32, i32
  }
  func.func @transform_6(%arg0: i32) -> (i32, i32) {
    %c0_i32 = arith.constant 0 : i32
    %c0_i32_0 = arith.constant 0 : i32
    %c0_i32_1 = arith.constant 0 : i32
    return %c0_i32, %c0_i32_0 : i32, i32
  }
  func.func @transform_7(%arg0: i32) -> (i32, i32) {
    %c0_i32 = arith.constant 0 : i32
    %c0_i32_0 = arith.constant 0 : i32
    return %arg0, %c0_i32 : i32, i32
  }
}

</mosaic_0001>

<llo_original>
// kernel: critic_forward.1
$region0: #{critic_forward.1}
  #allocation0 [shape = 'u32[]', space=smem, size = 0x4, offset = 0x4, fixed_abs, tag = 'smem constant byte address 0x4 - core index']
  #allocation1 [shape = 'u32[144,128]{1,0:T(1,128)}', space=vmem, size = 0x12000, scoped, tag = 'internal scratch']
  #allocation2 [shape = 'f32[1,1]{1,0:T(1,128)S(6)}', space=smem, size = 0x200, scoped, tag = 'scoped memory for critic_forward.1']
  %s0 = inlined_call_operand.vmem [shape: f32[256,16], index: 0, kind: input, shape index: {}]
  %s1 = inlined_call_operand.vmem [shape: f32[256,4], index: 1, kind: input, shape index: {}]
  %s2 = inlined_call_operand.vmem [shape: bf16[20,896], index: 2, kind: input, shape index: {}]
  %s3 = inlined_call_operand.vmem [shape: bf16[512,384], index: 3, kind: input, shape index: {}]
  %s4 = inlined_call_operand.vmem [shape: f32[3,512], index: 4, kind: input, shape index: {}]
  %s5 = inlined_call_operand.vmem [shape: f32[5,384], index: 5, kind: input, shape index: {}]
  %s6 = inlined_call_operand.<no memory space> [shape: f32[1,1], index: 6, kind: input, shape index: {}]
  %s7 = inlined_call_operand.vmem [shape: f32[256,1], index: 7, kind: output, shape index: {}]
  %s8 = sld [smem:[#allocation0]]
  $region61: #{critic_forward.1} parent=0
    _
  %s10 = ssub.s32 1, %s8
  %s11 = scalar_select 0, %s10, %s8
  %12 = sst [smem:[#allocation2]] %s6
  loop: start=0, step=1, limit=4
  $region2: #{critic_forward.1} parent=0 // loop_pre_header
    _
  $region3: #{critic_forward.1} parent=0 // loop_header
    %s14 = sphi 0, %s18
    %p15 = scmp.ge.s32.totalorder %s14, 4
    %s24 = sphi 0, %s26
    %s27 = sphi 0, %s24
    %s28 = sphi 0, %s27
    %s44 = sphi 0, %s28
    %s50 = sphi 0, %s52
    %s53 = sphi 0, %s50
    %s54 = sphi 0, %s53
    %s70 = sphi 0, %s54
    %s74 = sphi 0, %s74
    %s76 = sphi 0, %s74
    %s77 = sphi 0, %s76
    %s91 = sphi 0, %s77
    %s95 = sphi 0, %s95
    %s97 = sphi 0, %s95
    %s98 = sphi 0, %s97
    %s112 = sphi 0, %s98
    %s116 = sphi 0, %s116
    %s118 = sphi 0, %s116
    %s119 = sphi 0, %s118
    %s133 = sphi 0, %s119
    %s137 = sphi 0, %s137
    %s139 = sphi 0, %s137
    %s140 = sphi 0, %s139
    %s154 = sphi 0, %s140
    %s158 = sphi 0, %s158
    %s160 = sphi 0, %s158
    %s161 = sphi 0, %s160
    %s175 = sphi 0, %s161
    %s181 = sphi 0, %s183
    %s184 = sphi 0, %s181
    %s185 = sphi 0, %s184
    %s201 = sphi 0, %s185
  $region4: #{critic_forward.1} parent=0 // loop_header_branch
    %17 = sbr.rel (%p15) target = $region8
  $region5: #{critic_forward.1} parent=0 // loop_body
    %s19 = ssub.s32 %s14, 1
    %s20 = ssub.s32 %s14, 2
    %s21 = sadd.s32 %s14, 1
    %s22 = ssub.s32 %s14, %s21
    %p23 = scmp.eq.s32.totalorder %s22, 0
    %s25 = sadd.s32 %s24, 1
    %s26 = scalar_select %p23, %s24, %s25
    %p29 = pneg %p23
    %p30 = scmp.eq.s32.totalorder %s14, 1
    %p31 = por %p29, %p30
    %p32 = scmp.ne.s32.totalorder %s24, %s27
    %p33 = scmp.eq.s32.totalorder %s14, 0
    %p34 = por %p32, %p33
    %p35 = scmp.ne.s32.totalorder %s24, %s27
    %p36 = scmp.eq.s32.totalorder %s19, 1
    %p37 = por %p35, %p36
    %p38 = scmp.ne.s32.totalorder %s27, %s28
    %p39 = scmp.eq.s32.totalorder %s19, 0
    %p40 = por %p38, %p39
    %p41 = scmp.ne.s32.totalorder %s27, %s28
    %p42 = scmp.eq.s32.totalorder %s20, 1
    %p43 = por %p41, %p42
    %p45 = scmp.ne.s32.totalorder %s28, %s44
    %p46 = scmp.eq.s32.totalorder %s20, 0
    %p47 = por %p45, %p46
    %s48 = ssub.s32 %s14, %s21
    %p49 = scmp.eq.s32.totalorder %s48, 0
    %s51 = sadd.s32 %s50, 1
    %s52 = scalar_select %p49, %s50, %s51
    %p55 = pneg %p49
    %p56 = scmp.eq.s32.totalorder %s14, 1
    %p57 = por %p55, %p56
    %p58 = scmp.ne.s32.totalorder %s50, %s53
    %p59 = scmp.eq.s32.totalorder %s14, 0
    %p60 = por %p58, %p59
    %p61 = scmp.ne.s32.totalorder %s50, %s53
    %p62 = scmp.eq.s32.totalorder %s19, 1
    %p63 = por %p61, %p62
    %p64 = scmp.ne.s32.totalorder %s53, %s54
    %p65 = scmp.eq.s32.totalorder %s19, 0
    %p66 = por %p64, %p65
    %p67 = scmp.ne.s32.totalorder %s53, %s54
    %p68 = scmp.eq.s32.totalorder %s20, 1
    %p69 = por %p67, %p68
    %p71 = scmp.ne.s32.totalorder %s54, %s70
    %p72 = scmp.eq.s32.totalorder %s20, 0
    %p73 = por %p71, %p72
    %s75 = sadd.s32 %s74, 1
    %p78 = scmp.eq.s32.totalorder %s14, 1
    %p79 = scmp.ne.s32.totalorder %s74, %s76
    %p80 = scmp.eq.s32.totalorder %s14, 0
    %p81 = por %p79, %p80
    %p82 = scmp.ne.s32.totalorder %s74, %s76
    %p83 = scmp.eq.s32.totalorder %s19, 1
    %p84 = por %p82, %p83
    %p85 = scmp.ne.s32.totalorder %s76, %s77
    %p86 = scmp.eq.s32.totalorder %s19, 0
    %p87 = por %p85, %p86
    %p88 = scmp.ne.s32.totalorder %s76, %s77
    %p89 = scmp.eq.s32.totalorder %s20, 1
    %p90 = por %p88, %p89
    %p92 = scmp.ne.s32.totalorder %s77, %s91
    %p93 = scmp.eq.s32.totalorder %s20, 0
    %p94 = por %p92, %p93
    %s96 = sadd.s32 %s95, 1
    %p99 = scmp.eq.s32.totalorder %s14, 1
    %p100 = scmp.ne.s32.totalorder %s95, %s97
    %p101 = scmp.eq.s32.totalorder %s14, 0
    %p102 = por %p100, %p101
    %p103 = scmp.ne.s32.totalorder %s95, %s97
    %p104 = scmp.eq.s32.totalorder %s19, 1
    %p105 = por %p103, %p104
    %p106 = scmp.ne.s32.totalorder %s97, %s98
    %p107 = scmp.eq.s32.totalorder %s19, 0
    %p108 = por %p106, %p107
    %p109 = scmp.ne.s32.totalorder %s97, %s98
    %p110 = scmp.eq.s32.totalorder %s20, 1
    %p111 = por %p109, %p110
    %p113 = scmp.ne.s32.totalorder %s98, %s112
    %p114 = scmp.eq.s32.totalorder %s20, 0
    %p115 = por %p113, %p114
    %s117 = sadd.s32 %s116, 1
    %p120 = scmp.eq.s32.totalorder %s14, 1
    %p121 = scmp.ne.s32.totalorder %s116, %s118
    %p122 = scmp.eq.s32.totalorder %s14, 0
    %p123 = por %p121, %p122
    %p124 = scmp.ne.s32.totalorder %s116, %s118
    %p125 = scmp.eq.s32.totalorder %s19, 1
    %p126 = por %p124, %p125
    %p127 = scmp.ne.s32.totalorder %s118, %s119
    %p128 = scmp.eq.s32.totalorder %s19, 0
    %p129 = por %p127, %p128
    %p130 = scmp.ne.s32.totalorder %s118, %s119
    %p131 = scmp.eq.s32.totalorder %s20, 1
    %p132 = por %p130, %p131
    %p134 = scmp.ne.s32.totalorder %s119, %s133
    %p135 = scmp.eq.s32.totalorder %s20, 0
    %p136 = por %p134, %p135
    %s138 = sadd.s32 %s137, 1
    %p141 = scmp.eq.s32.totalorder %s14, 1
    %p142 = scmp.ne.s32.totalorder %s137, %s139
    %p143 = scmp.eq.s32.totalorder %s14, 0
    %p144 = por %p142, %p143
    %p145 = scmp.ne.s32.totalorder %s137, %s139
    %p146 = scmp.eq.s32.totalorder %s19, 1
    %p147 = por %p145, %p146
    %p148 = scmp.ne.s32.totalorder %s139, %s140
    %p149 = scmp.eq.s32.totalorder %s19, 0
    %p150 = por %p148, %p149
    %p151 = scmp.ne.s32.totalorder %s139, %s140
    %p152 = scmp.eq.s32.totalorder %s20, 1
    %p153 = por %p151, %p152
    %p155 = scmp.ne.s32.totalorder %s140, %s154
    %p156 = scmp.eq.s32.totalorder %s20, 0
    %p157 = por %p155, %p156
    %s159 = sadd.s32 %s158, 1
    %p162 = scmp.eq.s32.totalorder %s14, 1
    %p163 = scmp.ne.s32.totalorder %s158, %s160
    %p164 = scmp.eq.s32.totalorder %s14, 0
    %p165 = por %p163, %p164
    %p166 = scmp.ne.s32.totalorder %s158, %s160
    %p167 = scmp.eq.s32.totalorder %s19, 1
    %p168 = por %p166, %p167
    %p169 = scmp.ne.s32.totalorder %s160, %s161
    %p170 = scmp.eq.s32.totalorder %s19, 0
    %p171 = por %p169, %p170
    %p172 = scmp.ne.s32.totalorder %s160, %s161
    %p173 = scmp.eq.s32.totalorder %s20, 1
    %p174 = por %p172, %p173
    %p176 = scmp.ne.s32.totalorder %s161, %s175
    %p177 = scmp.eq.s32.totalorder %s20, 0
    %p178 = por %p176, %p177
    %s179 = ssub.s32 %s14, %s21
    %p180 = scmp.eq.s32.totalorder %s179, 0
    %s182 = sadd.s32 %s181, 1
    %s183 = scalar_select %p180, %s181, %s182
    %p186 = pneg %p180
    %p187 = scmp.eq.s32.totalorder %s14, 1
    %p188 = por %p186, %p187
    %p189 = scmp.ne.s32.totalorder %s181, %s184
    %p190 = scmp.eq.s32.totalorder %s14, 0
    %p191 = por %p189, %p190
    %p192 = scmp.ne.s32.totalorder %s181, %s184
    %p193 = scmp.eq.s32.totalorder %s19, 1
    %p194 = por %p192, %p193
    %p195 = scmp.ne.s32.totalorder %s184, %s185
    %p196 = scmp.eq.s32.totalorder %s19, 0
    %p197 = por %p195, %p196
    %p198 = scmp.ne.s32.totalorder %s184, %s185
    %p199 = scmp.eq.s32.totalorder %s20, 1
    %p200 = por %p198, %p199
    %p202 = scmp.ne.s32.totalorder %s185, %s201
    %p203 = scmp.eq.s32.totalorder %s20, 0
    %p204 = por %p202, %p203
    %p205 = scmp.le.s32.totalorder 1, %s14
    %p206 = scmp.lt.s32.totalorder %s14, 3
    %p207 = pnand %p205, %p206
    %p208 = pneg %p207
    // Predicated region
    $region9: #{critic_forward.1} parent=5 // pred_check
      _
    $region10: #{critic_forward.1} parent=5 // pred_check_branch
      %210 = sbr.rel (%p207) target = $region12
    $region11: #{critic_forward.1} parent=5 // pred_region
      %s211 = ssub.s32 %s14, 1
      // Predicated region
      $region13: #{critic_forward.1} parent=11 // pred_check
        %p212 = pneg %p87
      $region14: #{critic_forward.1} parent=11 // pred_check_branch
        %214 = sbr.rel (%p212) target = $region16
      $region15: #{critic_forward.1} parent=11 // pred_region
        _
      $region16: #{critic_forward.1} parent=11 // pred_fallthru
        _
      // Predicated region
      $region17: #{critic_forward.1} parent=11 // pred_check
        %p215 = pneg %p108
      $region18: #{critic_forward.1} parent=11 // pred_check_branch
        %217 = sbr.rel (%p215) target = $region20
      $region19: #{critic_forward.1} parent=11 // pred_region
        _
      $region20: #{critic_forward.1} parent=11 // pred_fallthru
        _
      // Predicated region
      $region21: #{critic_forward.1} parent=11 // pred_check
        %p218 = pneg %p129
      $region22: #{critic_forward.1} parent=11 // pred_check_branch
        %220 = sbr.rel (%p218) target = $region24
      $region23: #{critic_forward.1} parent=11 // pred_region
        _
      $region24: #{critic_forward.1} parent=11 // pred_fallthru
        _
      // Predicated region
      $region25: #{critic_forward.1} parent=11 // pred_check
        %p221 = pneg %p150
      $region26: #{critic_forward.1} parent=11 // pred_check_branch
        %223 = sbr.rel (%p221) target = $region28
      $region27: #{critic_forward.1} parent=11 // pred_region
        _
      $region28: #{critic_forward.1} parent=11 // pred_fallthru
        _
      // Predicated region
      $region29: #{critic_forward.1} parent=11 // pred_check
        %p224 = pneg %p171
      $region30: #{critic_forward.1} parent=11 // pred_check_branch
        %226 = sbr.rel (%p224) target = $region32
      $region31: #{critic_forward.1} parent=11 // pred_region
        _
      $region32: #{critic_forward.1} parent=11 // pred_fallthru
        _
    $region12: #{critic_forward.1} parent=5 // pred_fallthru
      _
    %p227 = scmp.lt.s32.totalorder %s14, 2
    // Predicated region
    $region33: #{critic_forward.1} parent=5 // pred_check
      %p228 = pneg %p227
    $region34: #{critic_forward.1} parent=5 // pred_check_branch
      %230 = sbr.rel (%p228) target = $region36
    $region35: #{critic_forward.1} parent=5 // pred_region
      // Predicated region
      $region37: #{critic_forward.1} parent=35 // pred_check
        %p231 = pneg %p34
      $region38: #{critic_forward.1} parent=35 // pred_check_branch
        %233 = sbr.rel (%p231) target = $region40
      $region39: #{critic_forward.1} parent=35 // pred_region
        %s234 = smul.u32 16, %s14
        %p235 = scmp.lt.s32.totalorder %s234, 31
        %s236 = scalar_select %p235, %s234, 31
        %s237 = smul.addr %s236, 8
        %s238 = scalar_lea.vmem %s0, %s237
        %s239 = smul.u32 16, %s14
      $region40: #{critic_forward.1} parent=35 // pred_fallthru
        _
      // Predicated region
      $region41: #{critic_forward.1} parent=35 // pred_check
        %p240 = pneg %p60
      $region42: #{critic_forward.1} parent=35 // pred_check_branch
        %242 = sbr.rel (%p240) target = $region44
      $region43: #{critic_forward.1} parent=35 // pred_region
        %s243 = smul.u32 16, %s14
        %p244 = scmp.lt.s32.totalorder %s243, 31
        %s245 = scalar_select %p244, %s243, 31
        %s246 = smul.addr %s245, 8
        %s247 = scalar_lea.vmem %s1, %s246
        %s248 = smul.u32 16, %s14
      $region44: #{critic_forward.1} parent=35 // pred_fallthru
        _
    $region36: #{critic_forward.1} parent=5 // pred_fallthru
      _
    %p249 = scmp.le.s32.totalorder 1, %s14
    %p250 = scmp.lt.s32.totalorder %s14, 3
    %p251 = pnand %p249, %p250
    %p252 = pneg %p251
    // Predicated region
    $region45: #{critic_forward.1} parent=5 // pred_check
      _
    $region46: #{critic_forward.1} parent=5 // pred_check_branch
      %254 = sbr.rel (%p251) target = $region48
    $region47: #{critic_forward.1} parent=5 // pred_region
      %s255 = ssub.s32 %s14, 1
      %s256 = smul.u32 16, %s19
      %p257 = scmp.lt.s32.totalorder %s256, 31
      %s258 = scalar_select %p257, %s256, 31
      %s259 = smul.addr %s258, 8
      %s260 = scalar_lea.vmem %s0, %s259
      %p261 = pneg %p40
      %p262 = pneg %p37
      %s263 = smul.u32 16, %s19
      %p264 = scmp.lt.s32.totalorder %s263, 31
      %s265 = scalar_select %p264, %s263, 31
      %s266 = smul.addr %s265, 8
      %s267 = scalar_lea.vmem %s1, %s266
      %p268 = pneg %p66
      %p269 = pneg %p63
      %p270 = pneg %p87
      %p271 = pneg %p84
      %p272 = pneg %p108
      %p273 = pneg %p105
      %p274 = pneg %p129
      %p275 = pneg %p126
      %p276 = pneg %p150
      %p277 = pneg %p147
      %p278 = pneg %p171
      %p279 = pneg %p168
      %p280 = pneg %p197
      %p281 = pneg %p194
      %s282 = smul.u32 16, %s19
      %p283 = scmp.lt.s32.totalorder %s282, 31
      %s284 = scalar_select %p283, %s282, 31
      %s285 = smul.addr %s284, 8
      %s286 = scalar_lea.vmem %s7, %s285
      %s287 = smul.u32 16, %s19
      %p288 = scmp.lt.s32.totalorder %s287, 31
      %s289 = scalar_select %p288, %s287, 31
      %s290 = smul.addr %s289, 8
      %s291 = scalar_lea.vmem %s0, %s290
      %s292 = smul.u32 16, %s19
      %s293 = smul.u32 16, %s19
      %p294 = scmp.lt.s32.totalorder %s293, 31
      %s295 = scalar_select %p294, %s293, 31
      %s296 = smul.addr %s295, 8
      %s297 = scalar_lea.vmem %s1, %s296
      %s298 = smul.u32 16, %s19
      %s299 = smul.u32 16, %s19
      %p300 = scmp.lt.s32.totalorder %s299, 31
      %s301 = scalar_select %p300, %s299, 31
      %s302 = smul.addr %s301, 8
      %s303 = scalar_lea.vmem %s7, %s302
      %s304 = smul.u32 16, %s19
      %v306 = vld [vmem:[%s4] ss:$4 sm:$0xf]
      %s307 = scalar_lea.vmem %s4, 1
      %v308 = vld [vmem:[%s307] ss:$4 sm:$0xf]
      %s309 = scalar_lea.vmem %s4, 2
      %v310 = vld [vmem:[%s309] ss:$4 sm:$0xf]
      %v311 = vld [vmem:[%s5] ss:$8 sm:$0x7]
      %s312 = scalar_lea.vmem %s5, 1
      %v313 = vld [vmem:[%s312] ss:$8 sm:$0x7]
      %s314 = scalar_lea.vmem %s5, 2
      %v315 = vld [vmem:[%s314] ss:$8 sm:$0x7]
      %s316 = scalar_lea.vmem %s5, 3
      %v317 = vld [vmem:[%s316] ss:$8 sm:$0x7]
      %s318 = scalar_lea.vmem %s5, 4
      %v319 = vld [vmem:[%s318] ss:$8 sm:$0x7]
      %s320 = sld [smem:[#allocation2]]
      %v321 = vld [vmem:[%s291] sm:$0xff]
      %v322 = vld [vmem:[%s291 + $0x8] sm:$0xff]
      %v323 = vld [vmem:[%s291 + $0x10] sm:$0xff]
      %v324 = vld [vmem:[%s291 + $0x18] sm:$0xff]
      %v325 = vld [vmem:[%s291 + $0x20] sm:$0xff]
      %v326 = vld [vmem:[%s291 + $0x28] sm:$0xff]
      %v327 = vld [vmem:[%s291 + $0x30] sm:$0xff]
      %v328 = vld [vmem:[%s291 + $0x38] sm:$0xff]
      %v329 = vld [vmem:[%s291 + $0x40] sm:$0xff]
      %v330 = vld [vmem:[%s291 + $0x48] sm:$0xff]
      %v331 = vld [vmem:[%s291 + $0x50] sm:$0xff]
      %v332 = vld [vmem:[%s291 + $0x58] sm:$0xff]
      %v333 = vld [vmem:[%s291 + $0x60] sm:$0xff]
      %v334 = vld [vmem:[%s291 + $0x68] sm:$0xff]
      %v335 = vld [vmem:[%s291 + $0x70] sm:$0xff]
      %v336 = vld [vmem:[%s291 + $0x78] sm:$0xff]
      %v337 = vld [vmem:[%s297] sm:$0xff]
      %v338 = vld [vmem:[%s297 + $0x8] sm:$0xff]
      %v339 = vld [vmem:[%s297 + $0x10] sm:$0xff]
      %v340 = vld [vmem:[%s297 + $0x18] sm:$0xff]
      %v341 = vld [vmem:[%s297 + $0x20] sm:$0xff]
      %v342 = vld [vmem:[%s297 + $0x28] sm:$0xff]
      %v343 = vld [vmem:[%s297 + $0x30] sm:$0xff]
      %v344 = vld [vmem:[%s297 + $0x38] sm:$0xff]
      %v345 = vld [vmem:[%s297 + $0x40] sm:$0xff]
      %v346 = vld [vmem:[%s297 + $0x48] sm:$0xff]
      %v347 = vld [vmem:[%s297 + $0x50] sm:$0xff]
      %v348 = vld [vmem:[%s297 + $0x58] sm:$0xff]
      %v349 = vld [vmem:[%s297 + $0x60] sm:$0xff]
      %v350 = vld [vmem:[%s297 + $0x68] sm:$0xff]
      %v351 = vld [vmem:[%s297 + $0x70] sm:$0xff]
      %v352 = vld [vmem:[%s297 + $0x78] sm:$0xff]
      %369 = vrot.lane.b32.xlu0 %v337, 16
      %v370 = vpop.permute.xlu0 %369
      %371 = vrot.lane.b32.xlu0 %v338, 16
      %v372 = vpop.permute.xlu0 %371
      %373 = vrot.lane.b32.xlu0 %v339, 16
      %v374 = vpop.permute.xlu0 %373
      %375 = vrot.lane.b32.xlu0 %v340, 16
      %v376 = vpop.permute.xlu0 %375
      %377 = vrot.lane.b32.xlu0 %v341, 16
      %v378 = vpop.permute.xlu0 %377
      %379 = vrot.lane.b32.xlu0 %v342, 16
      %v380 = vpop.permute.xlu0 %379
      %381 = vrot.lane.b32.xlu0 %v343, 16
      %v382 = vpop.permute.xlu0 %381
      %383 = vrot.lane.b32.xlu0 %v344, 16
      %v384 = vpop.permute.xlu0 %383
      %385 = vrot.lane.b32.xlu0 %v345, 16
      %v386 = vpop.permute.xlu0 %385
      %387 = vrot.lane.b32.xlu0 %v346, 16
      %v388 = vpop.permute.xlu0 %387
      %389 = vrot.lane.b32.xlu0 %v347, 16
      %v390 = vpop.permute.xlu0 %389
      %391 = vrot.lane.b32.xlu0 %v348, 16
      %v392 = vpop.permute.xlu0 %391
      %393 = vrot.lane.b32.xlu0 %v349, 16
      %v394 = vpop.permute.xlu0 %393
      %395 = vrot.lane.b32.xlu0 %v350, 16
      %v396 = vpop.permute.xlu0 %395
      %397 = vrot.lane.b32.xlu0 %v351, 16
      %v398 = vpop.permute.xlu0 %397
      %399 = vrot.lane.b32.xlu0 %v352, 16
      %v400 = vpop.permute.xlu0 %399
      %vm417 = vcmask 130048
      %v418 = vsel %vm417, %v321, %v370
      %v419 = vsel %vm417, %v322, %v372
      %v420 = vsel %vm417, %v323, %v374
      %v421 = vsel %vm417, %v324, %v376
      %v422 = vsel %vm417, %v325, %v378
      %v423 = vsel %vm417, %v326, %v380
      %v424 = vsel %vm417, %v327, %v382
      %v425 = vsel %vm417, %v328, %v384
      %v426 = vsel %vm417, %v329, %v386
      %v427 = vsel %vm417, %v330, %v388
      %v428 = vsel %vm417, %v331, %v390
      %v429 = vsel %vm417, %v332, %v392
      %v430 = vsel %vm417, %v333, %v394
      %v431 = vsel %vm417, %v334, %v396
      %v432 = vsel %vm417, %v335, %v398
      %v433 = vsel %vm417, %v336, %v400
      %v434 = vpack.c.bf16 %v419, %v418
      %v435 = vpack.c.bf16 %v421, %v420
      %v436 = vpack.c.bf16 %v423, %v422
      %v437 = vpack.c.bf16 %v425, %v424
      %v438 = vpack.c.bf16 %v427, %v426
      %v439 = vpack.c.bf16 %v429, %v428
      %v440 = vpack.c.bf16 %v431, %v430
      %v441 = vpack.c.bf16 %v433, %v432
      %v442 = vld [vmem:[%s2] sm:$0xff]
      %v443 = vld [vmem:[%s2 + $0x8] sm:$0xff]
      %v444 = vld [vmem:[%s2 + $0x10] sm:$0xff]
      %v445 = vld [vmem:[%s2 + $0x18] sm:$0xf]
      %v446 = vld [vmem:[%s2 + $0x1c] sm:$0xff]
      %v447 = vld [vmem:[%s2 + $0x24] sm:$0xff]
      %v448 = vld [vmem:[%s2 + $0x2c] sm:$0xff]
      %v449 = vld [vmem:[%s2 + $0x34] sm:$0xf]
      %v450 = vld [vmem:[%s2 + $0x38] sm:$0x33]
      %v451 = vld [vmem:[%s2 + $0x40] sm:$0x33]
      %v452 = vld [vmem:[%s2 + $0x48] sm:$0x33]
      %v453 = vld [vmem:[%s2 + $0x50] sm:$0x3]
      %v466 = vunpack.c.l.b16 %v442
      %v467 = vunpack.c.h.b16 %v442
      %v468 = vunpack.c.l.b16 %v443
      %v469 = vunpack.c.h.b16 %v443
      %v470 = vunpack.c.l.b16 %v444
      %v471 = vunpack.c.h.b16 %v444
      %v472 = vunpack.c.l.b16 %v445
      %v473 = vunpack.c.l.b16 %v446
      %v474 = vunpack.c.h.b16 %v446
      %v475 = vunpack.c.l.b16 %v447
      %v476 = vunpack.c.h.b16 %v447
      %v477 = vunpack.c.l.b16 %v448
      %v478 = vunpack.c.h.b16 %v448
      %v479 = vunpack.c.l.b16 %v449
      %v480 = vunpack.c.l.b16 %v450
      %v481 = vunpack.c.h.b16 %v450
      %v482 = vunpack.c.l.b16 %v451
      %v483 = vunpack.c.h.b16 %v451
      %v484 = vunpack.c.l.b16 %v452
      %v485 = vunpack.c.h.b16 %v452
      %v486 = vunpack.c.l.b16 %v453
      %v487 = vpack.c.b16 %v473, %v466
      %v488 = vpack.c.b16 %v474, %v467
      %v489 = vpack.c.b16 %v475, %v468
      %v490 = vpack.c.b16 %v476, %v469
      %v491 = vpack.c.b16 %v477, %v470
      %v492 = vpack.c.b16 %v478, %v471
      %v493 = vpack.c.b16 %v479, %v472
      %v494 = vpack.c.b16 %v480, %v480
      %v495 = vpack.c.b16 %v481, %v481
      %v496 = vpack.c.b16 %v482, %v482
      %v497 = vpack.c.b16 %v483, %v483
      %v498 = vpack.c.b16 %v484, %v484
      %v499 = vpack.c.b16 %v485, %v485
      %v500 = vpack.c.b16 %v486, %v486
      %vm508 = vcmask 162816
      %v510 = vsel %vm508, %v434, 0
      %v513 = vsel %vm508, %v435, 0
      %v516 = vsel %vm508, %v436, 0
      %v519 = vsel %vm508, %v437, 0
      %v522 = vsel %vm508, %v438, 0
      %v525 = vsel %vm508, %v439, 0
      %v528 = vsel %vm508, %v440, 0
      %v531 = vsel %vm508, %v441, 0
      %vm533 = vcmask 1041408
      %v535 = vsel %vm533, %v494, 0
      %v538 = vsel %vm533, %v495, 0
      %v541 = vsel %vm533, %v496, 0
      %v544 = vsel %vm533, %v497, 0
      %v547 = vsel %vm533, %v498, 0
      %v550 = vsel %vm533, %v499, 0
      %v553 = vsel %vm533, %v500, 0
      %555 = vmatprep.subr.bf16.mxu0 0
      %556 = vmatpush1.bf16.msra.mxu0 0
      %557 = vmatprep.subr.bf16.mxu0 0
      %558 = vmatpush1.bf16.msra.mxu0 0
      %559 = vmatprep.subr.bf16.mxu0 0
      %560 = vmatpush1.bf16.msra.mxu0 0
      %561 = vmatprep.subr.bf16.mxu0 0
      %562 = vmatpush1.bf16.msra.mxu0 0
      %563 = vmatprep.subr.bf16.mxu0 0
      %564 = vmatpush1.bf16.msra.mxu0 0
      %565 = vmatprep.subr.bf16.mxu0 0
      %566 = vmatpush1.bf16.msra.mxu0 0
      %567 = vmatprep.subr.bf16.mxu0 %v538
      %568 = vmatpush1.bf16.msra.mxu0 %v535
      %569 = vmatprep.subr.bf16.mxu0 %v488
      %570 = vmatpush1.bf16.msra.mxu0 %v487
      %571 = vmatprep.subr.bf16.mxu0 0
      %572 = vmatpush2.bf16.msra.mxu0 0
      %573 = vmatprep.subr.bf16.mxu0 0
      %574 = vmatpush2.bf16.msra.mxu0 0
      %575 = vmatprep.subr.bf16.mxu0 0
      %576 = vmatpush2.bf16.msra.mxu0 0
      %577 = vmatprep.subr.bf16.mxu0 0
      %578 = vmatpush2.bf16.msra.mxu0 0
      %579 = vmatprep.subr.bf16.mxu0 0
      %580 = vmatpush2.bf16.msra.mxu0 0
      %581 = vmatprep.subr.bf16.mxu0 0
      %582 = vmatpush2.bf16.msra.mxu0 0
      %583 = vmatprep.subr.bf16.mxu0 0
      %584 = vmatpush2.bf16.msra.mxu0 0
      %585 = vmatprep.subr.bf16.mxu0 0
      %586 = vmatpush2.bf16.msra.mxu0 0
      %587 = vmatprep.mubr.bf16.mxu0 0
      %588 = vmatmul.mubr.bf16.gmra.mxu0 %v510
      %v589 = vpop.f32.mrf.mxu0
      %v590 = vadd.f32 0.0, %v589
      %v591 = vpop.f32.mrf.mxu0
      %v592 = vadd.f32 0.0, %v591
      %v593 = vpop.f32.mrf.mxu0
      %v594 = vadd.f32 0.0, %v593
      %v595 = vpop.f32.mrf.mxu0
      %v596 = vadd.f32 0.0, %v595
      %597 = vmatprep.mubr.bf16.mxu0 0
      %598 = vmatmul.mubr.bf16.gmra.mxu0 %v513
      %v599 = vpop.f32.mrf.mxu0
      %v600 = vadd.f32 0.0, %v599
      %v601 = vpop.f32.mrf.mxu0
      %v602 = vadd.f32 0.0, %v601
      %v603 = vpop.f32.mrf.mxu0
      %v604 = vadd.f32 0.0, %v603
      %v605 = vpop.f32.mrf.mxu0
      %v606 = vadd.f32 0.0, %v605
      %607 = vmatprep.mubr.bf16.mxu0 0
      %608 = vmatmul.mubr.bf16.gmra.mxu0 %v516
      %v609 = vpop.f32.mrf.mxu0
      %v610 = vadd.f32 0.0, %v609
      %v611 = vpop.f32.mrf.mxu0
      %v612 = vadd.f32 0.0, %v611
      %v613 = vpop.f32.mrf.mxu0
      %v614 = vadd.f32 0.0, %v613
      %v615 = vpop.f32.mrf.mxu0
      %v616 = vadd.f32 0.0, %v615
      %617 = vmatprep.mubr.bf16.mxu0 0
      %618 = vmatmul.mubr.bf16.gmra.mxu0 %v519
      %v619 = vpop.f32.mrf.mxu0
      %v620 = vadd.f32 0.0, %v619
      %v621 = vpop.f32.mrf.mxu0
      %v622 = vadd.f32 0.0, %v621
      %v623 = vpop.f32.mrf.mxu0
      %v624 = vadd.f32 0.0, %v623
      %v625 = vpop.f32.mrf.mxu0
      %v626 = vadd.f32 0.0, %v625
      %627 = vmatprep.mubr.bf16.mxu0 0
      %628 = vmatmul.mubr.bf16.gmra.mxu0 %v522
      %v629 = vpop.f32.mrf.mxu0
      %v630 = vadd.f32 0.0, %v629
      %v631 = vpop.f32.mrf.mxu0
      %v632 = vadd.f32 0.0, %v631
      %v633 = vpop.f32.mrf.mxu0
      %v634 = vadd.f32 0.0, %v633
      %v635 = vpop.f32.mrf.mxu0
      %v636 = vadd.f32 0.0, %v635
      %637 = vmatprep.mubr.bf16.mxu0 0
      %638 = vmatmul.mubr.bf16.gmra.mxu0 %v525
      %v639 = vpop.f32.mrf.mxu0
      %v640 = vadd.f32 0.0, %v639
      %v641 = vpop.f32.mrf.mxu0
      %v642 = vadd.f32 0.0, %v641
      %v643 = vpop.f32.mrf.mxu0
      %v644 = vadd.f32 0.0, %v643
      %v645 = vpop.f32.mrf.mxu0
      %v646 = vadd.f32 0.0, %v645
      %647 = vmatprep.mubr.bf16.mxu0 0
      %648 = vmatmul.mubr.bf16.gmra.mxu0 %v528
      %v649 = vpop.f32.mrf.mxu0
      %v650 = vadd.f32 0.0, %v649
      %v651 = vpop.f32.mrf.mxu0
      %v652 = vadd.f32 0.0, %v651
      %v653 = vpop.f32.mrf.mxu0
      %v654 = vadd.f32 0.0, %v653
      %v655 = vpop.f32.mrf.mxu0
      %v656 = vadd.f32 0.0, %v655
      %657 = vmatprep.mubr.bf16.mxu0 0
      %658 = vmatmul.mubr.bf16.gmra.mxu0 %v531
      %v659 = vpop.f32.mrf.mxu0
      %v660 = vadd.f32 0.0, %v659
      %v661 = vpop.f32.mrf.mxu0
      %v662 = vadd.f32 0.0, %v661
      %v663 = vpop.f32.mrf.mxu0
      %v664 = vadd.f32 0.0, %v663
      %v665 = vpop.f32.mrf.mxu0
      %v666 = vadd.f32 0.0, %v665
      %667 = vdwg.mxu0
      %668 = vmatprep.subr.bf16.mxu0 0
      %669 = vmatpush1.bf16.msra.mxu0 0
      %670 = vmatprep.subr.bf16.mxu0 0
      %671 = vmatpush1.bf16.msra.mxu0 0
      %672 = vmatprep.subr.bf16.mxu0 0
      %673 = vmatpush1.bf16.msra.mxu0 0
      %674 = vmatprep.subr.bf16.mxu0 0
      %675 = vmatpush1.bf16.msra.mxu0 0
      %676 = vmatprep.subr.bf16.mxu0 0
      %677 = vmatpush1.bf16.msra.mxu0 0
      %678 = vmatprep.subr.bf16.mxu0 0
      %679 = vmatpush1.bf16.msra.mxu0 0
      %680 = vmatprep.subr.bf16.mxu0 %v544
      %681 = vmatpush1.bf16.msra.mxu0 %v541
      %682 = vmatprep.subr.bf16.mxu0 %v490
      %683 = vmatpush1.bf16.msra.mxu0 %v489
      %684 = vmatprep.subr.bf16.mxu0 0
      %685 = vmatpush2.bf16.msra.mxu0 0
      %686 = vmatprep.subr.bf16.mxu0 0
      %687 = vmatpush2.bf16.msra.mxu0 0
      %688 = vmatprep.subr.bf16.mxu0 0
      %689 = vmatpush2.bf16.msra.mxu0 0
      %690 = vmatprep.subr.bf16.mxu0 0
      %691 = vmatpush2.bf16.msra.mxu0 0
      %692 = vmatprep.subr.bf16.mxu0 0
      %693 = vmatpush2.bf16.msra.mxu0 0
      %694 = vmatprep.subr.bf16.mxu0 0
      %695 = vmatpush2.bf16.msra.mxu0 0
      %696 = vmatprep.subr.bf16.mxu0 0
      %697 = vmatpush2.bf16.msra.mxu0 0
      %698 = vmatprep.subr.bf16.mxu0 0
      %699 = vmatpush2.bf16.msra.mxu0 0
      %700 = vmatprep.mubr.bf16.mxu0 0
      %701 = vmatmul.mubr.bf16.gmra.mxu0 %v510
      %v702 = vpop.f32.mrf.mxu0
      %v703 = vadd.f32 0.0, %v702
      %v704 = vpop.f32.mrf.mxu0
      %v705 = vadd.f32 0.0, %v704
      %v706 = vpop.f32.mrf.mxu0
      %v707 = vadd.f32 0.0, %v706
      %v708 = vpop.f32.mrf.mxu0
      %v709 = vadd.f32 0.0, %v708
      %710 = vmatprep.mubr.bf16.mxu0 0
      %711 = vmatmul.mubr.bf16.gmra.mxu0 %v513
      %v712 = vpop.f32.mrf.mxu0
      %v713 = vadd.f32 0.0, %v712
      %v714 = vpop.f32.mrf.mxu0
      %v715 = vadd.f32 0.0, %v714
      %v716 = vpop.f32.mrf.mxu0
      %v717 = vadd.f32 0.0, %v716
      %v718 = vpop.f32.mrf.mxu0
      %v719 = vadd.f32 0.0, %v718
      %720 = vmatprep.mubr.bf16.mxu0 0
      %721 = vmatmul.mubr.bf16.gmra.mxu0 %v516
      %v722 = vpop.f32.mrf.mxu0
      %v723 = vadd.f32 0.0, %v722
      %v724 = vpop.f32.mrf.mxu0
      %v725 = vadd.f32 0.0, %v724
      %v726 = vpop.f32.mrf.mxu0
      %v727 = vadd.f32 0.0, %v726
      %v728 = vpop.f32.mrf.mxu0
      %v729 = vadd.f32 0.0, %v728
      %730 = vmatprep.mubr.bf16.mxu0 0
      %731 = vmatmul.mubr.bf16.gmra.mxu0 %v519
      %v732 = vpop.f32.mrf.mxu0
      %v733 = vadd.f32 0.0, %v732
      %v734 = vpop.f32.mrf.mxu0
      %v735 = vadd.f32 0.0, %v734
      %v736 = vpop.f32.mrf.mxu0
      %v737 = vadd.f32 0.0, %v736
      %v738 = vpop.f32.mrf.mxu0
      %v739 = vadd.f32 0.0, %v738
      %740 = vmatprep.mubr.bf16.mxu0 0
      %741 = vmatmul.mubr.bf16.gmra.mxu0 %v522
      %v742 = vpop.f32.mrf.mxu0
      %v743 = vadd.f32 0.0, %v742
      %v744 = vpop.f32.mrf.mxu0
      %v745 = vadd.f32 0.0, %v744
      %v746 = vpop.f32.mrf.mxu0
      %v747 = vadd.f32 0.0, %v746
      %v748 = vpop.f32.mrf.mxu0
      %v749 = vadd.f32 0.0, %v748
      %750 = vmatprep.mubr.bf16.mxu0 0
      %751 = vmatmul.mubr.bf16.gmra.mxu0 %v525
      %v752 = vpop.f32.mrf.mxu0
      %v753 = vadd.f32 0.0, %v752
      %v754 = vpop.f32.mrf.mxu0
      %v755 = vadd.f32 0.0, %v754
      %v756 = vpop.f32.mrf.mxu0
      %v757 = vadd.f32 0.0, %v756
      %v758 = vpop.f32.mrf.mxu0
      %v759 = vadd.f32 0.0, %v758
      %760 = vmatprep.mubr.bf16.mxu0 0
      %761 = vmatmul.mubr.bf16.gmra.mxu0 %v528
      %v762 = vpop.f32.mrf.mxu0
      %v763 = vadd.f32 0.0, %v762
      %v764 = vpop.f32.mrf.mxu0
      %v765 = vadd.f32 0.0, %v764
      %v766 = vpop.f32.mrf.mxu0
      %v767 = vadd.f32 0.0, %v766
      %v768 = vpop.f32.mrf.mxu0
      %v769 = vadd.f32 0.0, %v768
      %770 = vmatprep.mubr.bf16.mxu0 0
      %771 = vmatmul.mubr.bf16.gmra.mxu0 %v531
      %v772 = vpop.f32.mrf.mxu0
      %v773 = vadd.f32 0.0, %v772
      %v774 = vpop.f32.mrf.mxu0
      %v775 = vadd.f32 0.0, %v774
      %v776 = vpop.f32.mrf.mxu0
      %v777 = vadd.f32 0.0, %v776
      %v778 = vpop.f32.mrf.mxu0
      %v779 = vadd.f32 0.0, %v778
      %780 = vdwg.mxu0
      %781 = vmatprep.subr.bf16.mxu0 0
      %782 = vmatpush1.bf16.msra.mxu0 0
      %783 = vmatprep.subr.bf16.mxu0 0
      %784 = vmatpush1.bf16.msra.mxu0 0
      %785 = vmatprep.subr.bf16.mxu0 0
      %786 = vmatpush1.bf16.msra.mxu0 0
      %787 = vmatprep.subr.bf16.mxu0 0
      %788 = vmatpush1.bf16.msra.mxu0 0
      %789 = vmatprep.subr.bf16.mxu0 0
      %790 = vmatpush1.bf16.msra.mxu0 0
      %791 = vmatprep.subr.bf16.mxu0 0
      %792 = vmatpush1.bf16.msra.mxu0 0
      %793 = vmatprep.subr.bf16.mxu0 %v550
      %794 = vmatpush1.bf16.msra.mxu0 %v547
      %795 = vmatprep.subr.bf16.mxu0 %v492
      %796 = vmatpush1.bf16.msra.mxu0 %v491
      %797 = vmatprep.subr.bf16.mxu0 0
      %798 = vmatpush2.bf16.msra.mxu0 0
      %799 = vmatprep.subr.bf16.mxu0 0
      %800 = vmatpush2.bf16.msra.mxu0 0
      %801 = vmatprep.subr.bf16.mxu0 0
      %802 = vmatpush2.bf16.msra.mxu0 0
      %803 = vmatprep.subr.bf16.mxu0 0
      %804 = vmatpush2.bf16.msra.mxu0 0
      %805 = vmatprep.subr.bf16.mxu0 0
      %806 = vmatpush2.bf16.msra.mxu0 0
      %807 = vmatprep.subr.bf16.mxu0 0
      %808 = vmatpush2.bf16.msra.mxu0 0
      %809 = vmatprep.subr.bf16.mxu0 0
      %810 = vmatpush2.bf16.msra.mxu0 0
      %811 = vmatprep.subr.bf16.mxu0 0
      %812 = vmatpush2.bf16.msra.mxu0 0
      %813 = vmatprep.mubr.bf16.mxu0 0
      %814 = vmatmul.mubr.bf16.gmra.mxu0 %v510
      %v815 = vpop.f32.mrf.mxu0
      %v816 = vadd.f32 0.0, %v815
      %v817 = vpop.f32.mrf.mxu0
      %v818 = vadd.f32 0.0, %v817
      %v819 = vpop.f32.mrf.mxu0
      %v820 = vadd.f32 0.0, %v819
      %v821 = vpop.f32.mrf.mxu0
      %v822 = vadd.f32 0.0, %v821
      %823 = vmatprep.mubr.bf16.mxu0 0
      %824 = vmatmul.mubr.bf16.gmra.mxu0 %v513
      %v825 = vpop.f32.mrf.mxu0
      %v826 = vadd.f32 0.0, %v825
      %v827 = vpop.f32.mrf.mxu0
      %v828 = vadd.f32 0.0, %v827
      %v829 = vpop.f32.mrf.mxu0
      %v830 = vadd.f32 0.0, %v829
      %v831 = vpop.f32.mrf.mxu0
      %v832 = vadd.f32 0.0, %v831
      %833 = vmatprep.mubr.bf16.mxu0 0
      %834 = vmatmul.mubr.bf16.gmra.mxu0 %v516
      %v835 = vpop.f32.mrf.mxu0
      %v836 = vadd.f32 0.0, %v835
      %v837 = vpop.f32.mrf.mxu0
      %v838 = vadd.f32 0.0, %v837
      %v839 = vpop.f32.mrf.mxu0
      %v840 = vadd.f32 0.0, %v839
      %v841 = vpop.f32.mrf.mxu0
      %v842 = vadd.f32 0.0, %v841
      %843 = vmatprep.mubr.bf16.mxu0 0
      %844 = vmatmul.mubr.bf16.gmra.mxu0 %v519
      %v845 = vpop.f32.mrf.mxu0
      %v846 = vadd.f32 0.0, %v845
      %v847 = vpop.f32.mrf.mxu0
      %v848 = vadd.f32 0.0, %v847
      %v849 = vpop.f32.mrf.mxu0
      %v850 = vadd.f32 0.0, %v849
      %v851 = vpop.f32.mrf.mxu0
      %v852 = vadd.f32 0.0, %v851
      %853 = vmatprep.mubr.bf16.mxu0 0
      %854 = vmatmul.mubr.bf16.gmra.mxu0 %v522
      %v855 = vpop.f32.mrf.mxu0
      %v856 = vadd.f32 0.0, %v855
      %v857 = vpop.f32.mrf.mxu0
      %v858 = vadd.f32 0.0, %v857
      %v859 = vpop.f32.mrf.mxu0
      %v860 = vadd.f32 0.0, %v859
      %v861 = vpop.f32.mrf.mxu0
      %v862 = vadd.f32 0.0, %v861
      %863 = vmatprep.mubr.bf16.mxu0 0
      %864 = vmatmul.mubr.bf16.gmra.mxu0 %v525
      %v865 = vpop.f32.mrf.mxu0
      %v866 = vadd.f32 0.0, %v865
      %v867 = vpop.f32.mrf.mxu0
      %v868 = vadd.f32 0.0, %v867
      %v869 = vpop.f32.mrf.mxu0
      %v870 = vadd.f32 0.0, %v869
      %v871 = vpop.f32.mrf.mxu0
      %v872 = vadd.f32 0.0, %v871
      %873 = vmatprep.mubr.bf16.mxu0 0
      %874 = vmatmul.mubr.bf16.gmra.mxu0 %v528
      %v875 = vpop.f32.mrf.mxu0
      %v876 = vadd.f32 0.0, %v875
      %v877 = vpop.f32.mrf.mxu0
      %v878 = vadd.f32 0.0, %v877
      %v879 = vpop.f32.mrf.mxu0
      %v880 = vadd.f32 0.0, %v879
      %v881 = vpop.f32.mrf.mxu0
      %v882 = vadd.f32 0.0, %v881
      %883 = vmatprep.mubr.bf16.mxu0 0
      %884 = vmatmul.mubr.bf16.gmra.mxu0 %v531
      %v885 = vpop.f32.mrf.mxu0
      %v886 = vadd.f32 0.0, %v885
      %v887 = vpop.f32.mrf.mxu0
      %v888 = vadd.f32 0.0, %v887
      %v889 = vpop.f32.mrf.mxu0
      %v890 = vadd.f32 0.0, %v889
      %v891 = vpop.f32.mrf.mxu0
      %v892 = vadd.f32 0.0, %v891
      %893 = vdwg.mxu0
      %894 = vmatprep.subr.bf16.mxu0 0
      %895 = vmatpush1.bf16.msra.mxu0 0
      %896 = vmatprep.subr.bf16.mxu0 0
      %897 = vmatpush1.bf16.msra.mxu0 0
      %898 = vmatprep.subr.bf16.mxu0 0
      %899 = vmatpush1.bf16.msra.mxu0 0
      %900 = vmatprep.subr.bf16.mxu0 0
      %901 = vmatpush1.bf16.msra.mxu0 0
      %902 = vmatprep.subr.bf16.mxu0 0
      %903 = vmatpush1.bf16.msra.mxu0 0
      %904 = vmatprep.subr.bf16.mxu0 0
      %905 = vmatpush1.bf16.msra.mxu0 0
      %906 = vmatprep.subr.bf16.mxu0 0
      %907 = vmatpush1.bf16.msra.mxu0 %v553
      %908 = vmatprep.subr.bf16.mxu0 0
      %909 = vmatpush1.bf16.msra.mxu0 %v493
      %910 = vmatprep.subr.bf16.mxu0 0
      %911 = vmatpush2.bf16.msra.mxu0 0
      %912 = vmatprep.subr.bf16.mxu0 0
      %913 = vmatpush2.bf16.msra.mxu0 0
      %914 = vmatprep.subr.bf16.mxu0 0
      %915 = vmatpush2.bf16.msra.mxu0 0
      %916 = vmatprep.subr.bf16.mxu0 0
      %917 = vmatpush2.bf16.msra.mxu0 0
      %918 = vmatprep.subr.bf16.mxu0 0
      %919 = vmatpush2.bf16.msra.mxu0 0
      %920 = vmatprep.subr.bf16.mxu0 0
      %921 = vmatpush2.bf16.msra.mxu0 0
      %922 = vmatprep.subr.bf16.mxu0 0
      %923 = vmatpush2.bf16.msra.mxu0 0
      %924 = vmatprep.subr.bf16.mxu0 0
      %925 = vmatpush2.bf16.msra.mxu0 0
      %926 = vmatprep.mubr.bf16.mxu0 0
      %927 = vmatmul.mubr.bf16.gmra.mxu0 %v510
      %v928 = vpop.f32.mrf.mxu0
      %v929 = vadd.f32 0.0, %v928
      %v930 = vpop.f32.mrf.mxu0
      %v931 = vpop.f32.mrf.mxu0
      %v932 = vadd.f32 0.0, %v931
      %v933 = vpop.f32.mrf.mxu0
      %934 = vmatprep.mubr.bf16.mxu0 0
      %935 = vmatmul.mubr.bf16.gmra.mxu0 %v513
      %v936 = vpop.f32.mrf.mxu0
      %v937 = vadd.f32 0.0, %v936
      %v938 = vpop.f32.mrf.mxu0
      %v939 = vpop.f32.mrf.mxu0
      %v940 = vadd.f32 0.0, %v939
      %v941 = vpop.f32.mrf.mxu0
      %942 = vmatprep.mubr.bf16.mxu0 0
      %943 = vmatmul.mubr.bf16.gmra.mxu0 %v516
      %v944 = vpop.f32.mrf.mxu0
      %v945 = vadd.f32 0.0, %v944
      %v946 = vpop.f32.mrf.mxu0
      %v947 = vpop.f32.mrf.mxu0
      %v948 = vadd.f32 0.0, %v947
      %v949 = vpop.f32.mrf.mxu0
      %950 = vmatprep.mubr.bf16.mxu0 0
      %951 = vmatmul.mubr.bf16.gmra.mxu0 %v519
      %v952 = vpop.f32.mrf.mxu0
      %v953 = vadd.f32 0.0, %v952
      %v954 = vpop.f32.mrf.mxu0
      %v955 = vpop.f32.mrf.mxu0
      %v956 = vadd.f32 0.0, %v955
      %v957 = vpop.f32.mrf.mxu0
      %958 = vmatprep.mubr.bf16.mxu0 0
      %959 = vmatmul.mubr.bf16.gmra.mxu0 %v522
      %v960 = vpop.f32.mrf.mxu0
      %v961 = vadd.f32 0.0, %v960
      %v962 = vpop.f32.mrf.mxu0
      %v963 = vpop.f32.mrf.mxu0
      %v964 = vadd.f32 0.0, %v963
      %v965 = vpop.f32.mrf.mxu0
      %966 = vmatprep.mubr.bf16.mxu0 0
      %967 = vmatmul.mubr.bf16.gmra.mxu0 %v525
      %v968 = vpop.f32.mrf.mxu0
      %v969 = vadd.f32 0.0, %v968
      %v970 = vpop.f32.mrf.mxu0
      %v971 = vpop.f32.mrf.mxu0
      %v972 = vadd.f32 0.0, %v971
      %v973 = vpop.f32.mrf.mxu0
      %974 = vmatprep.mubr.bf16.mxu0 0
      %975 = vmatmul.mubr.bf16.gmra.mxu0 %v528
      %v976 = vpop.f32.mrf.mxu0
      %v977 = vadd.f32 0.0, %v976
      %v978 = vpop.f32.mrf.mxu0
      %v979 = vpop.f32.mrf.mxu0
      %v980 = vadd.f32 0.0, %v979
      %v981 = vpop.f32.mrf.mxu0
      %982 = vmatprep.mubr.bf16.mxu0 0
      %983 = vmatmul.mubr.bf16.gmra.mxu0 %v531
      %v984 = vpop.f32.mrf.mxu0
      %v985 = vadd.f32 0.0, %v984
      %v986 = vpop.f32.mrf.mxu0
      %v987 = vpop.f32.mrf.mxu0
      %v988 = vadd.f32 0.0, %v987
      %v989 = vpop.f32.mrf.mxu0
      %990 = vdwg.mxu0
      %v992 = vlaneseq
      %v993 = vshrl.u32 %v992, 7
      %v994 = vsub.s32 0, %v993
      %v995 = vrot.slane %v306, %v994
      %v996 = vlaneseq
      %v997 = vshrl.u32 %v996, 7
      %v998 = vsub.s32 1, %v997
      %v999 = vrot.slane %v306, %v998
      %v1000 = vlaneseq
      %v1001 = vshrl.u32 %v1000, 7
      %v1002 = vsub.s32 2, %v1001
      %v1003 = vrot.slane %v306, %v1002
      %v1004 = vlaneseq
      %v1005 = vshrl.u32 %v1004, 7
      %v1006 = vsub.s32 3, %v1005
      %v1007 = vrot.slane %v306, %v1006
      %v1012 = vadd.f32 %v590, %v995
      %v1013 = vadd.f32 %v592, %v999
      %v1014 = vadd.f32 %v703, %v1003
      %v1015 = vadd.f32 %v705, %v1007
      %v1016 = vadd.f32 %v594, %v995
      %v1017 = vadd.f32 %v596, %v999
      %v1018 = vadd.f32 %v707, %v1003
      %v1019 = vadd.f32 %v709, %v1007
      %v1020 = vadd.f32 %v600, %v995
      %v1021 = vadd.f32 %v602, %v999
      %v1022 = vadd.f32 %v713, %v1003
      %v1023 = vadd.f32 %v715, %v1007
      %v1024 = vadd.f32 %v604, %v995
      %v1025 = vadd.f32 %v606, %v999
      %v1026 = vadd.f32 %v717, %v1003
      %v1027 = vadd.f32 %v719, %v1007
      %v1028 = vadd.f32 %v610, %v995
      %v1029 = vadd.f32 %v612, %v999
      %v1030 = vadd.f32 %v723, %v1003
      %v1031 = vadd.f32 %v725, %v1007
      %v1032 = vadd.f32 %v614, %v995
      %v1033 = vadd.f32 %v616, %v999
      %v1034 = vadd.f32 %v727, %v1003
      %v1035 = vadd.f32 %v729, %v1007
      %v1036 = vadd.f32 %v620, %v995
      %v1037 = vadd.f32 %v622, %v999
      %v1038 = vadd.f32 %v733, %v1003
      %v1039 = vadd.f32 %v735, %v1007
      %v1040 = vadd.f32 %v624, %v995
      %v1041 = vadd.f32 %v626, %v999
      %v1042 = vadd.f32 %v737, %v1003
      %v1043 = vadd.f32 %v739, %v1007
      %v1044 = vadd.f32 %v630, %v995
      %v1045 = vadd.f32 %v632, %v999
      %v1046 = vadd.f32 %v743, %v1003
      %v1047 = vadd.f32 %v745, %v1007
      %v1048 = vadd.f32 %v634, %v995
      %v1049 = vadd.f32 %v636, %v999
      %v1050 = vadd.f32 %v747, %v1003
      %v1051 = vadd.f32 %v749, %v1007
      %v1052 = vadd.f32 %v640, %v995
      %v1053 = vadd.f32 %v642, %v999
      %v1054 = vadd.f32 %v753, %v1003
      %v1055 = vadd.f32 %v755, %v1007
      %v1056 = vadd.f32 %v644, %v995
      %v1057 = vadd.f32 %v646, %v999
      %v1058 = vadd.f32 %v757, %v1003
      %v1059 = vadd.f32 %v759, %v1007
      %v1060 = vadd.f32 %v650, %v995
      %v1061 = vadd.f32 %v652, %v999
      %v1062 = vadd.f32 %v763, %v1003
      %v1063 = vadd.f32 %v765, %v1007
      %v1064 = vadd.f32 %v654, %v995
      %v1065 = vadd.f32 %v656, %v999
      %v1066 = vadd.f32 %v767, %v1003
      %v1067 = vadd.f32 %v769, %v1007
      %v1068 = vadd.f32 %v660, %v995
      %v1069 = vadd.f32 %v662, %v999
      %v1070 = vadd.f32 %v773, %v1003
      %v1071 = vadd.f32 %v775, %v1007
      %v1072 = vadd.f32 %v664, %v995
      %v1073 = vadd.f32 %v666, %v999
      %v1074 = vadd.f32 %v777, %v1003
      %v1075 = vadd.f32 %v779, %v1007
      %v1077 = vlaneseq
      %v1078 = vshrl.u32 %v1077, 7
      %v1079 = vsub.s32 0, %v1078
      %v1080 = vrot.slane %v317, %v1079
      %v1081 = vlaneseq
      %v1082 = vshrl.u32 %v1081, 7
      %v1083 = vsub.s32 1, %v1082
      %v1084 = vrot.slane %v317, %v1083
      %v1085 = vlaneseq
      %v1086 = vshrl.u32 %v1085, 7
      %v1087 = vsub.s32 2, %v1086
      %v1088 = vrot.slane %v317, %v1087
      %v1092 = vadd.f32 %v816, %v1080
      %v1093 = vadd.f32 %v818, %v1084
      %v1094 = vadd.f32 %v929, %v1088
      %v1095 = vadd.f32 %v820, %v1080
      %v1096 = vadd.f32 %v822, %v1084
      %v1097 = vadd.f32 %v932, %v1088
      %v1098 = vadd.f32 %v826, %v1080
      %v1099 = vadd.f32 %v828, %v1084
      %v1100 = vadd.f32 %v937, %v1088
      %v1101 = vadd.f32 %v830, %v1080
      %v1102 = vadd.f32 %v832, %v1084
      %v1103 = vadd.f32 %v940, %v1088
      %v1104 = vadd.f32 %v836, %v1080
      %v1105 = vadd.f32 %v838, %v1084
      %v1106 = vadd.f32 %v945, %v1088
      %v1107 = vadd.f32 %v840, %v1080
      %v1108 = vadd.f32 %v842, %v1084
      %v1109 = vadd.f32 %v948, %v1088
      %v1110 = vadd.f32 %v846, %v1080
      %v1111 = vadd.f32 %v848, %v1084
      %v1112 = vadd.f32 %v953, %v1088
      %v1113 = vadd.f32 %v850, %v1080
      %v1114 = vadd.f32 %v852, %v1084
      %v1115 = vadd.f32 %v956, %v1088
      %v1116 = vadd.f32 %v856, %v1080
      %v1117 = vadd.f32 %v858, %v1084
      %v1118 = vadd.f32 %v961, %v1088
      %v1119 = vadd.f32 %v860, %v1080
      %v1120 = vadd.f32 %v862, %v1084
      %v1121 = vadd.f32 %v964, %v1088
      %v1122 = vadd.f32 %v866, %v1080
      %v1123 = vadd.f32 %v868, %v1084
      %v1124 = vadd.f32 %v969, %v1088
      %v1125 = vadd.f32 %v870, %v1080
      %v1126 = vadd.f32 %v872, %v1084
      %v1127 = vadd.f32 %v972, %v1088
      %v1128 = vadd.f32 %v876, %v1080
      %v1129 = vadd.f32 %v878, %v1084
      %v1130 = vadd.f32 %v977, %v1088
      %v1131 = vadd.f32 %v880, %v1080
      %v1132 = vadd.f32 %v882, %v1084
      %v1133 = vadd.f32 %v980, %v1088
      %v1134 = vadd.f32 %v886, %v1080
      %v1135 = vadd.f32 %v888, %v1084
      %v1136 = vadd.f32 %v985, %v1088
      %v1137 = vadd.f32 %v890, %v1080
      %v1138 = vadd.f32 %v892, %v1084
      %v1139 = vadd.f32 %v988, %v1088
      %v1140 = vadd.f32 %v1012, %v1013
      %v1141 = vadd.f32 %v1140, %v1014
      %v1142 = vadd.f32 %v1141, %v1015
      %1143 = vadd.xlane.f32.xlu0 %v1142
      %v1144 = vpop.xlane.xlu0 %1143
      %v1145 = vadd.f32 %v1016, %v1017
      %v1146 = vadd.f32 %v1145, %v1018
      %v1147 = vadd.f32 %v1146, %v1019
      %1148 = vadd.xlane.f32.xlu0 %v1147
      %v1149 = vpop.xlane.xlu0 %1148
      %v1150 = vadd.f32 %v1020, %v1021
      %v1151 = vadd.f32 %v1150, %v1022
      %v1152 = vadd.f32 %v1151, %v1023
      %1153 = vadd.xlane.f32.xlu0 %v1152
      %v1154 = vpop.xlane.xlu0 %1153
      %v1155 = vadd.f32 %v1024, %v1025
      %v1156 = vadd.f32 %v1155, %v1026
      %v1157 = vadd.f32 %v1156, %v1027
      %1158 = vadd.xlane.f32.xlu0 %v1157
      %v1159 = vpop.xlane.xlu0 %1158
      %v1160 = vadd.f32 %v1028, %v1029
      %v1161 = vadd.f32 %v1160, %v1030
      %v1162 = vadd.f32 %v1161, %v1031
      %1163 = vadd.xlane.f32.xlu0 %v1162
      %v1164 = vpop.xlane.xlu0 %1163
      %v1165 = vadd.f32 %v1032, %v1033
      %v1166 = vadd.f32 %v1165, %v1034
      %v1167 = vadd.f32 %v1166, %v1035
      %1168 = vadd.xlane.f32.xlu0 %v1167
      %v1169 = vpop.xlane.xlu0 %1168
      %v1170 = vadd.f32 %v1036, %v1037
      %v1171 = vadd.f32 %v1170, %v1038
      %v1172 = vadd.f32 %v1171, %v1039
      %1173 = vadd.xlane.f32.xlu0 %v1172
      %v1174 = vpop.xlane.xlu0 %1173
      %v1175 = vadd.f32 %v1040, %v1041
      %v1176 = vadd.f32 %v1175, %v1042
      %v1177 = vadd.f32 %v1176, %v1043
      %1178 = vadd.xlane.f32.xlu0 %v1177
      %v1179 = vpop.xlane.xlu0 %1178
      %v1180 = vadd.f32 %v1044, %v1045
      %v1181 = vadd.f32 %v1180, %v1046
      %v1182 = vadd.f32 %v1181, %v1047
      %1183 = vadd.xlane.f32.xlu0 %v1182
      %v1184 = vpop.xlane.xlu0 %1183
      %v1185 = vadd.f32 %v1048, %v1049
      %v1186 = vadd.f32 %v1185, %v1050
      %v1187 = vadd.f32 %v1186, %v1051
      %1188 = vadd.xlane.f32.xlu0 %v1187
      %v1189 = vpop.xlane.xlu0 %1188
      %v1190 = vadd.f32 %v1052, %v1053
      %v1191 = vadd.f32 %v1190, %v1054
      %v1192 = vadd.f32 %v1191, %v1055
      %1193 = vadd.xlane.f32.xlu0 %v1192
      %v1194 = vpop.xlane.xlu0 %1193
      %v1195 = vadd.f32 %v1056, %v1057
      %v1196 = vadd.f32 %v1195, %v1058
      %v1197 = vadd.f32 %v1196, %v1059
      %1198 = vadd.xlane.f32.xlu0 %v1197
      %v1199 = vpop.xlane.xlu0 %1198
      %v1200 = vadd.f32 %v1060, %v1061
      %v1201 = vadd.f32 %v1200, %v1062
      %v1202 = vadd.f32 %v1201, %v1063
      %1203 = vadd.xlane.f32.xlu0 %v1202
      %v1204 = vpop.xlane.xlu0 %1203
      %v1205 = vadd.f32 %v1064, %v1065
      %v1206 = vadd.f32 %v1205, %v1066
      %v1207 = vadd.f32 %v1206, %v1067
      %1208 = vadd.xlane.f32.xlu0 %v1207
      %v1209 = vpop.xlane.xlu0 %1208
      %v1210 = vadd.f32 %v1068, %v1069
      %v1211 = vadd.f32 %v1210, %v1070
      %v1212 = vadd.f32 %v1211, %v1071
      %1213 = vadd.xlane.f32.xlu0 %v1212
      %v1214 = vpop.xlane.xlu0 %1213
      %v1215 = vadd.f32 %v1072, %v1073
      %v1216 = vadd.f32 %v1215, %v1074
      %v1217 = vadd.f32 %v1216, %v1075
      %1218 = vadd.xlane.f32.xlu0 %v1217
      %v1219 = vpop.xlane.xlu0 %1218
      %v1220 = vmul.f32 %v1012, %v1012
      %v1221 = vmul.f32 %v1013, %v1013
      %v1222 = vmul.f32 %v1014, %v1014
      %v1223 = vmul.f32 %v1015, %v1015
      %v1224 = vmul.f32 %v1016, %v1016
      %v1225 = vmul.f32 %v1017, %v1017
      %v1226 = vmul.f32 %v1018, %v1018
      %v1227 = vmul.f32 %v1019, %v1019
      %v1228 = vmul.f32 %v1020, %v1020
      %v1229 = vmul.f32 %v1021, %v1021
      %v1230 = vmul.f32 %v1022, %v1022
      %v1231 = vmul.f32 %v1023, %v1023
      %v1232 = vmul.f32 %v1024, %v1024
      %v1233 = vmul.f32 %v1025, %v1025
      %v1234 = vmul.f32 %v1026, %v1026
      %v1235 = vmul.f32 %v1027, %v1027
      %v1236 = vmul.f32 %v1028, %v1028
      %v1237 = vmul.f32 %v1029, %v1029
      %v1238 = vmul.f32 %v1030, %v1030
      %v1239 = vmul.f32 %v1031, %v1031
      %v1240 = vmul.f32 %v1032, %v1032
      %v1241 = vmul.f32 %v1033, %v1033
      %v1242 = vmul.f32 %v1034, %v1034
      %v1243 = vmul.f32 %v1035, %v1035
      %v1244 = vmul.f32 %v1036, %v1036
      %v1245 = vmul.f32 %v1037, %v1037
      %v1246 = vmul.f32 %v1038, %v1038
      %v1247 = vmul.f32 %v1039, %v1039
      %v1248 = vmul.f32 %v1040, %v1040
      %v1249 = vmul.f32 %v1041, %v1041
      %v1250 = vmul.f32 %v1042, %v1042
      %v1251 = vmul.f32 %v1043, %v1043
      %v1252 = vmul.f32 %v1044, %v1044
      %v1253 = vmul.f32 %v1045, %v1045
      %v1254 = vmul.f32 %v1046, %v1046
      %v1255 = vmul.f32 %v1047, %v1047
      %v1256 = vmul.f32 %v1048, %v1048
      %v1257 = vmul.f32 %v1049, %v1049
      %v1258 = vmul.f32 %v1050, %v1050
      %v1259 = vmul.f32 %v1051, %v1051
      %v1260 = vmul.f32 %v1052, %v1052
      %v1261 = vmul.f32 %v1053, %v1053
      %v1262 = vmul.f32 %v1054, %v1054
      %v1263 = vmul.f32 %v1055, %v1055
      %v1264 = vmul.f32 %v1056, %v1056
      %v1265 = vmul.f32 %v1057, %v1057
      %v1266 = vmul.f32 %v1058, %v1058
      %v1267 = vmul.f32 %v1059, %v1059
      %v1268 = vmul.f32 %v1060, %v1060
      %v1269 = vmul.f32 %v1061, %v1061
      %v1270 = vmul.f32 %v1062, %v1062
      %v1271 = vmul.f32 %v1063, %v1063
      %v1272 = vmul.f32 %v1064, %v1064
      %v1273 = vmul.f32 %v1065, %v1065
      %v1274 = vmul.f32 %v1066, %v1066
      %v1275 = vmul.f32 %v1067, %v1067
      %v1276 = vmul.f32 %v1068, %v1068
      %v1277 = vmul.f32 %v1069, %v1069
      %v1278 = vmul.f32 %v1070, %v1070
      %v1279 = vmul.f32 %v1071, %v1071
      %v1280 = vmul.f32 %v1072, %v1072
      %v1281 = vmul.f32 %v1073, %v1073
      %v1282 = vmul.f32 %v1074, %v1074
      %v1283 = vmul.f32 %v1075, %v1075
      %v1284 = vadd.f32 %v1220, %v1221
      %v1285 = vadd.f32 %v1284, %v1222
      %v1286 = vadd.f32 %v1285, %v1223
      %1287 = vadd.xlane.f32.xlu0 %v1286
      %v1288 = vpop.xlane.xlu0 %1287
      %v1289 = vadd.f32 %v1224, %v1225
      %v1290 = vadd.f32 %v1289, %v1226
      %v1291 = vadd.f32 %v1290, %v1227
      %1292 = vadd.xlane.f32.xlu0 %v1291
      %v1293 = vpop.xlane.xlu0 %1292
      %v1294 = vadd.f32 %v1228, %v1229
      %v1295 = vadd.f32 %v1294, %v1230
      %v1296 = vadd.f32 %v1295, %v1231
      %1297 = vadd.xlane.f32.xlu0 %v1296
      %v1298 = vpop.xlane.xlu0 %1297
      %v1299 = vadd.f32 %v1232, %v1233
      %v1300 = vadd.f32 %v1299, %v1234
      %v1301 = vadd.f32 %v1300, %v1235
      %1302 = vadd.xlane.f32.xlu0 %v1301
      %v1303 = vpop.xlane.xlu0 %1302
      %v1304 = vadd.f32 %v1236, %v1237
      %v1305 = vadd.f32 %v1304, %v1238
      %v1306 = vadd.f32 %v1305, %v1239
      %1307 = vadd.xlane.f32.xlu0 %v1306
      %v1308 = vpop.xlane.xlu0 %1307
      %v1309 = vadd.f32 %v1240, %v1241
      %v1310 = vadd.f32 %v1309, %v1242
      %v1311 = vadd.f32 %v1310, %v1243
      %1312 = vadd.xlane.f32.xlu0 %v1311
      %v1313 = vpop.xlane.xlu0 %1312
      %v1314 = vadd.f32 %v1244, %v1245
      %v1315 = vadd.f32 %v1314, %v1246
      %v1316 = vadd.f32 %v1315, %v1247
      %1317 = vadd.xlane.f32.xlu0 %v1316
      %v1318 = vpop.xlane.xlu0 %1317
      %v1319 = vadd.f32 %v1248, %v1249
      %v1320 = vadd.f32 %v1319, %v1250
      %v1321 = vadd.f32 %v1320, %v1251
      %1322 = vadd.xlane.f32.xlu0 %v1321
      %v1323 = vpop.xlane.xlu0 %1322
      %v1324 = vadd.f32 %v1252, %v1253
      %v1325 = vadd.f32 %v1324, %v1254
      %v1326 = vadd.f32 %v1325, %v1255
      %1327 = vadd.xlane.f32.xlu0 %v1326
      %v1328 = vpop.xlane.xlu0 %1327
      %v1329 = vadd.f32 %v1256, %v1257
      %v1330 = vadd.f32 %v1329, %v1258
      %v1331 = vadd.f32 %v1330, %v1259
      %1332 = vadd.xlane.f32.xlu0 %v1331
      %v1333 = vpop.xlane.xlu0 %1332
      %v1334 = vadd.f32 %v1260, %v1261
      %v1335 = vadd.f32 %v1334, %v1262
      %v1336 = vadd.f32 %v1335, %v1263
      %1337 = vadd.xlane.f32.xlu0 %v1336
      %v1338 = vpop.xlane.xlu0 %1337
      %v1339 = vadd.f32 %v1264, %v1265
      %v1340 = vadd.f32 %v1339, %v1266
      %v1341 = vadd.f32 %v1340, %v1267
      %1342 = vadd.xlane.f32.xlu0 %v1341
      %v1343 = vpop.xlane.xlu0 %1342
      %v1344 = vadd.f32 %v1268, %v1269
      %v1345 = vadd.f32 %v1344, %v1270
      %v1346 = vadd.f32 %v1345, %v1271
      %1347 = vadd.xlane.f32.xlu0 %v1346
      %v1348 = vpop.xlane.xlu0 %1347
      %v1349 = vadd.f32 %v1272, %v1273
      %v1350 = vadd.f32 %v1349, %v1274
      %v1351 = vadd.f32 %v1350, %v1275
      %1352 = vadd.xlane.f32.xlu0 %v1351
      %v1353 = vpop.xlane.xlu0 %1352
      %v1354 = vadd.f32 %v1276, %v1277
      %v1355 = vadd.f32 %v1354, %v1278
      %v1356 = vadd.f32 %v1355, %v1279
      %1357 = vadd.xlane.f32.xlu0 %v1356
      %v1358 = vpop.xlane.xlu0 %1357
      %v1359 = vadd.f32 %v1280, %v1281
      %v1360 = vadd.f32 %v1359, %v1282
      %v1361 = vadd.f32 %v1360, %v1283
      %1362 = vadd.xlane.f32.xlu0 %v1361
      %v1363 = vpop.xlane.xlu0 %1362
      %v1364 = vmul.f32 %v1144, 0.0025
      %v1365 = vmul.f32 %v1149, 0.0025
      %v1366 = vmul.f32 %v1154, 0.0025
      %v1367 = vmul.f32 %v1159, 0.0025
      %v1368 = vmul.f32 %v1164, 0.0025
      %v1369 = vmul.f32 %v1169, 0.0025
      %v1370 = vmul.f32 %v1174, 0.0025
      %v1371 = vmul.f32 %v1179, 0.0025
      %v1372 = vmul.f32 %v1184, 0.0025
      %v1373 = vmul.f32 %v1189, 0.0025
      %v1374 = vmul.f32 %v1194, 0.0025
      %v1375 = vmul.f32 %v1199, 0.0025
      %v1376 = vmul.f32 %v1204, 0.0025
      %v1377 = vmul.f32 %v1209, 0.0025
      %v1378 = vmul.f32 %v1214, 0.0025
      %v1379 = vmul.f32 %v1219, 0.0025
      %v1380 = vmul.f32 %v1288, 0.0025
      %v1381 = vmul.f32 %v1293, 0.0025
      %v1382 = vmul.f32 %v1298, 0.0025
      %v1383 = vmul.f32 %v1303, 0.0025
      %v1384 = vmul.f32 %v1308, 0.0025
      %v1385 = vmul.f32 %v1313, 0.0025
      %v1386 = vmul.f32 %v1318, 0.0025
      %v1387 = vmul.f32 %v1323, 0.0025
      %v1388 = vmul.f32 %v1328, 0.0025
      %v1389 = vmul.f32 %v1333, 0.0025
      %v1390 = vmul.f32 %v1338, 0.0025
      %v1391 = vmul.f32 %v1343, 0.0025
      %v1392 = vmul.f32 %v1348, 0.0025
      %v1393 = vmul.f32 %v1353, 0.0025
      %v1394 = vmul.f32 %v1358, 0.0025
      %v1395 = vmul.f32 %v1363, 0.0025
      %v1396 = vmul.f32 %v1364, %v1364
      %v1397 = vmul.f32 %v1365, %v1365
      %v1398 = vmul.f32 %v1366, %v1366
      %v1399 = vmul.f32 %v1367, %v1367
      %v1400 = vmul.f32 %v1368, %v1368
      %v1401 = vmul.f32 %v1369, %v1369
      %v1402 = vmul.f32 %v1370, %v1370
      %v1403 = vmul.f32 %v1371, %v1371
      %v1404 = vmul.f32 %v1372, %v1372
      %v1405 = vmul.f32 %v1373, %v1373
      %v1406 = vmul.f32 %v1374, %v1374
      %v1407 = vmul.f32 %v1375, %v1375
      %v1408 = vmul.f32 %v1376, %v1376
      %v1409 = vmul.f32 %v1377, %v1377
      %v1410 = vmul.f32 %v1378, %v1378
      %v1411 = vmul.f32 %v1379, %v1379
      %v1412 = vsub.f32 %v1380, %v1396
      %v1413 = vsub.f32 %v1381, %v1397
      %v1414 = vsub.f32 %v1382, %v1398
      %v1415 = vsub.f32 %v1383, %v1399
      %v1416 = vsub.f32 %v1384, %v1400
      %v1417 = vsub.f32 %v1385, %v1401
      %v1418 = vsub.f32 %v1386, %v1402
      %v1419 = vsub.f32 %v1387, %v1403
      %v1420 = vsub.f32 %v1388, %v1404
      %v1421 = vsub.f32 %v1389, %v1405
      %v1422 = vsub.f32 %v1390, %v1406
      %v1423 = vsub.f32 %v1391, %v1407
      %v1424 = vsub.f32 %v1392, %v1408
      %v1425 = vsub.f32 %v1393, %v1409
      %v1426 = vsub.f32 %v1394, %v1410
      %v1427 = vsub.f32 %v1395, %v1411
      %v1428 = vadd.f32 %v1412, 1e-05
      %v1429 = vadd.f32 %v1413, 1e-05
      %v1430 = vadd.f32 %v1414, 1e-05
      %v1431 = vadd.f32 %v1415, 1e-05
      %v1432 = vadd.f32 %v1416, 1e-05
      %v1433 = vadd.f32 %v1417, 1e-05
      %v1434 = vadd.f32 %v1418, 1e-05
      %v1435 = vadd.f32 %v1419, 1e-05
      %v1436 = vadd.f32 %v1420, 1e-05
      %v1437 = vadd.f32 %v1421, 1e-05
      %v1438 = vadd.f32 %v1422, 1e-05
      %v1439 = vadd.f32 %v1423, 1e-05
      %v1440 = vadd.f32 %v1424, 1e-05
      %v1441 = vadd.f32 %v1425, 1e-05
      %v1442 = vadd.f32 %v1426, 1e-05
      %v1443 = vadd.f32 %v1427, 1e-05
      %v1444 = vrsqrt.pop %v1428
      %v1445 = vrsqrt.pop %v1429
      %v1446 = vrsqrt.pop %v1430
      %v1447 = vrsqrt.pop %v1431
      %v1448 = vrsqrt.pop %v1432
      %v1449 = vrsqrt.pop %v1433
      %v1450 = vrsqrt.pop %v1434
      %v1451 = vrsqrt.pop %v1435
      %v1452 = vrsqrt.pop %v1436
      %v1453 = vrsqrt.pop %v1437
      %v1454 = vrsqrt.pop %v1438
      %v1455 = vrsqrt.pop %v1439
      %v1456 = vrsqrt.pop %v1440
      %v1457 = vrsqrt.pop %v1441
      %v1458 = vrsqrt.pop %v1442
      %v1459 = vrsqrt.pop %v1443
      %v1460 = vsub.f32 %v1012, %v1364
      %v1461 = vsub.f32 %v1013, %v1364
      %v1462 = vsub.f32 %v1014, %v1364
      %v1463 = vsub.f32 %v1015, %v1364
      %v1464 = vsub.f32 %v1016, %v1365
      %v1465 = vsub.f32 %v1017, %v1365
      %v1466 = vsub.f32 %v1018, %v1365
      %v1467 = vsub.f32 %v1019, %v1365
      %v1468 = vsub.f32 %v1020, %v1366
      %v1469 = vsub.f32 %v1021, %v1366
      %v1470 = vsub.f32 %v1022, %v1366
      %v1471 = vsub.f32 %v1023, %v1366
      %v1472 = vsub.f32 %v1024, %v1367
      %v1473 = vsub.f32 %v1025, %v1367
      %v1474 = vsub.f32 %v1026, %v1367
      %v1475 = vsub.f32 %v1027, %v1367
      %v1476 = vsub.f32 %v1028, %v1368
      %v1477 = vsub.f32 %v1029, %v1368
      %v1478 = vsub.f32 %v1030, %v1368
      %v1479 = vsub.f32 %v1031, %v1368
      %v1480 = vsub.f32 %v1032, %v1369
      %v1481 = vsub.f32 %v1033, %v1369
      %v1482 = vsub.f32 %v1034, %v1369
      %v1483 = vsub.f32 %v1035, %v1369
      %v1484 = vsub.f32 %v1036, %v1370
      %v1485 = vsub.f32 %v1037, %v1370
      %v1486 = vsub.f32 %v1038, %v1370
      %v1487 = vsub.f32 %v1039, %v1370
      %v1488 = vsub.f32 %v1040, %v1371
      %v1489 = vsub.f32 %v1041, %v1371
      %v1490 = vsub.f32 %v1042, %v1371
      %v1491 = vsub.f32 %v1043, %v1371
      %v1492 = vsub.f32 %v1044, %v1372
      %v1493 = vsub.f32 %v1045, %v1372
      %v1494 = vsub.f32 %v1046, %v1372
      %v1495 = vsub.f32 %v1047, %v1372
      %v1496 = vsub.f32 %v1048, %v1373
      %v1497 = vsub.f32 %v1049, %v1373
      %v1498 = vsub.f32 %v1050, %v1373
      %v1499 = vsub.f32 %v1051, %v1373
      %v1500 = vsub.f32 %v1052, %v1374
      %v1501 = vsub.f32 %v1053, %v1374
      %v1502 = vsub.f32 %v1054, %v1374
      %v1503 = vsub.f32 %v1055, %v1374
      %v1504 = vsub.f32 %v1056, %v1375
      %v1505 = vsub.f32 %v1057, %v1375
      %v1506 = vsub.f32 %v1058, %v1375
      %v1507 = vsub.f32 %v1059, %v1375
      %v1508 = vsub.f32 %v1060, %v1376
      %v1509 = vsub.f32 %v1061, %v1376
      %v1510 = vsub.f32 %v1062, %v1376
      %v1511 = vsub.f32 %v1063, %v1376
      %v1512 = vsub.f32 %v1064, %v1377
      %v1513 = vsub.f32 %v1065, %v1377
      %v1514 = vsub.f32 %v1066, %v1377
      %v1515 = vsub.f32 %v1067, %v1377
      %v1516 = vsub.f32 %v1068, %v1378
      %v1517 = vsub.f32 %v1069, %v1378
      %v1518 = vsub.f32 %v1070, %v1378
      %v1519 = vsub.f32 %v1071, %v1378
      %v1520 = vsub.f32 %v1072, %v1379
      %v1521 = vsub.f32 %v1073, %v1379
      %v1522 = vsub.f32 %v1074, %v1379
      %v1523 = vsub.f32 %v1075, %v1379
      %v1524 = vmul.f32 %v1460, %v1444
      %v1525 = vmul.f32 %v1461, %v1444
      %v1526 = vmul.f32 %v1462, %v1444
      %v1527 = vmul.f32 %v1463, %v1444
      %v1528 = vmul.f32 %v1464, %v1445
      %v1529 = vmul.f32 %v1465, %v1445
      %v1530 = vmul.f32 %v1466, %v1445
      %v1531 = vmul.f32 %v1467, %v1445
      %v1532 = vmul.f32 %v1468, %v1446
      %v1533 = vmul.f32 %v1469, %v1446
      %v1534 = vmul.f32 %v1470, %v1446
      %v1535 = vmul.f32 %v1471, %v1446
      %v1536 = vmul.f32 %v1472, %v1447
      %v1537 = vmul.f32 %v1473, %v1447
      %v1538 = vmul.f32 %v1474, %v1447
      %v1539 = vmul.f32 %v1475, %v1447
      %v1540 = vmul.f32 %v1476, %v1448
      %v1541 = vmul.f32 %v1477, %v1448
      %v1542 = vmul.f32 %v1478, %v1448
      %v1543 = vmul.f32 %v1479, %v1448
      %v1544 = vmul.f32 %v1480, %v1449
      %v1545 = vmul.f32 %v1481, %v1449
      %v1546 = vmul.f32 %v1482, %v1449
      %v1547 = vmul.f32 %v1483, %v1449
      %v1548 = vmul.f32 %v1484, %v1450
      %v1549 = vmul.f32 %v1485, %v1450
      %v1550 = vmul.f32 %v1486, %v1450
      %v1551 = vmul.f32 %v1487, %v1450
      %v1552 = vmul.f32 %v1488, %v1451
      %v1553 = vmul.f32 %v1489, %v1451
      %v1554 = vmul.f32 %v1490, %v1451
      %v1555 = vmul.f32 %v1491, %v1451
      %v1556 = vmul.f32 %v1492, %v1452
      %v1557 = vmul.f32 %v1493, %v1452
      %v1558 = vmul.f32 %v1494, %v1452
      %v1559 = vmul.f32 %v1495, %v1452
      %v1560 = vmul.f32 %v1496, %v1453
      %v1561 = vmul.f32 %v1497, %v1453
      %v1562 = vmul.f32 %v1498, %v1453
      %v1563 = vmul.f32 %v1499, %v1453
      %v1564 = vmul.f32 %v1500, %v1454
      %v1565 = vmul.f32 %v1501, %v1454
      %v1566 = vmul.f32 %v1502, %v1454
      %v1567 = vmul.f32 %v1503, %v1454
      %v1568 = vmul.f32 %v1504, %v1455
      %v1569 = vmul.f32 %v1505, %v1455
      %v1570 = vmul.f32 %v1506, %v1455
      %v1571 = vmul.f32 %v1507, %v1455
      %v1572 = vmul.f32 %v1508, %v1456
      %v1573 = vmul.f32 %v1509, %v1456
      %v1574 = vmul.f32 %v1510, %v1456
      %v1575 = vmul.f32 %v1511, %v1456
      %v1576 = vmul.f32 %v1512, %v1457
      %v1577 = vmul.f32 %v1513, %v1457
      %v1578 = vmul.f32 %v1514, %v1457
      %v1579 = vmul.f32 %v1515, %v1457
      %v1580 = vmul.f32 %v1516, %v1458
      %v1581 = vmul.f32 %v1517, %v1458
      %v1582 = vmul.f32 %v1518, %v1458
      %v1583 = vmul.f32 %v1519, %v1458
      %v1584 = vmul.f32 %v1520, %v1459
      %v1585 = vmul.f32 %v1521, %v1459
      %v1586 = vmul.f32 %v1522, %v1459
      %v1587 = vmul.f32 %v1523, %v1459
      %v1589 = vlaneseq
      %v1590 = vshrl.u32 %v1589, 7
      %v1591 = vsub.s32 0, %v1590
      %v1592 = vrot.slane %v308, %v1591
      %v1593 = vlaneseq
      %v1594 = vshrl.u32 %v1593, 7
      %v1595 = vsub.s32 1, %v1594
      %v1596 = vrot.slane %v308, %v1595
      %v1597 = vlaneseq
      %v1598 = vshrl.u32 %v1597, 7
      %v1599 = vsub.s32 2, %v1598
      %v1600 = vrot.slane %v308, %v1599
      %v1601 = vlaneseq
      %v1602 = vshrl.u32 %v1601, 7
      %v1603 = vsub.s32 3, %v1602
      %v1604 = vrot.slane %v308, %v1603
      %v1609 = vmul.f32 %v1524, %v1592
      %v1610 = vmul.f32 %v1525, %v1596
      %v1611 = vmul.f32 %v1526, %v1600
      %v1612 = vmul.f32 %v1527, %v1604
      %v1613 = vmul.f32 %v1528, %v1592
      %v1614 = vmul.f32 %v1529, %v1596
      %v1615 = vmul.f32 %v1530, %v1600
      %v1616 = vmul.f32 %v1531, %v1604
      %v1617 = vmul.f32 %v1532, %v1592
      %v1618 = vmul.f32 %v1533, %v1596
      %v1619 = vmul.f32 %v1534, %v1600
      %v1620 = vmul.f32 %v1535, %v1604
      %v1621 = vmul.f32 %v1536, %v1592
      %v1622 = vmul.f32 %v1537, %v1596
      %v1623 = vmul.f32 %v1538, %v1600
      %v1624 = vmul.f32 %v1539, %v1604
      %v1625 = vmul.f32 %v1540, %v1592
      %v1626 = vmul.f32 %v1541, %v1596
      %v1627 = vmul.f32 %v1542, %v1600
      %v1628 = vmul.f32 %v1543, %v1604
      %v1629 = vmul.f32 %v1544, %v1592
      %v1630 = vmul.f32 %v1545, %v1596
      %v1631 = vmul.f32 %v1546, %v1600
      %v1632 = vmul.f32 %v1547, %v1604
      %v1633 = vmul.f32 %v1548, %v1592
      %v1634 = vmul.f32 %v1549, %v1596
      %v1635 = vmul.f32 %v1550, %v1600
      %v1636 = vmul.f32 %v1551, %v1604
      %v1637 = vmul.f32 %v1552, %v1592
      %v1638 = vmul.f32 %v1553, %v1596
      %v1639 = vmul.f32 %v1554, %v1600
      %v1640 = vmul.f32 %v1555, %v1604
      %v1641 = vmul.f32 %v1556, %v1592
      %v1642 = vmul.f32 %v1557, %v1596
      %v1643 = vmul.f32 %v1558, %v1600
      %v1644 = vmul.f32 %v1559, %v1604
      %v1645 = vmul.f32 %v1560, %v1592
      %v1646 = vmul.f32 %v1561, %v1596
      %v1647 = vmul.f32 %v1562, %v1600
      %v1648 = vmul.f32 %v1563, %v1604
      %v1649 = vmul.f32 %v1564, %v1592
      %v1650 = vmul.f32 %v1565, %v1596
      %v1651 = vmul.f32 %v1566, %v1600
      %v1652 = vmul.f32 %v1567, %v1604
      %v1653 = vmul.f32 %v1568, %v1592
      %v1654 = vmul.f32 %v1569, %v1596
      %v1655 = vmul.f32 %v1570, %v1600
      %v1656 = vmul.f32 %v1571, %v1604
      %v1657 = vmul.f32 %v1572, %v1592
      %v1658 = vmul.f32 %v1573, %v1596
      %v1659 = vmul.f32 %v1574, %v1600
      %v1660 = vmul.f32 %v1575, %v1604
      %v1661 = vmul.f32 %v1576, %v1592
      %v1662 = vmul.f32 %v1577, %v1596
      %v1663 = vmul.f32 %v1578, %v1600
      %v1664 = vmul.f32 %v1579, %v1604
      %v1665 = vmul.f32 %v1580, %v1592
      %v1666 = vmul.f32 %v1581, %v1596
      %v1667 = vmul.f32 %v1582, %v1600
      %v1668 = vmul.f32 %v1583, %v1604
      %v1669 = vmul.f32 %v1584, %v1592
      %v1670 = vmul.f32 %v1585, %v1596
      %v1671 = vmul.f32 %v1586, %v1600
      %v1672 = vmul.f32 %v1587, %v1604
      %v1674 = vlaneseq
      %v1675 = vshrl.u32 %v1674, 7
      %v1676 = vsub.s32 0, %v1675
      %v1677 = vrot.slane %v310, %v1676
      %v1678 = vlaneseq
      %v1679 = vshrl.u32 %v1678, 7
      %v1680 = vsub.s32 1, %v1679
      %v1681 = vrot.slane %v310, %v1680
      %v1682 = vlaneseq
      %v1683 = vshrl.u32 %v1682, 7
      %v1684 = vsub.s32 2, %v1683
      %v1685 = vrot.slane %v310, %v1684
      %v1686 = vlaneseq
      %v1687 = vshrl.u32 %v1686, 7
      %v1688 = vsub.s32 3, %v1687
      %v1689 = vrot.slane %v310, %v1688
      %v1694 = vadd.f32 %v1609, %v1677
      %v1695 = vadd.f32 %v1610, %v1681
      %v1696 = vadd.f32 %v1611, %v1685
      %v1697 = vadd.f32 %v1612, %v1689
      %v1698 = vadd.f32 %v1613, %v1677
      %v1699 = vadd.f32 %v1614, %v1681
      %v1700 = vadd.f32 %v1615, %v1685
      %v1701 = vadd.f32 %v1616, %v1689
      %v1702 = vadd.f32 %v1617, %v1677
      %v1703 = vadd.f32 %v1618, %v1681
      %v1704 = vadd.f32 %v1619, %v1685
      %v1705 = vadd.f32 %v1620, %v1689
      %v1706 = vadd.f32 %v1621, %v1677
      %v1707 = vadd.f32 %v1622, %v1681
      %v1708 = vadd.f32 %v1623, %v1685
      %v1709 = vadd.f32 %v1624, %v1689
      %v1710 = vadd.f32 %v1625, %v1677
      %v1711 = vadd.f32 %v1626, %v1681
      %v1712 = vadd.f32 %v1627, %v1685
      %v1713 = vadd.f32 %v1628, %v1689
      %v1714 = vadd.f32 %v1629, %v1677
      %v1715 = vadd.f32 %v1630, %v1681
      %v1716 = vadd.f32 %v1631, %v1685
      %v1717 = vadd.f32 %v1632, %v1689
      %v1718 = vadd.f32 %v1633, %v1677
      %v1719 = vadd.f32 %v1634, %v1681
      %v1720 = vadd.f32 %v1635, %v1685
      %v1721 = vadd.f32 %v1636, %v1689
      %v1722 = vadd.f32 %v1637, %v1677
      %v1723 = vadd.f32 %v1638, %v1681
      %v1724 = vadd.f32 %v1639, %v1685
      %v1725 = vadd.f32 %v1640, %v1689
      %v1726 = vadd.f32 %v1641, %v1677
      %v1727 = vadd.f32 %v1642, %v1681
      %v1728 = vadd.f32 %v1643, %v1685
      %v1729 = vadd.f32 %v1644, %v1689
      %v1730 = vadd.f32 %v1645, %v1677
      %v1731 = vadd.f32 %v1646, %v1681
      %v1732 = vadd.f32 %v1647, %v1685
      %v1733 = vadd.f32 %v1648, %v1689
      %v1734 = vadd.f32 %v1649, %v1677
      %v1735 = vadd.f32 %v1650, %v1681
      %v1736 = vadd.f32 %v1651, %v1685
      %v1737 = vadd.f32 %v1652, %v1689
      %v1738 = vadd.f32 %v1653, %v1677
      %v1739 = vadd.f32 %v1654, %v1681
      %v1740 = vadd.f32 %v1655, %v1685
      %v1741 = vadd.f32 %v1656, %v1689
      %v1742 = vadd.f32 %v1657, %v1677
      %v1743 = vadd.f32 %v1658, %v1681
      %v1744 = vadd.f32 %v1659, %v1685
      %v1745 = vadd.f32 %v1660, %v1689
      %v1746 = vadd.f32 %v1661, %v1677
      %v1747 = vadd.f32 %v1662, %v1681
      %v1748 = vadd.f32 %v1663, %v1685
      %v1749 = vadd.f32 %v1664, %v1689
      %v1750 = vadd.f32 %v1665, %v1677
      %v1751 = vadd.f32 %v1666, %v1681
      %v1752 = vadd.f32 %v1667, %v1685
      %v1753 = vadd.f32 %v1668, %v1689
      %v1754 = vadd.f32 %v1669, %v1677
      %v1755 = vadd.f32 %v1670, %v1681
      %v1756 = vadd.f32 %v1671, %v1685
      %v1757 = vadd.f32 %v1672, %v1689
      %v1758 = vmax.f32 %v1694, 0.0
      %v1759 = vmax.f32 %v1695, 0.0
      %v1760 = vmax.f32 %v1696, 0.0
      %v1761 = vmax.f32 %v1697, 0.0
      %v1762 = vmax.f32 %v1698, 0.0
      %v1763 = vmax.f32 %v1699, 0.0
      %v1764 = vmax.f32 %v1700, 0.0
      %v1765 = vmax.f32 %v1701, 0.0
      %v1766 = vmax.f32 %v1702, 0.0
      %v1767 = vmax.f32 %v1703, 0.0
      %v1768 = vmax.f32 %v1704, 0.0
      %v1769 = vmax.f32 %v1705, 0.0
      %v1770 = vmax.f32 %v1706, 0.0
      %v1771 = vmax.f32 %v1707, 0.0
      %v1772 = vmax.f32 %v1708, 0.0
      %v1773 = vmax.f32 %v1709, 0.0
      %v1774 = vmax.f32 %v1710, 0.0
      %v1775 = vmax.f32 %v1711, 0.0
      %v1776 = vmax.f32 %v1712, 0.0
      %v1777 = vmax.f32 %v1713, 0.0
      %v1778 = vmax.f32 %v1714, 0.0
      %v1779 = vmax.f32 %v1715, 0.0
      %v1780 = vmax.f32 %v1716, 0.0
      %v1781 = vmax.f32 %v1717, 0.0
      %v1782 = vmax.f32 %v1718, 0.0
      %v1783 = vmax.f32 %v1719, 0.0
      %v1784 = vmax.f32 %v1720, 0.0
      %v1785 = vmax.f32 %v1721, 0.0
      %v1786 = vmax.f32 %v1722, 0.0
      %v1787 = vmax.f32 %v1723, 0.0
      %v1788 = vmax.f32 %v1724, 0.0
      %v1789 = vmax.f32 %v1725, 0.0
      %v1790 = vmax.f32 %v1726, 0.0
      %v1791 = vmax.f32 %v1727, 0.0
      %v1792 = vmax.f32 %v1728, 0.0
      %v1793 = vmax.f32 %v1729, 0.0
      %v1794 = vmax.f32 %v1730, 0.0
      %v1795 = vmax.f32 %v1731, 0.0
      %v1796 = vmax.f32 %v1732, 0.0
      %v1797 = vmax.f32 %v1733, 0.0
      %v1798 = vmax.f32 %v1734, 0.0
      %v1799 = vmax.f32 %v1735, 0.0
      %v1800 = vmax.f32 %v1736, 0.0
      %v1801 = vmax.f32 %v1737, 0.0
      %v1802 = vmax.f32 %v1738, 0.0
      %v1803 = vmax.f32 %v1739, 0.0
      %v1804 = vmax.f32 %v1740, 0.0
      %v1805 = vmax.f32 %v1741, 0.0
      %v1806 = vmax.f32 %v1742, 0.0
      %v1807 = vmax.f32 %v1743, 0.0
      %v1808 = vmax.f32 %v1744, 0.0
      %v1809 = vmax.f32 %v1745, 0.0
      %v1810 = vmax.f32 %v1746, 0.0
      %v1811 = vmax.f32 %v1747, 0.0
      %v1812 = vmax.f32 %v1748, 0.0
      %v1813 = vmax.f32 %v1749, 0.0
      %v1814 = vmax.f32 %v1750, 0.0
      %v1815 = vmax.f32 %v1751, 0.0
      %v1816 = vmax.f32 %v1752, 0.0
      %v1817 = vmax.f32 %v1753, 0.0
      %v1818 = vmax.f32 %v1754, 0.0
      %v1819 = vmax.f32 %v1755, 0.0
      %v1820 = vmax.f32 %v1756, 0.0
      %v1821 = vmax.f32 %v1757, 0.0
      %v1822 = vpack.c.bf16 %v1762, %v1758
      %v1823 = vpack.c.bf16 %v1763, %v1759
      %v1824 = vpack.c.bf16 %v1764, %v1760
      %v1825 = vpack.c.bf16 %v1765, %v1761
      %v1826 = vpack.c.bf16 %v1770, %v1766
      %v1827 = vpack.c.bf16 %v1771, %v1767
      %v1828 = vpack.c.bf16 %v1772, %v1768
      %v1829 = vpack.c.bf16 %v1773, %v1769
      %v1830 = vpack.c.bf16 %v1778, %v1774
      %v1831 = vpack.c.bf16 %v1779, %v1775
      %v1832 = vpack.c.bf16 %v1780, %v1776
      %v1833 = vpack.c.bf16 %v1781, %v1777
      %v1834 = vpack.c.bf16 %v1786, %v1782
      %v1835 = vpack.c.bf16 %v1787, %v1783
      %v1836 = vpack.c.bf16 %v1788, %v1784
      %v1837 = vpack.c.bf16 %v1789, %v1785
      %v1838 = vpack.c.bf16 %v1794, %v1790
      %v1839 = vpack.c.bf16 %v1795, %v1791
      %v1840 = vpack.c.bf16 %v1796, %v1792
      %v1841 = vpack.c.bf16 %v1797, %v1793
      %v1842 = vpack.c.bf16 %v1802, %v1798
      %v1843 = vpack.c.bf16 %v1803, %v1799
      %v1844 = vpack.c.bf16 %v1804, %v1800
      %v1845 = vpack.c.bf16 %v1805, %v1801
      %v1846 = vpack.c.bf16 %v1810, %v1806
      %v1847 = vpack.c.bf16 %v1811, %v1807
      %v1848 = vpack.c.bf16 %v1812, %v1808
      %v1849 = vpack.c.bf16 %v1813, %v1809
      %v1850 = vpack.c.bf16 %v1818, %v1814
      %v1851 = vpack.c.bf16 %v1819, %v1815
      %v1852 = vpack.c.bf16 %v1820, %v1816
      %v1853 = vpack.c.bf16 %v1821, %v1817
      %v1854 = vld [vmem:[%s3] sm:$0xff]
      %v1855 = vld [vmem:[%s3 + $0x8] sm:$0xf]
      %v1856 = vld [vmem:[%s3 + $0xc] sm:$0xff]
      %v1857 = vld [vmem:[%s3 + $0x14] sm:$0xf]
      %v1858 = vld [vmem:[%s3 + $0x18] sm:$0xff]
      %v1859 = vld [vmem:[%s3 + $0x20] sm:$0xf]
      %v1860 = vld [vmem:[%s3 + $0x24] sm:$0xff]
      %v1861 = vld [vmem:[%s3 + $0x2c] sm:$0xf]
      %v1862 = vld [vmem:[%s3 + $0x30] sm:$0xff]
      %v1863 = vld [vmem:[%s3 + $0x38] sm:$0xf]
      %v1864 = vld [vmem:[%s3 + $0x3c] sm:$0xff]
      %v1865 = vld [vmem:[%s3 + $0x44] sm:$0xf]
      %v1866 = vld [vmem:[%s3 + $0x48] sm:$0xff]
      %v1867 = vld [vmem:[%s3 + $0x50] sm:$0xf]
      %v1868 = vld [vmem:[%s3 + $0x54] sm:$0xff]
      %v1869 = vld [vmem:[%s3 + $0x5c] sm:$0xf]
      %v1870 = vld [vmem:[%s3 + $0x60] sm:$0xff]
      %v1871 = vld [vmem:[%s3 + $0x68] sm:$0xf]
      %v1872 = vld [vmem:[%s3 + $0x6c] sm:$0xff]
      %v1873 = vld [vmem:[%s3 + $0x74] sm:$0xf]
      %v1874 = vld [vmem:[%s3 + $0x78] sm:$0xff]
      %v1875 = vld [vmem:[%s3 + $0x80] sm:$0xf]
      %v1876 = vld [vmem:[%s3 + $0x84] sm:$0xff]
      %v1877 = vld [vmem:[%s3 + $0x8c] sm:$0xf]
      %v1878 = vld [vmem:[%s3 + $0x90] sm:$0xff]
      %v1879 = vld [vmem:[%s3 + $0x98] sm:$0xf]
      %v1880 = vld [vmem:[%s3 + $0x9c] sm:$0xff]
      %v1881 = vld [vmem:[%s3 + $0xa4] sm:$0xf]
      %v1882 = vld [vmem:[%s3 + $0xa8] sm:$0xff]
      %v1883 = vld [vmem:[%s3 + $0xb0] sm:$0xf]
      %v1884 = vld [vmem:[%s3 + $0xb4] sm:$0xff]
      %v1885 = vld [vmem:[%s3 + $0xbc] sm:$0xf]
      %v1886 = vld [vmem:[%s3 + $0xc0] sm:$0xff]
      %v1887 = vld [vmem:[%s3 + $0xc8] sm:$0xf]
      %v1888 = vld [vmem:[%s3 + $0xcc] sm:$0xff]
      %v1889 = vld [vmem:[%s3 + $0xd4] sm:$0xf]
      %v1890 = vld [vmem:[%s3 + $0xd8] sm:$0xff]
      %v1891 = vld [vmem:[%s3 + $0xe0] sm:$0xf]
      %v1892 = vld [vmem:[%s3 + $0xe4] sm:$0xff]
      %v1893 = vld [vmem:[%s3 + $0xec] sm:$0xf]
      %v1894 = vld [vmem:[%s3 + $0xf0] sm:$0xff]
      %v1895 = vld [vmem:[%s3 + $0xf8] sm:$0xf]
      %v1896 = vld [vmem:[%s3 + $0xfc] sm:$0xff]
      %v1897 = vld [vmem:[%s3 + $0x104] sm:$0xf]
      %v1898 = vld [vmem:[%s3 + $0x108] sm:$0xff]
      %v1899 = vld [vmem:[%s3 + $0x110] sm:$0xf]
      %v1900 = vld [vmem:[%s3 + $0x114] sm:$0xff]
      %v1901 = vld [vmem:[%s3 + $0x11c] sm:$0xf]
      %v1902 = vld [vmem:[%s3 + $0x120] sm:$0xff]
      %v1903 = vld [vmem:[%s3 + $0x128] sm:$0xf]
      %v1904 = vld [vmem:[%s3 + $0x12c] sm:$0xff]
      %v1905 = vld [vmem:[%s3 + $0x134] sm:$0xf]
      %v1906 = vld [vmem:[%s3 + $0x138] sm:$0xff]
      %v1907 = vld [vmem:[%s3 + $0x140] sm:$0xf]
      %v1908 = vld [vmem:[%s3 + $0x144] sm:$0xff]
      %v1909 = vld [vmem:[%s3 + $0x14c] sm:$0xf]
      %v1910 = vld [vmem:[%s3 + $0x150] sm:$0xff]
      %v1911 = vld [vmem:[%s3 + $0x158] sm:$0xf]
      %v1912 = vld [vmem:[%s3 + $0x15c] sm:$0xff]
      %v1913 = vld [vmem:[%s3 + $0x164] sm:$0xf]
      %v1914 = vld [vmem:[%s3 + $0x168] sm:$0xff]
      %v1915 = vld [vmem:[%s3 + $0x170] sm:$0xf]
      %v1916 = vld [vmem:[%s3 + $0x174] sm:$0xff]
      %v1917 = vld [vmem:[%s3 + $0x17c] sm:$0xf]
      %v1918 = vld [vmem:[%s3 + $0x180] sm:$0xff]
      %v1919 = vld [vmem:[%s3 + $0x188] sm:$0xf]
      %v1920 = vld [vmem:[%s3 + $0x18c] sm:$0xff]
      %v1921 = vld [vmem:[%s3 + $0x194] sm:$0xf]
      %v1922 = vld [vmem:[%s3 + $0x198] sm:$0xff]
      %v1923 = vld [vmem:[%s3 + $0x1a0] sm:$0xf]
      %v1924 = vld [vmem:[%s3 + $0x1a4] sm:$0xff]
      %v1925 = vld [vmem:[%s3 + $0x1ac] sm:$0xf]
      %v1926 = vld [vmem:[%s3 + $0x1b0] sm:$0xff]
      %v1927 = vld [vmem:[%s3 + $0x1b8] sm:$0xf]
      %v1928 = vld [vmem:[%s3 + $0x1bc] sm:$0xff]
      %v1929 = vld [vmem:[%s3 + $0x1c4] sm:$0xf]
      %v1930 = vld [vmem:[%s3 + $0x1c8] sm:$0xff]
      %v1931 = vld [vmem:[%s3 + $0x1d0] sm:$0xf]
      %v1932 = vld [vmem:[%s3 + $0x1d4] sm:$0xff]
      %v1933 = vld [vmem:[%s3 + $0x1dc] sm:$0xf]
      %v1934 = vld [vmem:[%s3 + $0x1e0] sm:$0xff]
      %v1935 = vld [vmem:[%s3 + $0x1e8] sm:$0xf]
      %v1936 = vld [vmem:[%s3 + $0x1ec] sm:$0xff]
      %v1937 = vld [vmem:[%s3 + $0x1f4] sm:$0xf]
      %v1938 = vld [vmem:[%s3 + $0x1f8] sm:$0xff]
      %v1939 = vld [vmem:[%s3 + $0x200] sm:$0xf]
      %v1940 = vld [vmem:[%s3 + $0x204] sm:$0xff]
      %v1941 = vld [vmem:[%s3 + $0x20c] sm:$0xf]
      %v1942 = vld [vmem:[%s3 + $0x210] sm:$0xff]
      %v1943 = vld [vmem:[%s3 + $0x218] sm:$0xf]
      %v1944 = vld [vmem:[%s3 + $0x21c] sm:$0xff]
      %v1945 = vld [vmem:[%s3 + $0x224] sm:$0xf]
      %v1946 = vld [vmem:[%s3 + $0x228] sm:$0xff]
      %v1947 = vld [vmem:[%s3 + $0x230] sm:$0xf]
      %v1948 = vld [vmem:[%s3 + $0x234] sm:$0xff]
      %v1949 = vld [vmem:[%s3 + $0x23c] sm:$0xf]
      %v1950 = vld [vmem:[%s3 + $0x240] sm:$0xff]
      %v1951 = vld [vmem:[%s3 + $0x248] sm:$0xf]
      %v1952 = vld [vmem:[%s3 + $0x24c] sm:$0xff]
      %v1953 = vld [vmem:[%s3 + $0x254] sm:$0xf]
      %v1954 = vld [vmem:[%s3 + $0x258] sm:$0xff]
      %v1955 = vld [vmem:[%s3 + $0x260] sm:$0xf]
      %v1956 = vld [vmem:[%s3 + $0x264] sm:$0xff]
      %v1957 = vld [vmem:[%s3 + $0x26c] sm:$0xf]
      %v1958 = vld [vmem:[%s3 + $0x270] sm:$0xff]
      %v1959 = vld [vmem:[%s3 + $0x278] sm:$0xf]
      %v1960 = vld [vmem:[%s3 + $0x27c] sm:$0xff]
      %v1961 = vld [vmem:[%s3 + $0x284] sm:$0xf]
      %v1962 = vld [vmem:[%s3 + $0x288] sm:$0xff]
      %v1963 = vld [vmem:[%s3 + $0x290] sm:$0xf]
      %v1964 = vld [vmem:[%s3 + $0x294] sm:$0xff]
      %v1965 = vld [vmem:[%s3 + $0x29c] sm:$0xf]
      %v1966 = vld [vmem:[%s3 + $0x2a0] sm:$0xff]
      %v1967 = vld [vmem:[%s3 + $0x2a8] sm:$0xf]
      %v1968 = vld [vmem:[%s3 + $0x2ac] sm:$0xff]
      %v1969 = vld [vmem:[%s3 + $0x2b4] sm:$0xf]
      %v1970 = vld [vmem:[%s3 + $0x2b8] sm:$0xff]
      %v1971 = vld [vmem:[%s3 + $0x2c0] sm:$0xf]
      %v1972 = vld [vmem:[%s3 + $0x2c4] sm:$0xff]
      %v1973 = vld [vmem:[%s3 + $0x2cc] sm:$0xf]
      %v1974 = vld [vmem:[%s3 + $0x2d0] sm:$0xff]
      %v1975 = vld [vmem:[%s3 + $0x2d8] sm:$0xf]
      %v1976 = vld [vmem:[%s3 + $0x2dc] sm:$0xff]
      %v1977 = vld [vmem:[%s3 + $0x2e4] sm:$0xf]
      %v1978 = vld [vmem:[%s3 + $0x2e8] sm:$0xff]
      %v1979 = vld [vmem:[%s3 + $0x2f0] sm:$0xf]
      %v1980 = vld [vmem:[%s3 + $0x2f4] sm:$0xff]
      %v1981 = vld [vmem:[%s3 + $0x2fc] sm:$0xf]
      %v1983 = vlaneseq
      %v1984 = vshrl.u32 %v1983, 7
      %v1985 = vsub.s32 0, %v1984
      %v1986 = vrot.slane %v311, %v1985
      %v1987 = vlaneseq
      %v1988 = vshrl.u32 %v1987, 7
      %v1989 = vsub.s32 1, %v1988
      %v1990 = vrot.slane %v311, %v1989
      %v1991 = vlaneseq
      %v1992 = vshrl.u32 %v1991, 7
      %v1993 = vsub.s32 2, %v1992
      %v1994 = vrot.slane %v311, %v1993
      %v2126 = vunpack.c.l.b16 %v1854
      %v2127 = vunpack.c.h.b16 %v1854
      %v2128 = vunpack.c.l.b16 %v1855
      %v2129 = vunpack.c.l.b16 %v1856
      %v2130 = vunpack.c.h.b16 %v1856
      %v2131 = vunpack.c.l.b16 %v1857
      %v2132 = vunpack.c.l.b16 %v1858
      %v2133 = vunpack.c.h.b16 %v1858
      %v2134 = vunpack.c.l.b16 %v1859
      %v2135 = vunpack.c.l.b16 %v1860
      %v2136 = vunpack.c.h.b16 %v1860
      %v2137 = vunpack.c.l.b16 %v1861
      %v2138 = vunpack.c.l.b16 %v1862
      %v2139 = vunpack.c.h.b16 %v1862
      %v2140 = vunpack.c.l.b16 %v1863
      %v2141 = vunpack.c.l.b16 %v1864
      %v2142 = vunpack.c.h.b16 %v1864
      %v2143 = vunpack.c.l.b16 %v1865
      %v2144 = vunpack.c.l.b16 %v1866
      %v2145 = vunpack.c.h.b16 %v1866
      %v2146 = vunpack.c.l.b16 %v1867
      %v2147 = vunpack.c.l.b16 %v1868
      %v2148 = vunpack.c.h.b16 %v1868
      %v2149 = vunpack.c.l.b16 %v1869
      %v2150 = vunpack.c.l.b16 %v1870
      %v2151 = vunpack.c.h.b16 %v1870
      %v2152 = vunpack.c.l.b16 %v1871
      %v2153 = vunpack.c.l.b16 %v1872
      %v2154 = vunpack.c.h.b16 %v1872
      %v2155 = vunpack.c.l.b16 %v1873
      %v2156 = vunpack.c.l.b16 %v1874
      %v2157 = vunpack.c.h.b16 %v1874
      %v2158 = vunpack.c.l.b16 %v1875
      %v2159 = vunpack.c.l.b16 %v1876
      %v2160 = vunpack.c.h.b16 %v1876
      %v2161 = vunpack.c.l.b16 %v1877
      %v2162 = vunpack.c.l.b16 %v1878
      %v2163 = vunpack.c.h.b16 %v1878
      %v2164 = vunpack.c.l.b16 %v1879
      %v2165 = vunpack.c.l.b16 %v1880
      %v2166 = vunpack.c.h.b16 %v1880
      %v2167 = vunpack.c.l.b16 %v1881
      %v2168 = vunpack.c.l.b16 %v1882
      %v2169 = vunpack.c.h.b16 %v1882
      %v2170 = vunpack.c.l.b16 %v1883
      %v2171 = vunpack.c.l.b16 %v1884
      %v2172 = vunpack.c.h.b16 %v1884
      %v2173 = vunpack.c.l.b16 %v1885
      %v2174 = vunpack.c.l.b16 %v1886
      %v2175 = vunpack.c.h.b16 %v1886
      %v2176 = vunpack.c.l.b16 %v1887
      %v2177 = vunpack.c.l.b16 %v1888
      %v2178 = vunpack.c.h.b16 %v1888
      %v2179 = vunpack.c.l.b16 %v1889
      %v2180 = vunpack.c.l.b16 %v1890
      %v2181 = vunpack.c.h.b16 %v1890
      %v2182 = vunpack.c.l.b16 %v1891
      %v2183 = vunpack.c.l.b16 %v1892
      %v2184 = vunpack.c.h.b16 %v1892
      %v2185 = vunpack.c.l.b16 %v1893
      %v2186 = vunpack.c.l.b16 %v1894
      %v2187 = vunpack.c.h.b16 %v1894
      %v2188 = vunpack.c.l.b16 %v1895
      %v2189 = vunpack.c.l.b16 %v1896
      %v2190 = vunpack.c.h.b16 %v1896
      %v2191 = vunpack.c.l.b16 %v1897
      %v2192 = vunpack.c.l.b16 %v1898
      %v2193 = vunpack.c.h.b16 %v1898
      %v2194 = vunpack.c.l.b16 %v1899
      %v2195 = vunpack.c.l.b16 %v1900
      %v2196 = vunpack.c.h.b16 %v1900
      %v2197 = vunpack.c.l.b16 %v1901
      %v2198 = vunpack.c.l.b16 %v1902
      %v2199 = vunpack.c.h.b16 %v1902
      %v2200 = vunpack.c.l.b16 %v1903
      %v2201 = vunpack.c.l.b16 %v1904
      %v2202 = vunpack.c.h.b16 %v1904
      %v2203 = vunpack.c.l.b16 %v1905
      %v2204 = vunpack.c.l.b16 %v1906
      %v2205 = vunpack.c.h.b16 %v1906
      %v2206 = vunpack.c.l.b16 %v1907
      %v2207 = vunpack.c.l.b16 %v1908
      %v2208 = vunpack.c.h.b16 %v1908
      %v2209 = vunpack.c.l.b16 %v1909
      %v2210 = vunpack.c.l.b16 %v1910
      %v2211 = vunpack.c.h.b16 %v1910
      %v2212 = vunpack.c.l.b16 %v1911
      %v2213 = vunpack.c.l.b16 %v1912
      %v2214 = vunpack.c.h.b16 %v1912
      %v2215 = vunpack.c.l.b16 %v1913
      %v2216 = vunpack.c.l.b16 %v1914
      %v2217 = vunpack.c.h.b16 %v1914
      %v2218 = vunpack.c.l.b16 %v1915
      %v2219 = vunpack.c.l.b16 %v1916
      %v2220 = vunpack.c.h.b16 %v1916
      %v2221 = vunpack.c.l.b16 %v1917
      %v2222 = vunpack.c.l.b16 %v1918
      %v2223 = vunpack.c.h.b16 %v1918
      %v2224 = vunpack.c.l.b16 %v1919
      %v2225 = vunpack.c.l.b16 %v1920
      %v2226 = vunpack.c.h.b16 %v1920
      %v2227 = vunpack.c.l.b16 %v1921
      %v2228 = vunpack.c.l.b16 %v1922
      %v2229 = vunpack.c.h.b16 %v1922
      %v2230 = vunpack.c.l.b16 %v1923
      %v2231 = vunpack.c.l.b16 %v1924
      %v2232 = vunpack.c.h.b16 %v1924
      %v2233 = vunpack.c.l.b16 %v1925
      %v2234 = vunpack.c.l.b16 %v1926
      %v2235 = vunpack.c.h.b16 %v1926
      %v2236 = vunpack.c.l.b16 %v1927
      %v2237 = vunpack.c.l.b16 %v1928
      %v2238 = vunpack.c.h.b16 %v1928
      %v2239 = vunpack.c.l.b16 %v1929
      %v2240 = vunpack.c.l.b16 %v1930
      %v2241 = vunpack.c.h.b16 %v1930
      %v2242 = vunpack.c.l.b16 %v1931
      %v2243 = vunpack.c.l.b16 %v1932
      %v2244 = vunpack.c.h.b16 %v1932
      %v2245 = vunpack.c.l.b16 %v1933
      %v2246 = vunpack.c.l.b16 %v1934
      %v2247 = vunpack.c.h.b16 %v1934
      %v2248 = vunpack.c.l.b16 %v1935
      %v2249 = vunpack.c.l.b16 %v1936
      %v2250 = vunpack.c.h.b16 %v1936
      %v2251 = vunpack.c.l.b16 %v1937
      %v2252 = vunpack.c.l.b16 %v1938
      %v2253 = vunpack.c.h.b16 %v1938
      %v2254 = vunpack.c.l.b16 %v1939
      %v2255 = vunpack.c.l.b16 %v1940
      %v2256 = vunpack.c.h.b16 %v1940
      %v2257 = vunpack.c.l.b16 %v1941
      %v2258 = vunpack.c.l.b16 %v1942
      %v2259 = vunpack.c.h.b16 %v1942
      %v2260 = vunpack.c.l.b16 %v1943
      %v2261 = vunpack.c.l.b16 %v1944
      %v2262 = vunpack.c.h.b16 %v1944
      %v2263 = vunpack.c.l.b16 %v1945
      %v2264 = vunpack.c.l.b16 %v1946
      %v2265 = vunpack.c.h.b16 %v1946
      %v2266 = vunpack.c.l.b16 %v1947
      %v2267 = vunpack.c.l.b16 %v1948
      %v2268 = vunpack.c.h.b16 %v1948
      %v2269 = vunpack.c.l.b16 %v1949
      %v2270 = vunpack.c.l.b16 %v1950
      %v2271 = vunpack.c.h.b16 %v1950
      %v2272 = vunpack.c.l.b16 %v1951
      %v2273 = vunpack.c.l.b16 %v1952
      %v2274 = vunpack.c.h.b16 %v1952
      %v2275 = vunpack.c.l.b16 %v1953
      %v2276 = vunpack.c.l.b16 %v1954
      %v2277 = vunpack.c.h.b16 %v1954
      %v2278 = vunpack.c.l.b16 %v1955
      %v2279 = vunpack.c.l.b16 %v1956
      %v2280 = vunpack.c.h.b16 %v1956
      %v2281 = vunpack.c.l.b16 %v1957
      %v2282 = vunpack.c.l.b16 %v1958
      %v2283 = vunpack.c.h.b16 %v1958
      %v2284 = vunpack.c.l.b16 %v1959
      %v2285 = vunpack.c.l.b16 %v1960
      %v2286 = vunpack.c.h.b16 %v1960
      %v2287 = vunpack.c.l.b16 %v1961
      %v2288 = vunpack.c.l.b16 %v1962
      %v2289 = vunpack.c.h.b16 %v1962
      %v2290 = vunpack.c.l.b16 %v1963
      %v2291 = vunpack.c.l.b16 %v1964
      %v2292 = vunpack.c.h.b16 %v1964
      %v2293 = vunpack.c.l.b16 %v1965
      %v2294 = vunpack.c.l.b16 %v1966
      %v2295 = vunpack.c.h.b16 %v1966
      %v2296 = vunpack.c.l.b16 %v1967
      %v2297 = vunpack.c.l.b16 %v1968
      %v2298 = vunpack.c.h.b16 %v1968
      %v2299 = vunpack.c.l.b16 %v1969
      %v2300 = vunpack.c.l.b16 %v1970
      %v2301 = vunpack.c.h.b16 %v1970
      %v2302 = vunpack.c.l.b16 %v1971
      %v2303 = vunpack.c.l.b16 %v1972
      %v2304 = vunpack.c.h.b16 %v1972
      %v2305 = vunpack.c.l.b16 %v1973
      %v2306 = vunpack.c.l.b16 %v1974
      %v2307 = vunpack.c.h.b16 %v1974
      %v2308 = vunpack.c.l.b16 %v1975
      %v2309 = vunpack.c.l.b16 %v1976
      %v2310 = vunpack.c.h.b16 %v1976
      %v2311 = vunpack.c.l.b16 %v1977
      %v2312 = vunpack.c.l.b16 %v1978
      %v2313 = vunpack.c.h.b16 %v1978
      %v2314 = vunpack.c.l.b16 %v1979
      %v2315 = vunpack.c.l.b16 %v1980
      %v2316 = vunpack.c.h.b16 %v1980
      %v2317 = vunpack.c.l.b16 %v1981
      %v2318 = vpack.c.b16 %v2129, %v2126
      %v2319 = vpack.c.b16 %v2130, %v2127
      %v2320 = vpack.c.b16 %v2131, %v2128
      %v2321 = vpack.c.b16 %v2135, %v2132
      %v2322 = vpack.c.b16 %v2136, %v2133
      %v2323 = vpack.c.b16 %v2137, %v2134
      %v2324 = vpack.c.b16 %v2141, %v2138
      %v2325 = vpack.c.b16 %v2142, %v2139
      %v2326 = vpack.c.b16 %v2143, %v2140
      %v2327 = vpack.c.b16 %v2147, %v2144
      %v2328 = vpack.c.b16 %v2148, %v2145
      %v2329 = vpack.c.b16 %v2149, %v2146
      %v2330 = vpack.c.b16 %v2153, %v2150
      %v2331 = vpack.c.b16 %v2154, %v2151
      %v2332 = vpack.c.b16 %v2155, %v2152
      %v2333 = vpack.c.b16 %v2159, %v2156
      %v2334 = vpack.c.b16 %v2160, %v2157
      %v2335 = vpack.c.b16 %v2161, %v2158
      %v2336 = vpack.c.b16 %v2165, %v2162
      %v2337 = vpack.c.b16 %v2166, %v2163
      %v2338 = vpack.c.b16 %v2167, %v2164
      %v2339 = vpack.c.b16 %v2171, %v2168
      %v2340 = vpack.c.b16 %v2172, %v2169
      %v2341 = vpack.c.b16 %v2173, %v2170
      %v2342 = vpack.c.b16 %v2177, %v2174
      %v2343 = vpack.c.b16 %v2178, %v2175
      %v2344 = vpack.c.b16 %v2179, %v2176
      %v2345 = vpack.c.b16 %v2183, %v2180
      %v2346 = vpack.c.b16 %v2184, %v2181
      %v2347 = vpack.c.b16 %v2185, %v2182
      %v2348 = vpack.c.b16 %v2189, %v2186
      %v2349 = vpack.c.b16 %v2190, %v2187
      %v2350 = vpack.c.b16 %v2191, %v2188
      %v2351 = vpack.c.b16 %v2195, %v2192
      %v2352 = vpack.c.b16 %v2196, %v2193
      %v2353 = vpack.c.b16 %v2197, %v2194
      %v2354 = vpack.c.b16 %v2201, %v2198
      %v2355 = vpack.c.b16 %v2202, %v2199
      %v2356 = vpack.c.b16 %v2203, %v2200
      %v2357 = vpack.c.b16 %v2207, %v2204
      %v2358 = vpack.c.b16 %v2208, %v2205
      %v2359 = vpack.c.b16 %v2209, %v2206
      %v2360 = vpack.c.b16 %v2213, %v2210
      %v2361 = vpack.c.b16 %v2214, %v2211
      %v2362 = vpack.c.b16 %v2215, %v2212
      %v2363 = vpack.c.b16 %v2219, %v2216
      %v2364 = vpack.c.b16 %v2220, %v2217
      %v2365 = vpack.c.b16 %v2221, %v2218
      %v2366 = vpack.c.b16 %v2225, %v2222
      %v2367 = vpack.c.b16 %v2226, %v2223
      %v2368 = vpack.c.b16 %v2227, %v2224
      %v2369 = vpack.c.b16 %v2231, %v2228
      %v2370 = vpack.c.b16 %v2232, %v2229
      %v2371 = vpack.c.b16 %v2233, %v2230
      %v2372 = vpack.c.b16 %v2237, %v2234
      %v2373 = vpack.c.b16 %v2238, %v2235
      %v2374 = vpack.c.b16 %v2239, %v2236
      %v2375 = vpack.c.b16 %v2243, %v2240
      %v2376 = vpack.c.b16 %v2244, %v2241
      %v2377 = vpack.c.b16 %v2245, %v2242
      %v2378 = vpack.c.b16 %v2249, %v2246
      %v2379 = vpack.c.b16 %v2250, %v2247
      %v2380 = vpack.c.b16 %v2251, %v2248
      %v2381 = vpack.c.b16 %v2255, %v2252
      %v2382 = vpack.c.b16 %v2256, %v2253
      %v2383 = vpack.c.b16 %v2257, %v2254
      %v2384 = vpack.c.b16 %v2261, %v2258
      %v2385 = vpack.c.b16 %v2262, %v2259
      %v2386 = vpack.c.b16 %v2263, %v2260
      %v2387 = vpack.c.b16 %v2267, %v2264
      %v2388 = vpack.c.b16 %v2268, %v2265
      %v2389 = vpack.c.b16 %v2269, %v2266
      %v2390 = vpack.c.b16 %v2273, %v2270
      %v2391 = vpack.c.b16 %v2274, %v2271
      %v2392 = vpack.c.b16 %v2275, %v2272
      %v2393 = vpack.c.b16 %v2279, %v2276
      %v2394 = vpack.c.b16 %v2280, %v2277
      %v2395 = vpack.c.b16 %v2281, %v2278
      %v2396 = vpack.c.b16 %v2285, %v2282
      %v2397 = vpack.c.b16 %v2286, %v2283
      %v2398 = vpack.c.b16 %v2287, %v2284
      %v2399 = vpack.c.b16 %v2291, %v2288
      %v2400 = vpack.c.b16 %v2292, %v2289
      %v2401 = vpack.c.b16 %v2293, %v2290
      %v2402 = vpack.c.b16 %v2297, %v2294
      %v2403 = vpack.c.b16 %v2298, %v2295
      %v2404 = vpack.c.b16 %v2299, %v2296
      %v2405 = vpack.c.b16 %v2303, %v2300
      %v2406 = vpack.c.b16 %v2304, %v2301
      %v2407 = vpack.c.b16 %v2305, %v2302
      %v2408 = vpack.c.b16 %v2309, %v2306
      %v2409 = vpack.c.b16 %v2310, %v2307
      %v2410 = vpack.c.b16 %v2311, %v2308
      %v2411 = vpack.c.b16 %v2315, %v2312
      %v2412 = vpack.c.b16 %v2316, %v2313
      %v2413 = vpack.c.b16 %v2317, %v2314
      %2510 = vmatprep.subr.bf16.mxu0 %v2340
      %2511 = vmatpush1.bf16.msra.mxu0 %v2339
      %2512 = vmatprep.subr.bf16.mxu0 %v2337
      %2513 = vmatpush1.bf16.msra.mxu0 %v2336
      %2514 = vmatprep.subr.bf16.mxu0 %v2334
      %2515 = vmatpush1.bf16.msra.mxu0 %v2333
      %2516 = vmatprep.subr.bf16.mxu0 %v2331
      %2517 = vmatpush1.bf16.msra.mxu0 %v2330
      %2518 = vmatprep.subr.bf16.mxu0 %v2328
      %2519 = vmatpush1.bf16.msra.mxu0 %v2327
      %2520 = vmatprep.subr.bf16.mxu0 %v2325
      %2521 = vmatpush1.bf16.msra.mxu0 %v2324
      %2522 = vmatprep.subr.bf16.mxu0 %v2322
      %2523 = vmatpush1.bf16.msra.mxu0 %v2321
      %2524 = vmatprep.subr.bf16.mxu0 %v2319
      %2525 = vmatpush1.bf16.msra.mxu0 %v2318
      %2526 = vmatprep.subr.bf16.mxu0 %v2364
      %2527 = vmatpush2.bf16.msra.mxu0 %v2363
      %2528 = vmatprep.subr.bf16.mxu0 %v2361
      %2529 = vmatpush2.bf16.msra.mxu0 %v2360
      %2530 = vmatprep.subr.bf16.mxu0 %v2358
      %2531 = vmatpush2.bf16.msra.mxu0 %v2357
      %2532 = vmatprep.subr.bf16.mxu0 %v2355
      %2533 = vmatpush2.bf16.msra.mxu0 %v2354
      %2534 = vmatprep.subr.bf16.mxu0 %v2352
      %2535 = vmatpush2.bf16.msra.mxu0 %v2351
      %2536 = vmatprep.subr.bf16.mxu0 %v2349
      %2537 = vmatpush2.bf16.msra.mxu0 %v2348
      %2538 = vmatprep.subr.bf16.mxu0 %v2346
      %2539 = vmatpush2.bf16.msra.mxu0 %v2345
      %2540 = vmatprep.subr.bf16.mxu0 %v2343
      %2541 = vmatpush2.bf16.msra.mxu0 %v2342
      %2542 = vmatprep.mubr.bf16.mxu0 %v1823
      %2543 = vmatmul.mubr.bf16.gmra.mxu0 %v1822
      %v2544 = vpop.f32.mrf.mxu0
      %v2545 = vadd.f32 %v1986, %v2544
      %v2546 = vpop.f32.mrf.mxu0
      %v2547 = vadd.f32 %v1990, %v2546
      %v2548 = vpop.f32.mrf.mxu0
      %v2549 = vadd.f32 %v1986, %v2548
      %v2550 = vpop.f32.mrf.mxu0
      %v2551 = vadd.f32 %v1990, %v2550
      %2552 = vmatprep.mubr.bf16.mxu0 %v1827
      %2553 = vmatmul.mubr.bf16.gmra.mxu0 %v1826
      %v2554 = vpop.f32.mrf.mxu0
      %v2555 = vadd.f32 %v1986, %v2554
      %v2556 = vpop.f32.mrf.mxu0
      %v2557 = vadd.f32 %v1990, %v2556
      %v2558 = vpop.f32.mrf.mxu0
      %v2559 = vadd.f32 %v1986, %v2558
      %v2560 = vpop.f32.mrf.mxu0
      %v2561 = vadd.f32 %v1990, %v2560
      %2562 = vmatprep.mubr.bf16.mxu0 %v1831
      %2563 = vmatmul.mubr.bf16.gmra.mxu0 %v1830
      %v2564 = vpop.f32.mrf.mxu0
      %v2565 = vadd.f32 %v1986, %v2564
      %v2566 = vpop.f32.mrf.mxu0
      %v2567 = vadd.f32 %v1990, %v2566
      %v2568 = vpop.f32.mrf.mxu0
      %v2569 = vadd.f32 %v1986, %v2568
      %v2570 = vpop.f32.mrf.mxu0
      %v2571 = vadd.f32 %v1990, %v2570
      %2572 = vmatprep.mubr.bf16.mxu0 %v1835
      %2573 = vmatmul.mubr.bf16.gmra.mxu0 %v1834
      %v2574 = vpop.f32.mrf.mxu0
      %v2575 = vadd.f32 %v1986, %v2574
      %v2576 = vpop.f32.mrf.mxu0
      %v2577 = vadd.f32 %v1990, %v2576
      %v2578 = vpop.f32.mrf.mxu0
      %v2579 = vadd.f32 %v1986, %v2578
      %v2580 = vpop.f32.mrf.mxu0
      %v2581 = vadd.f32 %v1990, %v2580
      %2582 = vmatprep.mubr.bf16.mxu0 %v1839
      %2583 = vmatmul.mubr.bf16.gmra.mxu0 %v1838
      %v2584 = vpop.f32.mrf.mxu0
      %v2585 = vadd.f32 %v1986, %v2584
      %v2586 = vpop.f32.mrf.mxu0
      %v2587 = vadd.f32 %v1990, %v2586
      %v2588 = vpop.f32.mrf.mxu0
      %v2589 = vadd.f32 %v1986, %v2588
      %v2590 = vpop.f32.mrf.mxu0
      %v2591 = vadd.f32 %v1990, %v2590
      %2592 = vmatprep.mubr.bf16.mxu0 %v1843
      %2593 = vmatmul.mubr.bf16.gmra.mxu0 %v1842
      %v2594 = vpop.f32.mrf.mxu0
      %v2595 = vadd.f32 %v1986, %v2594
      %v2596 = vpop.f32.mrf.mxu0
      %v2597 = vadd.f32 %v1990, %v2596
      %v2598 = vpop.f32.mrf.mxu0
      %v2599 = vadd.f32 %v1986, %v2598
      %v2600 = vpop.f32.mrf.mxu0
      %v2601 = vadd.f32 %v1990, %v2600
      %2602 = vmatprep.mubr.bf16.mxu0 %v1847
      %2603 = vmatmul.mubr.bf16.gmra.mxu0 %v1846
      %v2604 = vpop.f32.mrf.mxu0
      %v2605 = vadd.f32 %v1986, %v2604
      %v2606 = vpop.f32.mrf.mxu0
      %v2607 = vadd.f32 %v1990, %v2606
      %v2608 = vpop.f32.mrf.mxu0
      %v2609 = vadd.f32 %v1986, %v2608
      %v2610 = vpop.f32.mrf.mxu0
      %v2611 = vadd.f32 %v1990, %v2610
      %2612 = vmatprep.mubr.bf16.mxu0 %v1851
      %2613 = vmatmul.mubr.bf16.gmra.mxu0 %v1850
      %v2614 = vpop.f32.mrf.mxu0
      %v2615 = vadd.f32 %v1986, %v2614
      %v2616 = vpop.f32.mrf.mxu0
      %v2617 = vadd.f32 %v1990, %v2616
      %v2618 = vpop.f32.mrf.mxu0
      %v2619 = vadd.f32 %v1986, %v2618
      %v2620 = vpop.f32.mrf.mxu0
      %v2621 = vadd.f32 %v1990, %v2620
      %2622 = vdwg.mxu0
      %2623 = vmatprep.subr.bf16.mxu0 %v2388
      %2624 = vmatpush1.bf16.msra.mxu0 %v2387
      %2625 = vmatprep.subr.bf16.mxu0 %v2385
      %2626 = vmatpush1.bf16.msra.mxu0 %v2384
      %2627 = vmatprep.subr.bf16.mxu0 %v2382
      %2628 = vmatpush1.bf16.msra.mxu0 %v2381
      %2629 = vmatprep.subr.bf16.mxu0 %v2379
      %2630 = vmatpush1.bf16.msra.mxu0 %v2378
      %2631 = vmatprep.subr.bf16.mxu0 %v2376
      %2632 = vmatpush1.bf16.msra.mxu0 %v2375
      %2633 = vmatprep.subr.bf16.mxu0 %v2373
      %2634 = vmatpush1.bf16.msra.mxu0 %v2372
      %2635 = vmatprep.subr.bf16.mxu0 %v2370
      %2636 = vmatpush1.bf16.msra.mxu0 %v2369
      %2637 = vmatprep.subr.bf16.mxu0 %v2367
      %2638 = vmatpush1.bf16.msra.mxu0 %v2366
      %2639 = vmatprep.subr.bf16.mxu0 %v2412
      %2640 = vmatpush2.bf16.msra.mxu0 %v2411
      %2641 = vmatprep.subr.bf16.mxu0 %v2409
      %2642 = vmatpush2.bf16.msra.mxu0 %v2408
      %2643 = vmatprep.subr.bf16.mxu0 %v2406
      %2644 = vmatpush2.bf16.msra.mxu0 %v2405
      %2645 = vmatprep.subr.bf16.mxu0 %v2403
      %2646 = vmatpush2.bf16.msra.mxu0 %v2402
      %2647 = vmatprep.subr.bf16.mxu0 %v2400
      %2648 = vmatpush2.bf16.msra.mxu0 %v2399
      %2649 = vmatprep.subr.bf16.mxu0 %v2397
      %2650 = vmatpush2.bf16.msra.mxu0 %v2396
      %2651 = vmatprep.subr.bf16.mxu0 %v2394
      %2652 = vmatpush2.bf16.msra.mxu0 %v2393
      %2653 = vmatprep.subr.bf16.mxu0 %v2391
      %2654 = vmatpush2.bf16.msra.mxu0 %v2390
      %2655 = vmatprep.mubr.bf16.mxu0 %v1825
      %2656 = vmatmul.mubr.bf16.gmra.mxu0 %v1824
      %v2657 = vpop.f32.mrf.mxu0
      %v2658 = vadd.f32 %v2545, %v2657
      %v2659 = vpop.f32.mrf.mxu0
      %v2660 = vadd.f32 %v2547, %v2659
      %v2661 = vpop.f32.mrf.mxu0
      %v2662 = vadd.f32 %v2549, %v2661
      %v2663 = vpop.f32.mrf.mxu0
      %v2664 = vadd.f32 %v2551, %v2663
      %2665 = vmatprep.mubr.bf16.mxu0 %v1829
      %2666 = vmatmul.mubr.bf16.gmra.mxu0 %v1828
      %v2667 = vpop.f32.mrf.mxu0
      %v2668 = vadd.f32 %v2555, %v2667
      %v2669 = vpop.f32.mrf.mxu0
      %v2670 = vadd.f32 %v2557, %v2669
      %v2671 = vpop.f32.mrf.mxu0
      %v2672 = vadd.f32 %v2559, %v2671
      %v2673 = vpop.f32.mrf.mxu0
      %v2674 = vadd.f32 %v2561, %v2673
      %2675 = vmatprep.mubr.bf16.mxu0 %v1833
      %2676 = vmatmul.mubr.bf16.gmra.mxu0 %v1832
      %v2677 = vpop.f32.mrf.mxu0
      %v2678 = vadd.f32 %v2565, %v2677
      %v2679 = vpop.f32.mrf.mxu0
      %v2680 = vadd.f32 %v2567, %v2679
      %v2681 = vpop.f32.mrf.mxu0
      %v2682 = vadd.f32 %v2569, %v2681
      %v2683 = vpop.f32.mrf.mxu0
      %v2684 = vadd.f32 %v2571, %v2683
      %2685 = vmatprep.mubr.bf16.mxu0 %v1837
      %2686 = vmatmul.mubr.bf16.gmra.mxu0 %v1836
      %v2687 = vpop.f32.mrf.mxu0
      %v2688 = vadd.f32 %v2575, %v2687
      %v2689 = vpop.f32.mrf.mxu0
      %v2690 = vadd.f32 %v2577, %v2689
      %v2691 = vpop.f32.mrf.mxu0
      %v2692 = vadd.f32 %v2579, %v2691
      %v2693 = vpop.f32.mrf.mxu0
      %v2694 = vadd.f32 %v2581, %v2693
      %2695 = vmatprep.mubr.bf16.mxu0 %v1841
      %2696 = vmatmul.mubr.bf16.gmra.mxu0 %v1840
      %v2697 = vpop.f32.mrf.mxu0
      %v2698 = vadd.f32 %v2585, %v2697
      %v2699 = vpop.f32.mrf.mxu0
      %v2700 = vadd.f32 %v2587, %v2699
      %v2701 = vpop.f32.mrf.mxu0
      %v2702 = vadd.f32 %v2589, %v2701
      %v2703 = vpop.f32.mrf.mxu0
      %v2704 = vadd.f32 %v2591, %v2703
      %2705 = vmatprep.mubr.bf16.mxu0 %v1845
      %2706 = vmatmul.mubr.bf16.gmra.mxu0 %v1844
      %v2707 = vpop.f32.mrf.mxu0
      %v2708 = vadd.f32 %v2595, %v2707
      %v2709 = vpop.f32.mrf.mxu0
      %v2710 = vadd.f32 %v2597, %v2709
      %v2711 = vpop.f32.mrf.mxu0
      %v2712 = vadd.f32 %v2599, %v2711
      %v2713 = vpop.f32.mrf.mxu0
      %v2714 = vadd.f32 %v2601, %v2713
      %2715 = vmatprep.mubr.bf16.mxu0 %v1849
      %2716 = vmatmul.mubr.bf16.gmra.mxu0 %v1848
      %v2717 = vpop.f32.mrf.mxu0
      %v2718 = vadd.f32 %v2605, %v2717
      %v2719 = vpop.f32.mrf.mxu0
      %v2720 = vadd.f32 %v2607, %v2719
      %v2721 = vpop.f32.mrf.mxu0
      %v2722 = vadd.f32 %v2609, %v2721
      %v2723 = vpop.f32.mrf.mxu0
      %v2724 = vadd.f32 %v2611, %v2723
      %2725 = vmatprep.mubr.bf16.mxu0 %v1853
      %2726 = vmatmul.mubr.bf16.gmra.mxu0 %v1852
      %v2727 = vpop.f32.mrf.mxu0
      %v2728 = vadd.f32 %v2615, %v2727
      %v2729 = vpop.f32.mrf.mxu0
      %v2730 = vadd.f32 %v2617, %v2729
      %v2731 = vpop.f32.mrf.mxu0
      %v2732 = vadd.f32 %v2619, %v2731
      %v2733 = vpop.f32.mrf.mxu0
      %v2734 = vadd.f32 %v2621, %v2733
      %2735 = vdwg.mxu0
      %2736 = vmatprep.subr.bf16.mxu0 0
      %2737 = vmatpush1.bf16.msra.mxu0 %v2341
      %2738 = vmatprep.subr.bf16.mxu0 0
      %2739 = vmatpush1.bf16.msra.mxu0 %v2338
      %2740 = vmatprep.subr.bf16.mxu0 0
      %2741 = vmatpush1.bf16.msra.mxu0 %v2335
      %2742 = vmatprep.subr.bf16.mxu0 0
      %2743 = vmatpush1.bf16.msra.mxu0 %v2332
      %2744 = vmatprep.subr.bf16.mxu0 0
      %2745 = vmatpush1.bf16.msra.mxu0 %v2329
      %2746 = vmatprep.subr.bf16.mxu0 0
      %2747 = vmatpush1.bf16.msra.mxu0 %v2326
      %2748 = vmatprep.subr.bf16.mxu0 0
      %2749 = vmatpush1.bf16.msra.mxu0 %v2323
      %2750 = vmatprep.subr.bf16.mxu0 0
      %2751 = vmatpush1.bf16.msra.mxu0 %v2320
      %2752 = vmatprep.subr.bf16.mxu0 0
      %2753 = vmatpush2.bf16.msra.mxu0 %v2365
      %2754 = vmatprep.subr.bf16.mxu0 0
      %2755 = vmatpush2.bf16.msra.mxu0 %v2362
      %2756 = vmatprep.subr.bf16.mxu0 0
      %2757 = vmatpush2.bf16.msra.mxu0 %v2359
      %2758 = vmatprep.subr.bf16.mxu0 0
      %2759 = vmatpush2.bf16.msra.mxu0 %v2356
      %2760 = vmatprep.subr.bf16.mxu0 0
      %2761 = vmatpush2.bf16.msra.mxu0 %v2353
      %2762 = vmatprep.subr.bf16.mxu0 0
      %2763 = vmatpush2.bf16.msra.mxu0 %v2350
      %2764 = vmatprep.subr.bf16.mxu0 0
      %2765 = vmatpush2.bf16.msra.mxu0 %v2347
      %2766 = vmatprep.subr.bf16.mxu0 0
      %2767 = vmatpush2.bf16.msra.mxu0 %v2344
      %2768 = vmatprep.mubr.bf16.mxu0 %v1823
      %2769 = vmatmul.mubr.bf16.gmra.mxu0 %v1822
      %v2770 = vpop.f32.mrf.mxu0
      %v2771 = vadd.f32 %v1994, %v2770
      %v2772 = vpop.f32.mrf.mxu0
      %v2773 = vpop.f32.mrf.mxu0
      %v2774 = vadd.f32 %v1994, %v2773
      %v2775 = vpop.f32.mrf.mxu0
      %2776 = vmatprep.mubr.bf16.mxu0 %v1827
      %2777 = vmatmul.mubr.bf16.gmra.mxu0 %v1826
      %v2778 = vpop.f32.mrf.mxu0
      %v2779 = vadd.f32 %v1994, %v2778
      %v2780 = vpop.f32.mrf.mxu0
      %v2781 = vpop.f32.mrf.mxu0
      %v2782 = vadd.f32 %v1994, %v2781
      %v2783 = vpop.f32.mrf.mxu0
      %2784 = vmatprep.mubr.bf16.mxu0 %v1831
      %2785 = vmatmul.mubr.bf16.gmra.mxu0 %v1830
      %v2786 = vpop.f32.mrf.mxu0
      %v2787 = vadd.f32 %v1994, %v2786
      %v2788 = vpop.f32.mrf.mxu0
      %v2789 = vpop.f32.mrf.mxu0
      %v2790 = vadd.f32 %v1994, %v2789
      %v2791 = vpop.f32.mrf.mxu0
      %2792 = vmatprep.mubr.bf16.mxu0 %v1835
      %2793 = vmatmul.mubr.bf16.gmra.mxu0 %v1834
      %v2794 = vpop.f32.mrf.mxu0
      %v2795 = vadd.f32 %v1994, %v2794
      %v2796 = vpop.f32.mrf.mxu0
      %v2797 = vpop.f32.mrf.mxu0
      %v2798 = vadd.f32 %v1994, %v2797
      %v2799 = vpop.f32.mrf.mxu0
      %2800 = vmatprep.mubr.bf16.mxu0 %v1839
      %2801 = vmatmul.mubr.bf16.gmra.mxu0 %v1838
      %v2802 = vpop.f32.mrf.mxu0
      %v2803 = vadd.f32 %v1994, %v2802
      %v2804 = vpop.f32.mrf.mxu0
      %v2805 = vpop.f32.mrf.mxu0
      %v2806 = vadd.f32 %v1994, %v2805
      %v2807 = vpop.f32.mrf.mxu0
      %2808 = vmatprep.mubr.bf16.mxu0 %v1843
      %2809 = vmatmul.mubr.bf16.gmra.mxu0 %v1842
      %v2810 = vpop.f32.mrf.mxu0
      %v2811 = vadd.f32 %v1994, %v2810
      %v2812 = vpop.f32.mrf.mxu0
      %v2813 = vpop.f32.mrf.mxu0
      %v2814 = vadd.f32 %v1994, %v2813
      %v2815 = vpop.f32.mrf.mxu0
      %2816 = vmatprep.mubr.bf16.mxu0 %v1847
      %2817 = vmatmul.mubr.bf16.gmra.mxu0 %v1846
      %v2818 = vpop.f32.mrf.mxu0
      %v2819 = vadd.f32 %v1994, %v2818
      %v2820 = vpop.f32.mrf.mxu0
      %v2821 = vpop.f32.mrf.mxu0
      %v2822 = vadd.f32 %v1994, %v2821
      %v2823 = vpop.f32.mrf.mxu0
      %2824 = vmatprep.mubr.bf16.mxu0 %v1851
      %2825 = vmatmul.mubr.bf16.gmra.mxu0 %v1850
      %v2826 = vpop.f32.mrf.mxu0
      %v2827 = vadd.f32 %v1994, %v2826
      %v2828 = vpop.f32.mrf.mxu0
      %v2829 = vpop.f32.mrf.mxu0
      %v2830 = vadd.f32 %v1994, %v2829
      %v2831 = vpop.f32.mrf.mxu0
      %2832 = vdwg.mxu0
      %2833 = vmatprep.subr.bf16.mxu0 0
      %2834 = vmatpush1.bf16.msra.mxu0 %v2389
      %2835 = vmatprep.subr.bf16.mxu0 0
      %2836 = vmatpush1.bf16.msra.mxu0 %v2386
      %2837 = vmatprep.subr.bf16.mxu0 0
      %2838 = vmatpush1.bf16.msra.mxu0 %v2383
      %2839 = vmatprep.subr.bf16.mxu0 0
      %2840 = vmatpush1.bf16.msra.mxu0 %v2380
      %2841 = vmatprep.subr.bf16.mxu0 0
      %2842 = vmatpush1.bf16.msra.mxu0 %v2377
      %2843 = vmatprep.subr.bf16.mxu0 0
      %2844 = vmatpush1.bf16.msra.mxu0 %v2374
      %2845 = vmatprep.subr.bf16.mxu0 0
      %2846 = vmatpush1.bf16.msra.mxu0 %v2371
      %2847 = vmatprep.subr.bf16.mxu0 0
      %2848 = vmatpush1.bf16.msra.mxu0 %v2368
      %2849 = vmatprep.subr.bf16.mxu0 0
      %2850 = vmatpush2.bf16.msra.mxu0 %v2413
      %2851 = vmatprep.subr.bf16.mxu0 0
      %2852 = vmatpush2.bf16.msra.mxu0 %v2410
      %2853 = vmatprep.subr.bf16.mxu0 0
      %2854 = vmatpush2.bf16.msra.mxu0 %v2407
      %2855 = vmatprep.subr.bf16.mxu0 0
      %2856 = vmatpush2.bf16.msra.mxu0 %v2404
      %2857 = vmatprep.subr.bf16.mxu0 0
      %2858 = vmatpush2.bf16.msra.mxu0 %v2401
      %2859 = vmatprep.subr.bf16.mxu0 0
      %2860 = vmatpush2.bf16.msra.mxu0 %v2398
      %2861 = vmatprep.subr.bf16.mxu0 0
      %2862 = vmatpush2.bf16.msra.mxu0 %v2395
      %2863 = vmatprep.subr.bf16.mxu0 0
      %2864 = vmatpush2.bf16.msra.mxu0 %v2392
      %2865 = vmatprep.mubr.bf16.mxu0 %v1825
      %2866 = vmatmul.mubr.bf16.gmra.mxu0 %v1824
      %v2867 = vpop.f32.mrf.mxu0
      %v2868 = vadd.f32 %v2771, %v2867
      %v2869 = vpop.f32.mrf.mxu0
      %v2870 = vpop.f32.mrf.mxu0
      %v2871 = vadd.f32 %v2774, %v2870
      %v2872 = vpop.f32.mrf.mxu0
      %2873 = vmatprep.mubr.bf16.mxu0 %v1829
      %2874 = vmatmul.mubr.bf16.gmra.mxu0 %v1828
      %v2875 = vpop.f32.mrf.mxu0
      %v2876 = vadd.f32 %v2779, %v2875
      %v2877 = vpop.f32.mrf.mxu0
      %v2878 = vpop.f32.mrf.mxu0
      %v2879 = vadd.f32 %v2782, %v2878
      %v2880 = vpop.f32.mrf.mxu0
      %2881 = vmatprep.mubr.bf16.mxu0 %v1833
      %2882 = vmatmul.mubr.bf16.gmra.mxu0 %v1832
      %v2883 = vpop.f32.mrf.mxu0
      %v2884 = vadd.f32 %v2787, %v2883
      %v2885 = vpop.f32.mrf.mxu0
      %v2886 = vpop.f32.mrf.mxu0
      %v2887 = vadd.f32 %v2790, %v2886
      %v2888 = vpop.f32.mrf.mxu0
      %2889 = vmatprep.mubr.bf16.mxu0 %v1837
      %2890 = vmatmul.mubr.bf16.gmra.mxu0 %v1836
      %v2891 = vpop.f32.mrf.mxu0
      %v2892 = vadd.f32 %v2795, %v2891
      %v2893 = vpop.f32.mrf.mxu0
      %v2894 = vpop.f32.mrf.mxu0
      %v2895 = vadd.f32 %v2798, %v2894
      %v2896 = vpop.f32.mrf.mxu0
      %2897 = vmatprep.mubr.bf16.mxu0 %v1841
      %2898 = vmatmul.mubr.bf16.gmra.mxu0 %v1840
      %v2899 = vpop.f32.mrf.mxu0
      %v2900 = vadd.f32 %v2803, %v2899
      %v2901 = vpop.f32.mrf.mxu0
      %v2902 = vpop.f32.mrf.mxu0
      %v2903 = vadd.f32 %v2806, %v2902
      %v2904 = vpop.f32.mrf.mxu0
      %2905 = vmatprep.mubr.bf16.mxu0 %v1845
      %2906 = vmatmul.mubr.bf16.gmra.mxu0 %v1844
      %v2907 = vpop.f32.mrf.mxu0
      %v2908 = vadd.f32 %v2811, %v2907
      %v2909 = vpop.f32.mrf.mxu0
      %v2910 = vpop.f32.mrf.mxu0
      %v2911 = vadd.f32 %v2814, %v2910
      %v2912 = vpop.f32.mrf.mxu0
      %2913 = vmatprep.mubr.bf16.mxu0 %v1849
      %2914 = vmatmul.mubr.bf16.gmra.mxu0 %v1848
      %v2915 = vpop.f32.mrf.mxu0
      %v2916 = vadd.f32 %v2819, %v2915
      %v2917 = vpop.f32.mrf.mxu0
      %v2918 = vpop.f32.mrf.mxu0
      %v2919 = vadd.f32 %v2822, %v2918
      %v2920 = vpop.f32.mrf.mxu0
      %2921 = vmatprep.mubr.bf16.mxu0 %v1853
      %2922 = vmatmul.mubr.bf16.gmra.mxu0 %v1852
      %v2923 = vpop.f32.mrf.mxu0
      %v2924 = vadd.f32 %v2827, %v2923
      %v2925 = vpop.f32.mrf.mxu0
      %v2926 = vpop.f32.mrf.mxu0
      %v2927 = vadd.f32 %v2830, %v2926
      %v2928 = vpop.f32.mrf.mxu0
      %2929 = vdwg.mxu0
      %v2930 = vadd.f32 %v2658, %v2660
      %v2931 = vadd.f32 %v2930, %v2868
      %2932 = vadd.xlane.f32.xlu0 %v2931
      %v2933 = vpop.xlane.xlu0 %2932
      %v2934 = vadd.f32 %v2662, %v2664
      %v2935 = vadd.f32 %v2934, %v2871
      %2936 = vadd.xlane.f32.xlu0 %v2935
      %v2937 = vpop.xlane.xlu0 %2936
      %v2938 = vadd.f32 %v2668, %v2670
      %v2939 = vadd.f32 %v2938, %v2876
      %2940 = vadd.xlane.f32.xlu0 %v2939
      %v2941 = vpop.xlane.xlu0 %2940
      %v2942 = vadd.f32 %v2672, %v2674
      %v2943 = vadd.f32 %v2942, %v2879
      %2944 = vadd.xlane.f32.xlu0 %v2943
      %v2945 = vpop.xlane.xlu0 %2944
      %v2946 = vadd.f32 %v2678, %v2680
      %v2947 = vadd.f32 %v2946, %v2884
      %2948 = vadd.xlane.f32.xlu0 %v2947
      %v2949 = vpop.xlane.xlu0 %2948
      %v2950 = vadd.f32 %v2682, %v2684
      %v2951 = vadd.f32 %v2950, %v2887
      %2952 = vadd.xlane.f32.xlu0 %v2951
      %v2953 = vpop.xlane.xlu0 %2952
      %v2954 = vadd.f32 %v2688, %v2690
      %v2955 = vadd.f32 %v2954, %v2892
      %2956 = vadd.xlane.f32.xlu0 %v2955
      %v2957 = vpop.xlane.xlu0 %2956
      %v2958 = vadd.f32 %v2692, %v2694
      %v2959 = vadd.f32 %v2958, %v2895
      %2960 = vadd.xlane.f32.xlu0 %v2959
      %v2961 = vpop.xlane.xlu0 %2960
      %v2962 = vadd.f32 %v2698, %v2700
      %v2963 = vadd.f32 %v2962, %v2900
      %2964 = vadd.xlane.f32.xlu0 %v2963
      %v2965 = vpop.xlane.xlu0 %2964
      %v2966 = vadd.f32 %v2702, %v2704
      %v2967 = vadd.f32 %v2966, %v2903
      %2968 = vadd.xlane.f32.xlu0 %v2967
      %v2969 = vpop.xlane.xlu0 %2968
      %v2970 = vadd.f32 %v2708, %v2710
      %v2971 = vadd.f32 %v2970, %v2908
      %2972 = vadd.xlane.f32.xlu0 %v2971
      %v2973 = vpop.xlane.xlu0 %2972
      %v2974 = vadd.f32 %v2712, %v2714
      %v2975 = vadd.f32 %v2974, %v2911
      %2976 = vadd.xlane.f32.xlu0 %v2975
      %v2977 = vpop.xlane.xlu0 %2976
      %v2978 = vadd.f32 %v2718, %v2720
      %v2979 = vadd.f32 %v2978, %v2916
      %2980 = vadd.xlane.f32.xlu0 %v2979
      %v2981 = vpop.xlane.xlu0 %2980
      %v2982 = vadd.f32 %v2722, %v2724
      %v2983 = vadd.f32 %v2982, %v2919
      %2984 = vadd.xlane.f32.xlu0 %v2983
      %v2985 = vpop.xlane.xlu0 %2984
      %v2986 = vadd.f32 %v2728, %v2730
      %v2987 = vadd.f32 %v2986, %v2924
      %2988 = vadd.xlane.f32.xlu0 %v2987
      %v2989 = vpop.xlane.xlu0 %2988
      %v2990 = vadd.f32 %v2732, %v2734
      %v2991 = vadd.f32 %v2990, %v2927
      %2992 = vadd.xlane.f32.xlu0 %v2991
      %v2993 = vpop.xlane.xlu0 %2992
      %v2994 = vmul.f32 %v2658, %v2658
      %v2995 = vmul.f32 %v2660, %v2660
      %v2996 = vmul.f32 %v2868, %v2868
      %v2997 = vmul.f32 %v2662, %v2662
      %v2998 = vmul.f32 %v2664, %v2664
      %v2999 = vmul.f32 %v2871, %v2871
      %v3000 = vmul.f32 %v2668, %v2668
      %v3001 = vmul.f32 %v2670, %v2670
      %v3002 = vmul.f32 %v2876, %v2876
      %v3003 = vmul.f32 %v2672, %v2672
      %v3004 = vmul.f32 %v2674, %v2674
      %v3005 = vmul.f32 %v2879, %v2879
      %v3006 = vmul.f32 %v2678, %v2678
      %v3007 = vmul.f32 %v2680, %v2680
      %v3008 = vmul.f32 %v2884, %v2884
      %v3009 = vmul.f32 %v2682, %v2682
      %v3010 = vmul.f32 %v2684, %v2684
      %v3011 = vmul.f32 %v2887, %v2887
      %v3012 = vmul.f32 %v2688, %v2688
      %v3013 = vmul.f32 %v2690, %v2690
      %v3014 = vmul.f32 %v2892, %v2892
      %v3015 = vmul.f32 %v2692, %v2692
      %v3016 = vmul.f32 %v2694, %v2694
      %v3017 = vmul.f32 %v2895, %v2895
      %v3018 = vmul.f32 %v2698, %v2698
      %v3019 = vmul.f32 %v2700, %v2700
      %v3020 = vmul.f32 %v2900, %v2900
      %v3021 = vmul.f32 %v2702, %v2702
      %v3022 = vmul.f32 %v2704, %v2704
      %v3023 = vmul.f32 %v2903, %v2903
      %v3024 = vmul.f32 %v2708, %v2708
      %v3025 = vmul.f32 %v2710, %v2710
      %v3026 = vmul.f32 %v2908, %v2908
      %v3027 = vmul.f32 %v2712, %v2712
      %v3028 = vmul.f32 %v2714, %v2714
      %v3029 = vmul.f32 %v2911, %v2911
      %v3030 = vmul.f32 %v2718, %v2718
      %v3031 = vmul.f32 %v2720, %v2720
      %v3032 = vmul.f32 %v2916, %v2916
      %v3033 = vmul.f32 %v2722, %v2722
      %v3034 = vmul.f32 %v2724, %v2724
      %v3035 = vmul.f32 %v2919, %v2919
      %v3036 = vmul.f32 %v2728, %v2728
      %v3037 = vmul.f32 %v2730, %v2730
      %v3038 = vmul.f32 %v2924, %v2924
      %v3039 = vmul.f32 %v2732, %v2732
      %v3040 = vmul.f32 %v2734, %v2734
      %v3041 = vmul.f32 %v2927, %v2927
      %v3042 = vadd.f32 %v2994, %v2995
      %v3043 = vadd.f32 %v3042, %v2996
      %3044 = vadd.xlane.f32.xlu0 %v3043
      %v3045 = vpop.xlane.xlu0 %3044
      %v3046 = vadd.f32 %v2997, %v2998
      %v3047 = vadd.f32 %v3046, %v2999
      %3048 = vadd.xlane.f32.xlu0 %v3047
      %v3049 = vpop.xlane.xlu0 %3048
      %v3050 = vadd.f32 %v3000, %v3001
      %v3051 = vadd.f32 %v3050, %v3002
      %3052 = vadd.xlane.f32.xlu0 %v3051
      %v3053 = vpop.xlane.xlu0 %3052
      %v3054 = vadd.f32 %v3003, %v3004
      %v3055 = vadd.f32 %v3054, %v3005
      %3056 = vadd.xlane.f32.xlu0 %v3055
      %v3057 = vpop.xlane.xlu0 %3056
      %v3058 = vadd.f32 %v3006, %v3007
      %v3059 = vadd.f32 %v3058, %v3008
      %3060 = vadd.xlane.f32.xlu0 %v3059
      %v3061 = vpop.xlane.xlu0 %3060
      %v3062 = vadd.f32 %v3009, %v3010
      %v3063 = vadd.f32 %v3062, %v3011
      %3064 = vadd.xlane.f32.xlu0 %v3063
      %v3065 = vpop.xlane.xlu0 %3064
      %v3066 = vadd.f32 %v3012, %v3013
      %v3067 = vadd.f32 %v3066, %v3014
      %3068 = vadd.xlane.f32.xlu0 %v3067
      %v3069 = vpop.xlane.xlu0 %3068
      %v3070 = vadd.f32 %v3015, %v3016
      %v3071 = vadd.f32 %v3070, %v3017
      %3072 = vadd.xlane.f32.xlu0 %v3071
      %v3073 = vpop.xlane.xlu0 %3072
      %v3074 = vadd.f32 %v3018, %v3019
      %v3075 = vadd.f32 %v3074, %v3020
      %3076 = vadd.xlane.f32.xlu0 %v3075
      %v3077 = vpop.xlane.xlu0 %3076
      %v3078 = vadd.f32 %v3021, %v3022
      %v3079 = vadd.f32 %v3078, %v3023
      %3080 = vadd.xlane.f32.xlu0 %v3079
      %v3081 = vpop.xlane.xlu0 %3080
      %v3082 = vadd.f32 %v3024, %v3025
      %v3083 = vadd.f32 %v3082, %v3026
      %3084 = vadd.xlane.f32.xlu0 %v3083
      %v3085 = vpop.xlane.xlu0 %3084
      %v3086 = vadd.f32 %v3027, %v3028
      %v3087 = vadd.f32 %v3086, %v3029
      %3088 = vadd.xlane.f32.xlu0 %v3087
      %v3089 = vpop.xlane.xlu0 %3088
      %v3090 = vadd.f32 %v3030, %v3031
      %v3091 = vadd.f32 %v3090, %v3032
      %3092 = vadd.xlane.f32.xlu0 %v3091
      %v3093 = vpop.xlane.xlu0 %3092
      %v3094 = vadd.f32 %v3033, %v3034
      %v3095 = vadd.f32 %v3094, %v3035
      %3096 = vadd.xlane.f32.xlu0 %v3095
      %v3097 = vpop.xlane.xlu0 %3096
      %v3098 = vadd.f32 %v3036, %v3037
      %v3099 = vadd.f32 %v3098, %v3038
      %3100 = vadd.xlane.f32.xlu0 %v3099
      %v3101 = vpop.xlane.xlu0 %3100
      %v3102 = vadd.f32 %v3039, %v3040
      %v3103 = vadd.f32 %v3102, %v3041
      %3104 = vadd.xlane.f32.xlu0 %v3103
      %v3105 = vpop.xlane.xlu0 %3104
      %v3106 = vmul.f32 %v2933, 0.0033333334
      %v3107 = vmul.f32 %v2937, 0.0033333334
      %v3108 = vmul.f32 %v2941, 0.0033333334
      %v3109 = vmul.f32 %v2945, 0.0033333334
      %v3110 = vmul.f32 %v2949, 0.0033333334
      %v3111 = vmul.f32 %v2953, 0.0033333334
      %v3112 = vmul.f32 %v2957, 0.0033333334
      %v3113 = vmul.f32 %v2961, 0.0033333334
      %v3114 = vmul.f32 %v2965, 0.0033333334
      %v3115 = vmul.f32 %v2969, 0.0033333334
      %v3116 = vmul.f32 %v2973, 0.0033333334
      %v3117 = vmul.f32 %v2977, 0.0033333334
      %v3118 = vmul.f32 %v2981, 0.0033333334
      %v3119 = vmul.f32 %v2985, 0.0033333334
      %v3120 = vmul.f32 %v2989, 0.0033333334
      %v3121 = vmul.f32 %v2993, 0.0033333334
      %v3122 = vmul.f32 %v3045, 0.0033333334
      %v3123 = vmul.f32 %v3049, 0.0033333334
      %v3124 = vmul.f32 %v3053, 0.0033333334
      %v3125 = vmul.f32 %v3057, 0.0033333334
      %v3126 = vmul.f32 %v3061, 0.0033333334
      %v3127 = vmul.f32 %v3065, 0.0033333334
      %v3128 = vmul.f32 %v3069, 0.0033333334
      %v3129 = vmul.f32 %v3073, 0.0033333334
      %v3130 = vmul.f32 %v3077, 0.0033333334
      %v3131 = vmul.f32 %v3081, 0.0033333334
      %v3132 = vmul.f32 %v3085, 0.0033333334
      %v3133 = vmul.f32 %v3089, 0.0033333334
      %v3134 = vmul.f32 %v3093, 0.0033333334
      %v3135 = vmul.f32 %v3097, 0.0033333334
      %v3136 = vmul.f32 %v3101, 0.0033333334
      %v3137 = vmul.f32 %v3105, 0.0033333334
      %v3138 = vmul.f32 %v3106, %v3106
      %v3139 = vmul.f32 %v3107, %v3107
      %v3140 = vmul.f32 %v3108, %v3108
      %v3141 = vmul.f32 %v3109, %v3109
      %v3142 = vmul.f32 %v3110, %v3110
      %v3143 = vmul.f32 %v3111, %v3111
      %v3144 = vmul.f32 %v3112, %v3112
      %v3145 = vmul.f32 %v3113, %v3113
      %v3146 = vmul.f32 %v3114, %v3114
      %v3147 = vmul.f32 %v3115, %v3115
      %v3148 = vmul.f32 %v3116, %v3116
      %v3149 = vmul.f32 %v3117, %v3117
      %v3150 = vmul.f32 %v3118, %v3118
      %v3151 = vmul.f32 %v3119, %v3119
      %v3152 = vmul.f32 %v3120, %v3120
      %v3153 = vmul.f32 %v3121, %v3121
      %v3154 = vsub.f32 %v3122, %v3138
      %v3155 = vsub.f32 %v3123, %v3139
      %v3156 = vsub.f32 %v3124, %v3140
      %v3157 = vsub.f32 %v3125, %v3141
      %v3158 = vsub.f32 %v3126, %v3142
      %v3159 = vsub.f32 %v3127, %v3143
      %v3160 = vsub.f32 %v3128, %v3144
      %v3161 = vsub.f32 %v3129, %v3145
      %v3162 = vsub.f32 %v3130, %v3146
      %v3163 = vsub.f32 %v3131, %v3147
      %v3164 = vsub.f32 %v3132, %v3148
      %v3165 = vsub.f32 %v3133, %v3149
      %v3166 = vsub.f32 %v3134, %v3150
      %v3167 = vsub.f32 %v3135, %v3151
      %v3168 = vsub.f32 %v3136, %v3152
      %v3169 = vsub.f32 %v3137, %v3153
      %v3170 = vadd.f32 %v3154, 1e-05
      %v3171 = vadd.f32 %v3155, 1e-05
      %v3172 = vadd.f32 %v3156, 1e-05
      %v3173 = vadd.f32 %v3157, 1e-05
      %v3174 = vadd.f32 %v3158, 1e-05
      %v3175 = vadd.f32 %v3159, 1e-05
      %v3176 = vadd.f32 %v3160, 1e-05
      %v3177 = vadd.f32 %v3161, 1e-05
      %v3178 = vadd.f32 %v3162, 1e-05
      %v3179 = vadd.f32 %v3163, 1e-05
      %v3180 = vadd.f32 %v3164, 1e-05
      %v3181 = vadd.f32 %v3165, 1e-05
      %v3182 = vadd.f32 %v3166, 1e-05
      %v3183 = vadd.f32 %v3167, 1e-05
      %v3184 = vadd.f32 %v3168, 1e-05
      %v3185 = vadd.f32 %v3169, 1e-05
      %v3186 = vrsqrt.pop %v3170
      %v3187 = vrsqrt.pop %v3171
      %v3188 = vrsqrt.pop %v3172
      %v3189 = vrsqrt.pop %v3173
      %v3190 = vrsqrt.pop %v3174
      %v3191 = vrsqrt.pop %v3175
      %v3192 = vrsqrt.pop %v3176
      %v3193 = vrsqrt.pop %v3177
      %v3194 = vrsqrt.pop %v3178
      %v3195 = vrsqrt.pop %v3179
      %v3196 = vrsqrt.pop %v3180
      %v3197 = vrsqrt.pop %v3181
      %v3198 = vrsqrt.pop %v3182
      %v3199 = vrsqrt.pop %v3183
      %v3200 = vrsqrt.pop %v3184
      %v3201 = vrsqrt.pop %v3185
      %v3202 = vsub.f32 %v2658, %v3106
      %v3203 = vsub.f32 %v2660, %v3106
      %v3204 = vsub.f32 %v2868, %v3106
      %v3205 = vsub.f32 %v2662, %v3107
      %v3206 = vsub.f32 %v2664, %v3107
      %v3207 = vsub.f32 %v2871, %v3107
      %v3208 = vsub.f32 %v2668, %v3108
      %v3209 = vsub.f32 %v2670, %v3108
      %v3210 = vsub.f32 %v2876, %v3108
      %v3211 = vsub.f32 %v2672, %v3109
      %v3212 = vsub.f32 %v2674, %v3109
      %v3213 = vsub.f32 %v2879, %v3109
      %v3214 = vsub.f32 %v2678, %v3110
      %v3215 = vsub.f32 %v2680, %v3110
      %v3216 = vsub.f32 %v2884, %v3110
      %v3217 = vsub.f32 %v2682, %v3111
      %v3218 = vsub.f32 %v2684, %v3111
      %v3219 = vsub.f32 %v2887, %v3111
      %v3220 = vsub.f32 %v2688, %v3112
      %v3221 = vsub.f32 %v2690, %v3112
      %v3222 = vsub.f32 %v2892, %v3112
      %v3223 = vsub.f32 %v2692, %v3113
      %v3224 = vsub.f32 %v2694, %v3113
      %v3225 = vsub.f32 %v2895, %v3113
      %v3226 = vsub.f32 %v2698, %v3114
      %v3227 = vsub.f32 %v2700, %v3114
      %v3228 = vsub.f32 %v2900, %v3114
      %v3229 = vsub.f32 %v2702, %v3115
      %v3230 = vsub.f32 %v2704, %v3115
      %v3231 = vsub.f32 %v2903, %v3115
      %v3232 = vsub.f32 %v2708, %v3116
      %v3233 = vsub.f32 %v2710, %v3116
      %v3234 = vsub.f32 %v2908, %v3116
      %v3235 = vsub.f32 %v2712, %v3117
      %v3236 = vsub.f32 %v2714, %v3117
      %v3237 = vsub.f32 %v2911, %v3117
      %v3238 = vsub.f32 %v2718, %v3118
      %v3239 = vsub.f32 %v2720, %v3118
      %v3240 = vsub.f32 %v2916, %v3118
      %v3241 = vsub.f32 %v2722, %v3119
      %v3242 = vsub.f32 %v2724, %v3119
      %v3243 = vsub.f32 %v2919, %v3119
      %v3244 = vsub.f32 %v2728, %v3120
      %v3245 = vsub.f32 %v2730, %v3120
      %v3246 = vsub.f32 %v2924, %v3120
      %v3247 = vsub.f32 %v2732, %v3121
      %v3248 = vsub.f32 %v2734, %v3121
      %v3249 = vsub.f32 %v2927, %v3121
      %v3250 = vmul.f32 %v3202, %v3186
      %v3251 = vmul.f32 %v3203, %v3186
      %v3252 = vmul.f32 %v3204, %v3186
      %v3253 = vmul.f32 %v3205, %v3187
      %v3254 = vmul.f32 %v3206, %v3187
      %v3255 = vmul.f32 %v3207, %v3187
      %v3256 = vmul.f32 %v3208, %v3188
      %v3257 = vmul.f32 %v3209, %v3188
      %v3258 = vmul.f32 %v3210, %v3188
      %v3259 = vmul.f32 %v3211, %v3189
      %v3260 = vmul.f32 %v3212, %v3189
      %v3261 = vmul.f32 %v3213, %v3189
      %v3262 = vmul.f32 %v3214, %v3190
      %v3263 = vmul.f32 %v3215, %v3190
      %v3264 = vmul.f32 %v3216, %v3190
      %v3265 = vmul.f32 %v3217, %v3191
      %v3266 = vmul.f32 %v3218, %v3191
      %v3267 = vmul.f32 %v3219, %v3191
      %v3268 = vmul.f32 %v3220, %v3192
      %v3269 = vmul.f32 %v3221, %v3192
      %v3270 = vmul.f32 %v3222, %v3192
      %v3271 = vmul.f32 %v3223, %v3193
      %v3272 = vmul.f32 %v3224, %v3193
      %v3273 = vmul.f32 %v3225, %v3193
      %v3274 = vmul.f32 %v3226, %v3194
      %v3275 = vmul.f32 %v3227, %v3194
      %v3276 = vmul.f32 %v3228, %v3194
      %v3277 = vmul.f32 %v3229, %v3195
      %v3278 = vmul.f32 %v3230, %v3195
      %v3279 = vmul.f32 %v3231, %v3195
      %v3280 = vmul.f32 %v3232, %v3196
      %v3281 = vmul.f32 %v3233, %v3196
      %v3282 = vmul.f32 %v3234, %v3196
      %v3283 = vmul.f32 %v3235, %v3197
      %v3284 = vmul.f32 %v3236, %v3197
      %v3285 = vmul.f32 %v3237, %v3197
      %v3286 = vmul.f32 %v3238, %v3198
      %v3287 = vmul.f32 %v3239, %v3198
      %v3288 = vmul.f32 %v3240, %v3198
      %v3289 = vmul.f32 %v3241, %v3199
      %v3290 = vmul.f32 %v3242, %v3199
      %v3291 = vmul.f32 %v3243, %v3199
      %v3292 = vmul.f32 %v3244, %v3200
      %v3293 = vmul.f32 %v3245, %v3200
      %v3294 = vmul.f32 %v3246, %v3200
      %v3295 = vmul.f32 %v3247, %v3201
      %v3296 = vmul.f32 %v3248, %v3201
      %v3297 = vmul.f32 %v3249, %v3201
      %v3299 = vlaneseq
      %v3300 = vshrl.u32 %v3299, 7
      %v3301 = vsub.s32 0, %v3300
      %v3302 = vrot.slane %v313, %v3301
      %v3303 = vlaneseq
      %v3304 = vshrl.u32 %v3303, 7
      %v3305 = vsub.s32 1, %v3304
      %v3306 = vrot.slane %v313, %v3305
      %v3307 = vlaneseq
      %v3308 = vshrl.u32 %v3307, 7
      %v3309 = vsub.s32 2, %v3308
      %v3310 = vrot.slane %v313, %v3309
      %v3314 = vmul.f32 %v3250, %v3302
      %v3315 = vmul.f32 %v3251, %v3306
      %v3316 = vmul.f32 %v3252, %v3310
      %v3317 = vmul.f32 %v3253, %v3302
      %v3318 = vmul.f32 %v3254, %v3306
      %v3319 = vmul.f32 %v3255, %v3310
      %v3320 = vmul.f32 %v3256, %v3302
      %v3321 = vmul.f32 %v3257, %v3306
      %v3322 = vmul.f32 %v3258, %v3310
      %v3323 = vmul.f32 %v3259, %v3302
      %v3324 = vmul.f32 %v3260, %v3306
      %v3325 = vmul.f32 %v3261, %v3310
      %v3326 = vmul.f32 %v3262, %v3302
      %v3327 = vmul.f32 %v3263, %v3306
      %v3328 = vmul.f32 %v3264, %v3310
      %v3329 = vmul.f32 %v3265, %v3302
      %v3330 = vmul.f32 %v3266, %v3306
      %v3331 = vmul.f32 %v3267, %v3310
      %v3332 = vmul.f32 %v3268, %v3302
      %v3333 = vmul.f32 %v3269, %v3306
      %v3334 = vmul.f32 %v3270, %v3310
      %v3335 = vmul.f32 %v3271, %v3302
      %v3336 = vmul.f32 %v3272, %v3306
      %v3337 = vmul.f32 %v3273, %v3310
      %v3338 = vmul.f32 %v3274, %v3302
      %v3339 = vmul.f32 %v3275, %v3306
      %v3340 = vmul.f32 %v3276, %v3310
      %v3341 = vmul.f32 %v3277, %v3302
      %v3342 = vmul.f32 %v3278, %v3306
      %v3343 = vmul.f32 %v3279, %v3310
      %v3344 = vmul.f32 %v3280, %v3302
      %v3345 = vmul.f32 %v3281, %v3306
      %v3346 = vmul.f32 %v3282, %v3310
      %v3347 = vmul.f32 %v3283, %v3302
      %v3348 = vmul.f32 %v3284, %v3306
      %v3349 = vmul.f32 %v3285, %v3310
      %v3350 = vmul.f32 %v3286, %v3302
      %v3351 = vmul.f32 %v3287, %v3306
      %v3352 = vmul.f32 %v3288, %v3310
      %v3353 = vmul.f32 %v3289, %v3302
      %v3354 = vmul.f32 %v3290, %v3306
      %v3355 = vmul.f32 %v3291, %v3310
      %v3356 = vmul.f32 %v3292, %v3302
      %v3357 = vmul.f32 %v3293, %v3306
      %v3358 = vmul.f32 %v3294, %v3310
      %v3359 = vmul.f32 %v3295, %v3302
      %v3360 = vmul.f32 %v3296, %v3306
      %v3361 = vmul.f32 %v3297, %v3310
      %v3363 = vlaneseq
      %v3364 = vshrl.u32 %v3363, 7
      %v3365 = vsub.s32 0, %v3364
      %v3366 = vrot.slane %v315, %v3365
      %v3367 = vlaneseq
      %v3368 = vshrl.u32 %v3367, 7
      %v3369 = vsub.s32 1, %v3368
      %v3370 = vrot.slane %v315, %v3369
      %v3371 = vlaneseq
      %v3372 = vshrl.u32 %v3371, 7
      %v3373 = vsub.s32 2, %v3372
      %v3374 = vrot.slane %v315, %v3373
      %v3378 = vadd.f32 %v3314, %v3366
      %v3379 = vadd.f32 %v3315, %v3370
      %v3380 = vadd.f32 %v3316, %v3374
      %v3381 = vadd.f32 %v3317, %v3366
      %v3382 = vadd.f32 %v3318, %v3370
      %v3383 = vadd.f32 %v3319, %v3374
      %v3384 = vadd.f32 %v3320, %v3366
      %v3385 = vadd.f32 %v3321, %v3370
      %v3386 = vadd.f32 %v3322, %v3374
      %v3387 = vadd.f32 %v3323, %v3366
      %v3388 = vadd.f32 %v3324, %v3370
      %v3389 = vadd.f32 %v3325, %v3374
      %v3390 = vadd.f32 %v3326, %v3366
      %v3391 = vadd.f32 %v3327, %v3370
      %v3392 = vadd.f32 %v3328, %v3374
      %v3393 = vadd.f32 %v3329, %v3366
      %v3394 = vadd.f32 %v3330, %v3370
      %v3395 = vadd.f32 %v3331, %v3374
      %v3396 = vadd.f32 %v3332, %v3366
      %v3397 = vadd.f32 %v3333, %v3370
      %v3398 = vadd.f32 %v3334, %v3374
      %v3399 = vadd.f32 %v3335, %v3366
      %v3400 = vadd.f32 %v3336, %v3370
      %v3401 = vadd.f32 %v3337, %v3374
      %v3402 = vadd.f32 %v3338, %v3366
      %v3403 = vadd.f32 %v3339, %v3370
      %v3404 = vadd.f32 %v3340, %v3374
      %v3405 = vadd.f32 %v3341, %v3366
      %v3406 = vadd.f32 %v3342, %v3370
      %v3407 = vadd.f32 %v3343, %v3374
      %v3408 = vadd.f32 %v3344, %v3366
      %v3409 = vadd.f32 %v3345, %v3370
      %v3410 = vadd.f32 %v3346, %v3374
      %v3411 = vadd.f32 %v3347, %v3366
      %v3412 = vadd.f32 %v3348, %v3370
      %v3413 = vadd.f32 %v3349, %v3374
      %v3414 = vadd.f32 %v3350, %v3366
      %v3415 = vadd.f32 %v3351, %v3370
      %v3416 = vadd.f32 %v3352, %v3374
      %v3417 = vadd.f32 %v3353, %v3366
      %v3418 = vadd.f32 %v3354, %v3370
      %v3419 = vadd.f32 %v3355, %v3374
      %v3420 = vadd.f32 %v3356, %v3366
      %v3421 = vadd.f32 %v3357, %v3370
      %v3422 = vadd.f32 %v3358, %v3374
      %v3423 = vadd.f32 %v3359, %v3366
      %v3424 = vadd.f32 %v3360, %v3370
      %v3425 = vadd.f32 %v3361, %v3374
      %v3426 = vadd.f32 %v3378, %v1092
      %v3427 = vadd.f32 %v3379, %v1093
      %v3428 = vadd.f32 %v3380, %v1094
      %v3429 = vadd.f32 %v3381, %v1095
      %v3430 = vadd.f32 %v3382, %v1096
      %v3431 = vadd.f32 %v3383, %v1097
      %v3432 = vadd.f32 %v3384, %v1098
      %v3433 = vadd.f32 %v3385, %v1099
      %v3434 = vadd.f32 %v3386, %v1100
      %v3435 = vadd.f32 %v3387, %v1101
      %v3436 = vadd.f32 %v3388, %v1102
      %v3437 = vadd.f32 %v3389, %v1103
      %v3438 = vadd.f32 %v3390, %v1104
      %v3439 = vadd.f32 %v3391, %v1105
      %v3440 = vadd.f32 %v3392, %v1106
      %v3441 = vadd.f32 %v3393, %v1107
      %v3442 = vadd.f32 %v3394, %v1108
      %v3443 = vadd.f32 %v3395, %v1109
      %v3444 = vadd.f32 %v3396, %v1110
      %v3445 = vadd.f32 %v3397, %v1111
      %v3446 = vadd.f32 %v3398, %v1112
      %v3447 = vadd.f32 %v3399, %v1113
      %v3448 = vadd.f32 %v3400, %v1114
      %v3449 = vadd.f32 %v3401, %v1115
      %v3450 = vadd.f32 %v3402, %v1116
      %v3451 = vadd.f32 %v3403, %v1117
      %v3452 = vadd.f32 %v3404, %v1118
      %v3453 = vadd.f32 %v3405, %v1119
      %v3454 = vadd.f32 %v3406, %v1120
      %v3455 = vadd.f32 %v3407, %v1121
      %v3456 = vadd.f32 %v3408, %v1122
      %v3457 = vadd.f32 %v3409, %v1123
      %v3458 = vadd.f32 %v3410, %v1124
      %v3459 = vadd.f32 %v3411, %v1125
      %v3460 = vadd.f32 %v3412, %v1126
      %v3461 = vadd.f32 %v3413, %v1127
      %v3462 = vadd.f32 %v3414, %v1128
      %v3463 = vadd.f32 %v3415, %v1129
      %v3464 = vadd.f32 %v3416, %v1130
      %v3465 = vadd.f32 %v3417, %v1131
      %v3466 = vadd.f32 %v3418, %v1132
      %v3467 = vadd.f32 %v3419, %v1133
      %v3468 = vadd.f32 %v3420, %v1134
      %v3469 = vadd.f32 %v3421, %v1135
      %v3470 = vadd.f32 %v3422, %v1136
      %v3471 = vadd.f32 %v3423, %v1137
      %v3472 = vadd.f32 %v3424, %v1138
      %v3473 = vadd.f32 %v3425, %v1139
      %v3474 = vmax.f32 %v3426, 0.0
      %v3475 = vmax.f32 %v3427, 0.0
      %v3476 = vmax.f32 %v3428, 0.0
      %v3477 = vmax.f32 %v3429, 0.0
      %v3478 = vmax.f32 %v3430, 0.0
      %v3479 = vmax.f32 %v3431, 0.0
      %v3480 = vmax.f32 %v3432, 0.0
      %v3481 = vmax.f32 %v3433, 0.0
      %v3482 = vmax.f32 %v3434, 0.0
      %v3483 = vmax.f32 %v3435, 0.0
      %v3484 = vmax.f32 %v3436, 0.0
      %v3485 = vmax.f32 %v3437, 0.0
      %v3486 = vmax.f32 %v3438, 0.0
      %v3487 = vmax.f32 %v3439, 0.0
      %v3488 = vmax.f32 %v3440, 0.0
      %v3489 = vmax.f32 %v3441, 0.0
      %v3490 = vmax.f32 %v3442, 0.0
      %v3491 = vmax.f32 %v3443, 0.0
      %v3492 = vmax.f32 %v3444, 0.0
      %v3493 = vmax.f32 %v3445, 0.0
      %v3494 = vmax.f32 %v3446, 0.0
      %v3495 = vmax.f32 %v3447, 0.0
      %v3496 = vmax.f32 %v3448, 0.0
      %v3497 = vmax.f32 %v3449, 0.0
      %v3498 = vmax.f32 %v3450, 0.0
      %v3499 = vmax.f32 %v3451, 0.0
      %v3500 = vmax.f32 %v3452, 0.0
      %v3501 = vmax.f32 %v3453, 0.0
      %v3502 = vmax.f32 %v3454, 0.0
      %v3503 = vmax.f32 %v3455, 0.0
      %v3504 = vmax.f32 %v3456, 0.0
      %v3505 = vmax.f32 %v3457, 0.0
      %v3506 = vmax.f32 %v3458, 0.0
      %v3507 = vmax.f32 %v3459, 0.0
      %v3508 = vmax.f32 %v3460, 0.0
      %v3509 = vmax.f32 %v3461, 0.0
      %v3510 = vmax.f32 %v3462, 0.0
      %v3511 = vmax.f32 %v3463, 0.0
      %v3512 = vmax.f32 %v3464, 0.0
      %v3513 = vmax.f32 %v3465, 0.0
      %v3514 = vmax.f32 %v3466, 0.0
      %v3515 = vmax.f32 %v3467, 0.0
      %v3516 = vmax.f32 %v3468, 0.0
      %v3517 = vmax.f32 %v3469, 0.0
      %v3518 = vmax.f32 %v3470, 0.0
      %v3519 = vmax.f32 %v3471, 0.0
      %v3520 = vmax.f32 %v3472, 0.0
      %v3521 = vmax.f32 %v3473, 0.0
      %v3523 = vlaneseq
      %v3524 = vshrl.u32 %v3523, 7
      %v3525 = vsub.s32 0, %v3524
      %v3526 = vrot.slane %v319, %v3525
      %v3527 = vlaneseq
      %v3528 = vshrl.u32 %v3527, 7
      %v3529 = vsub.s32 1, %v3528
      %v3530 = vrot.slane %v319, %v3529
      %v3531 = vlaneseq
      %v3532 = vshrl.u32 %v3531, 7
      %v3533 = vsub.s32 2, %v3532
      %v3534 = vrot.slane %v319, %v3533
      %v3538 = vmul.f32 %v3474, %v3526
      %v3539 = vmul.f32 %v3475, %v3530
      %v3540 = vmul.f32 %v3476, %v3534
      %v3541 = vmul.f32 %v3477, %v3526
      %v3542 = vmul.f32 %v3478, %v3530
      %v3543 = vmul.f32 %v3479, %v3534
      %v3544 = vmul.f32 %v3480, %v3526
      %v3545 = vmul.f32 %v3481, %v3530
      %v3546 = vmul.f32 %v3482, %v3534
      %v3547 = vmul.f32 %v3483, %v3526
      %v3548 = vmul.f32 %v3484, %v3530
      %v3549 = vmul.f32 %v3485, %v3534
      %v3550 = vmul.f32 %v3486, %v3526
      %v3551 = vmul.f32 %v3487, %v3530
      %v3552 = vmul.f32 %v3488, %v3534
      %v3553 = vmul.f32 %v3489, %v3526
      %v3554 = vmul.f32 %v3490, %v3530
      %v3555 = vmul.f32 %v3491, %v3534
      %v3556 = vmul.f32 %v3492, %v3526
      %v3557 = vmul.f32 %v3493, %v3530
      %v3558 = vmul.f32 %v3494, %v3534
      %v3559 = vmul.f32 %v3495, %v3526
      %v3560 = vmul.f32 %v3496, %v3530
      %v3561 = vmul.f32 %v3497, %v3534
      %v3562 = vmul.f32 %v3498, %v3526
      %v3563 = vmul.f32 %v3499, %v3530
      %v3564 = vmul.f32 %v3500, %v3534
      %v3565 = vmul.f32 %v3501, %v3526
      %v3566 = vmul.f32 %v3502, %v3530
      %v3567 = vmul.f32 %v3503, %v3534
      %v3568 = vmul.f32 %v3504, %v3526
      %v3569 = vmul.f32 %v3505, %v3530
      %v3570 = vmul.f32 %v3506, %v3534
      %v3571 = vmul.f32 %v3507, %v3526
      %v3572 = vmul.f32 %v3508, %v3530
      %v3573 = vmul.f32 %v3509, %v3534
      %v3574 = vmul.f32 %v3510, %v3526
      %v3575 = vmul.f32 %v3511, %v3530
      %v3576 = vmul.f32 %v3512, %v3534
      %v3577 = vmul.f32 %v3513, %v3526
      %v3578 = vmul.f32 %v3514, %v3530
      %v3579 = vmul.f32 %v3515, %v3534
      %v3580 = vmul.f32 %v3516, %v3526
      %v3581 = vmul.f32 %v3517, %v3530
      %v3582 = vmul.f32 %v3518, %v3534
      %v3583 = vmul.f32 %v3519, %v3526
      %v3584 = vmul.f32 %v3520, %v3530
      %v3585 = vmul.f32 %v3521, %v3534
      %v3586 = vadd.f32 %v3538, %v3539
      %v3587 = vadd.f32 %v3586, %v3540
      %3588 = vadd.xlane.f32.xlu0 %v3587
      %v3589 = vpop.xlane.xlu0 %3588
      %v3590 = vadd.f32 %v3541, %v3542
      %v3591 = vadd.f32 %v3590, %v3543
      %3592 = vadd.xlane.f32.xlu0 %v3591
      %v3593 = vpop.xlane.xlu0 %3592
      %v3594 = vadd.f32 %v3544, %v3545
      %v3595 = vadd.f32 %v3594, %v3546
      %3596 = vadd.xlane.f32.xlu0 %v3595
      %v3597 = vpop.xlane.xlu0 %3596
      %v3598 = vadd.f32 %v3547, %v3548
      %v3599 = vadd.f32 %v3598, %v3549
      %3600 = vadd.xlane.f32.xlu0 %v3599
      %v3601 = vpop.xlane.xlu0 %3600
      %v3602 = vadd.f32 %v3550, %v3551
      %v3603 = vadd.f32 %v3602, %v3552
      %3604 = vadd.xlane.f32.xlu0 %v3603
      %v3605 = vpop.xlane.xlu0 %3604
      %v3606 = vadd.f32 %v3553, %v3554
      %v3607 = vadd.f32 %v3606, %v3555
      %3608 = vadd.xlane.f32.xlu0 %v3607
      %v3609 = vpop.xlane.xlu0 %3608
      %v3610 = vadd.f32 %v3556, %v3557
      %v3611 = vadd.f32 %v3610, %v3558
      %3612 = vadd.xlane.f32.xlu0 %v3611
      %v3613 = vpop.xlane.xlu0 %3612
      %v3614 = vadd.f32 %v3559, %v3560
      %v3615 = vadd.f32 %v3614, %v3561
      %3616 = vadd.xlane.f32.xlu0 %v3615
      %v3617 = vpop.xlane.xlu0 %3616
      %v3618 = vadd.f32 %v3562, %v3563
      %v3619 = vadd.f32 %v3618, %v3564
      %3620 = vadd.xlane.f32.xlu0 %v3619
      %v3621 = vpop.xlane.xlu0 %3620
      %v3622 = vadd.f32 %v3565, %v3566
      %v3623 = vadd.f32 %v3622, %v3567
      %3624 = vadd.xlane.f32.xlu0 %v3623
      %v3625 = vpop.xlane.xlu0 %3624
      %v3626 = vadd.f32 %v3568, %v3569
      %v3627 = vadd.f32 %v3626, %v3570
      %3628 = vadd.xlane.f32.xlu0 %v3627
      %v3629 = vpop.xlane.xlu0 %3628
      %v3630 = vadd.f32 %v3571, %v3572
      %v3631 = vadd.f32 %v3630, %v3573
      %3632 = vadd.xlane.f32.xlu0 %v3631
      %v3633 = vpop.xlane.xlu0 %3632
      %v3634 = vadd.f32 %v3574, %v3575
      %v3635 = vadd.f32 %v3634, %v3576
      %3636 = vadd.xlane.f32.xlu0 %v3635
      %v3637 = vpop.xlane.xlu0 %3636
      %v3638 = vadd.f32 %v3577, %v3578
      %v3639 = vadd.f32 %v3638, %v3579
      %3640 = vadd.xlane.f32.xlu0 %v3639
      %v3641 = vpop.xlane.xlu0 %3640
      %v3642 = vadd.f32 %v3580, %v3581
      %v3643 = vadd.f32 %v3642, %v3582
      %3644 = vadd.xlane.f32.xlu0 %v3643
      %v3645 = vpop.xlane.xlu0 %3644
      %v3646 = vadd.f32 %v3583, %v3584
      %v3647 = vadd.f32 %v3646, %v3585
      %3648 = vadd.xlane.f32.xlu0 %v3647
      %v3649 = vpop.xlane.xlu0 %3648
      %v3650 = vstv %s320
      %v3651 = vadd.f32 %v3589, %v3650
      %v3652 = vadd.f32 %v3593, %v3650
      %v3653 = vadd.f32 %v3597, %v3650
      %v3654 = vadd.f32 %v3601, %v3650
      %v3655 = vadd.f32 %v3605, %v3650
      %v3656 = vadd.f32 %v3609, %v3650
      %v3657 = vadd.f32 %v3613, %v3650
      %v3658 = vadd.f32 %v3617, %v3650
      %v3659 = vadd.f32 %v3621, %v3650
      %v3660 = vadd.f32 %v3625, %v3650
      %v3661 = vadd.f32 %v3629, %v3650
      %v3662 = vadd.f32 %v3633, %v3650
      %v3663 = vadd.f32 %v3637, %v3650
      %v3664 = vadd.f32 %v3641, %v3650
      %v3665 = vadd.f32 %v3645, %v3650
      %v3666 = vadd.f32 %v3649, %v3650
      %vm3667 = vcmask 7168
      %3668 = vst.msk [vmem:[%s303] sm:$0xff] %vm3667, %v3651
      %3669 = vst.msk [vmem:[%s303 + $0x8] sm:$0xff] %vm3667, %v3652
      %3670 = vst.msk [vmem:[%s303 + $0x10] sm:$0xff] %vm3667, %v3653
      %3671 = vst.msk [vmem:[%s303 + $0x18] sm:$0xff] %vm3667, %v3654
      %3672 = vst.msk [vmem:[%s303 + $0x20] sm:$0xff] %vm3667, %v3655
      %3673 = vst.msk [vmem:[%s303 + $0x28] sm:$0xff] %vm3667, %v3656
      %3674 = vst.msk [vmem:[%s303 + $0x30] sm:$0xff] %vm3667, %v3657
      %3675 = vst.msk [vmem:[%s303 + $0x38] sm:$0xff] %vm3667, %v3658
      %3676 = vst.msk [vmem:[%s303 + $0x40] sm:$0xff] %vm3667, %v3659
      %3677 = vst.msk [vmem:[%s303 + $0x48] sm:$0xff] %vm3667, %v3660
      %3678 = vst.msk [vmem:[%s303 + $0x50] sm:$0xff] %vm3667, %v3661
      %3679 = vst.msk [vmem:[%s303 + $0x58] sm:$0xff] %vm3667, %v3662
      %3680 = vst.msk [vmem:[%s303 + $0x60] sm:$0xff] %vm3667, %v3663
      %3681 = vst.msk [vmem:[%s303 + $0x68] sm:$0xff] %vm3667, %v3664
      %3682 = vst.msk [vmem:[%s303 + $0x70] sm:$0xff] %vm3667, %v3665
      %3683 = vst.msk [vmem:[%s303 + $0x78] sm:$0xff] %vm3667, %v3666
      %s3684 = smul.u32 16, %s19
      %p3685 = scmp.lt.s32.totalorder %s3684, 31
      %s3686 = scalar_select %p3685, %s3684, 31
      %s3687 = smul.addr %s3686, 8
      %s3688 = scalar_lea.vmem %s7, %s3687
      // Predicated region
      $region49: #{critic_forward.1} parent=47 // pred_check
        %p3689 = pneg %p194
      $region50: #{critic_forward.1} parent=47 // pred_check_branch
        %3691 = sbr.rel (%p3689) target = $region52
      $region51: #{critic_forward.1} parent=47 // pred_region
        %s3692 = smul.u32 16, %s19
      $region52: #{critic_forward.1} parent=47 // pred_fallthru
        _
    $region48: #{critic_forward.1} parent=5 // pred_fallthru
      _
    %p3693 = scmp.le.s32.totalorder 2, %s14
    // Predicated region
    $region53: #{critic_forward.1} parent=5 // pred_check
      %p3694 = pneg %p3693
    $region54: #{critic_forward.1} parent=5 // pred_check_branch
      %3696 = sbr.rel (%p3694) target = $region56
    $region55: #{critic_forward.1} parent=5 // pred_region
      %s3697 = ssub.s32 %s14, 2
      // Predicated region
      $region57: #{critic_forward.1} parent=55 // pred_check
        %p3698 = pneg %p200
      $region58: #{critic_forward.1} parent=55 // pred_check_branch
        %3700 = sbr.rel (%p3698) target = $region60
      $region59: #{critic_forward.1} parent=55 // pred_region
        %s3701 = smul.u32 16, %s20
        %p3702 = scmp.lt.s32.totalorder %s3701, 31
        %s3703 = scalar_select %p3702, %s3701, 31
        %s3704 = smul.addr %s3703, 8
        %s3705 = scalar_lea.vmem %s7, %s3704
      $region60: #{critic_forward.1} parent=55 // pred_fallthru
        _
    $region56: #{critic_forward.1} parent=5 // pred_fallthru
      _
  $region6: #{critic_forward.1} parent=0 // loop_footer
    %s18 = sadd.s32 1, %s14
  $region7: #{critic_forward.1} parent=0 // loop_footer_branch
    %13 = sbr.rel target = $region3
  $region8: #{critic_forward.1} parent=0 // loop_exit
    _

</llo_original>
